<compile_context>
chip_gen: v7x
topology: tpu7x:2x2x1
jax: 0.10.0
libtpu: 0.0.40
codegen_flags: <defaults>
</compile_context>

<pallas_src>
import jax
import jax.numpy as jnp
from jax.experimental import pallas as pl
from jax.experimental.pallas import tpu as pltpu


# ----------------------------------------------------------------------------
# helpers
# ----------------------------------------------------------------------------
def _cparams():
    return pltpu.CompilerParams(
        dimension_semantics=("parallel",),
        vmem_limit_bytes=32 * 1024 * 1024,
    )


def _pick_row_tile(n):
    # Largest power-of-two row tile that divides N: keeps blocks (8,128)
    # aligned, big enough to hit HBM roofline, small enough for v7x VMEM.
    for t in (2048, 1024, 512, 256, 128, 64, 32, 16, 8):
        if n % t == 0:
            return t
    return n


# ----------------------------------------------------------------------------
# kernel A: fused encoder + post_unet conv + BatchNorm partial statistics
# ----------------------------------------------------------------------------
def _encoder_kernel(x_ref, wenc_ref, benc_ref, wpost_ref, bpost_ref,
                    h_ref, psum_ref, psq_ref):
    # x: (TM, Cin)  wenc: (Cin, 2*Cout)  wpost: (2*Cout, Cout)
    x = x_ref[...]
    x_cat = jnp.dot(x, wenc_ref[...],
                    preferred_element_type=jnp.float32) + benc_ref[...]
    h = jnp.dot(x_cat, wpost_ref[...],
                preferred_element_type=jnp.float32) + bpost_ref[...]
    h_ref[...] = h
    # per-tile BatchNorm partial stats, reduced across tiles in the wrapper
    psum_ref[...] = jnp.sum(h, axis=0, keepdims=True)[None]
    psq_ref[...] = jnp.sum(h * h, axis=0, keepdims=True)[None]


def encoder_with_bn_stats(x_rows, w_enc, b_enc, w_post, b_post, tm):
    n, cin = x_rows.shape
    cout = w_post.shape[1]
    n_tiles = n // tm
    full = lambda a: pl.BlockSpec(a.shape, lambda i: (0,) * a.ndim)
    return pl.pallas_call(
        _encoder_kernel,
        grid=(n_tiles,),
        in_specs=[
            pl.BlockSpec((tm, cin), lambda i: (i, 0)),
            full(w_enc), full(b_enc), full(w_post), full(b_post),
        ],
        out_specs=(
            pl.BlockSpec((tm, cout), lambda i: (i, 0)),
            pl.BlockSpec((1, 1, cout), lambda i: (i, 0, 0)),
            pl.BlockSpec((1, 1, cout), lambda i: (i, 0, 0)),
        ),
        out_shape=(
            jax.ShapeDtypeStruct((n, cout), jnp.float32),
            jax.ShapeDtypeStruct((n_tiles, 1, cout), jnp.float32),
            jax.ShapeDtypeStruct((n_tiles, 1, cout), jnp.float32),
        ),
        compiler_params=_cparams(),
    )(x_rows, w_enc, b_enc, w_post, b_post)


# ----------------------------------------------------------------------------
# kernel B: BN apply (folded scale/shift) + mu/var + reparam + he|exp head
# ----------------------------------------------------------------------------
def _latent_heads_kernel(h_ref, scale_ref, shift_ref, wmu_ref, bmu_ref,
                         wvar_ref, bvar_ref, whx_ref, bhx_ref, eps_ref,
                         z_ref, mu_ref, std_ref, hx_ref):
    # BatchNorm normalisation + affine folded into per-channel scale/shift
    hn = h_ref[...] * scale_ref[...] + shift_ref[...]
    mu = jnp.dot(hn, wmu_ref[...],
                 preferred_element_type=jnp.float32) + bmu_ref[...]
    log_var = jnp.dot(hn, wvar_ref[...],
                      preferred_element_type=jnp.float32) + bvar_ref[...]
    std = jnp.exp(0.5 * log_var)
    z = mu + std * eps_ref[...]
    mu_ref[...] = mu
    std_ref[...] = std
    z_ref[...] = z
    # fused he (3 ch) + expression (n_metagenes) 1x1-conv heads on resident z
    hx_ref[...] = jnp.dot(z, whx_ref[...],
                          preferred_element_type=jnp.float32) + bhx_ref[...]


def latent_and_heads(h, bn_scale, bn_shift, w_mu, b_mu, w_var, b_var,
                     w_hx, b_hx, eps, tm):
    n, cout = h.shape
    hx_dim = w_hx.shape[1]
    n_tiles = n // tm
    full = lambda a: pl.BlockSpec(a.shape, lambda i: (0,) * a.ndim)
    row = lambda c: pl.BlockSpec((tm, c), lambda i: (i, 0))
    return pl.pallas_call(
        _latent_heads_kernel,
        grid=(n_tiles,),
        in_specs=[
            row(cout),                       # h
            full(bn_scale), full(bn_shift),
            full(w_mu), full(b_mu), full(w_var), full(b_var),
            full(w_hx), full(b_hx),
            row(cout),                       # eps
        ],
        out_specs=(row(cout), row(cout), row(cout), row(hx_dim)),
        out_shape=(
            jax.ShapeDtypeStruct((n, cout), jnp.float32),
            jax.ShapeDtypeStruct((n, cout), jnp.float32),
            jax.ShapeDtypeStruct((n, cout), jnp.float32),
            jax.ShapeDtypeStruct((n, hx_dim), jnp.float32),
        ),
        compiler_params=_cparams(),
    )(h, bn_scale, bn_shift, w_mu, b_mu, w_var, b_var, w_hx, b_hx, eps)


# ----------------------------------------------------------------------------
# kernel C: voxel reduction fused with the negative-binomial expression head
# ----------------------------------------------------------------------------
def _voxel_expr_kernel(m_ref, f_ref, mg_ref, sf_ref, ratio_ref, vidx_ref,
                       ma_ref, r_ref, exp_ref):
    # m: (1, V, HW)  f: (1, HW, M)  mg: (M, G)  sf/ratio: (1, G)  vidx: (1, V, 1)
    ma = jnp.dot(m_ref[0], f_ref[0], preferred_element_type=jnp.float32)  # (V, M)
    ma_ref[0] = ma
    r = jnp.dot(ma, mg_ref[...], preferred_element_type=jnp.float32)      # (V, G)
    r = jax.nn.softplus(r * sf_ref[...])
    r = jnp.where(vidx_ref[0] == 0, 0.0, r)      # mask_nb_params (mask, then +eps)
    r = r + 1e-8
    r_ref[0] = r
    exp_ref[0] = r * ratio_ref[...]              # NB mean = r * p / (1 - p)


def voxel_expression(masks_flat, feat, metagenes, sf, nb_ratio, vidx):
    b, v, hw = masks_flat.shape
    m = feat.shape[2]
    g = metagenes.shape[1]
    return pl.pallas_call(
        _voxel_expr_kernel,
        grid=(b,),
        in_specs=[
            pl.BlockSpec((1, v, hw), lambda i: (i, 0, 0)),
            pl.BlockSpec((1, hw, m), lambda i: (i, 0, 0)),
            pl.BlockSpec((m, g), lambda i: (0, 0)),
            pl.BlockSpec((1, g), lambda i: (0, 0)),
            pl.BlockSpec((1, g), lambda i: (0, 0)),
            pl.BlockSpec((1, v, 1), lambda i: (i, 0, 0)),
        ],
        out_specs=(
            pl.BlockSpec((1, v, m), lambda i: (i, 0, 0)),
            pl.BlockSpec((1, v, g), lambda i: (i, 0, 0)),
            pl.BlockSpec((1, v, g), lambda i: (i, 0, 0)),
        ),
        out_shape=(
            jax.ShapeDtypeStruct((b, v, m), jnp.float32),
            jax.ShapeDtypeStruct((b, v, g), jnp.float32),
            jax.ShapeDtypeStruct((b, v, g), jnp.float32),
        ),
        compiler_params=_cparams(),
    )(masks_flat, feat, metagenes, sf, nb_ratio, vidx)


# ----------------------------------------------------------------------------
# Forward pass (mirrors MetageneAutoencoder.forward with reduce_to_voxel=True)
# ----------------------------------------------------------------------------
def metagene_autoencoder_forward(params, x, x_context, masks, voxel_idxs,
                                 eps_key, use_means=False):
    B, Cin, H, W = x.shape
    Cout = params["post_unet_w"].shape[1]
    HW = H * W
    N = B * HW
    M = params["exp_w"].shape[1]
    V = masks.shape[1]

    def nchw_to_rows(t):
        return jnp.transpose(t, (0, 2, 3, 1)).reshape(N, t.shape[1])

    def rows_to_nchw(t, c):
        return jnp.transpose(t.reshape(B, H, W, c), (0, 3, 1, 2))

    tm = _pick_row_tile(N)
    x_rows = nchw_to_rows(x)

    # Fused encoder weights [unet | context_unet] -> (Cin, 2*Cout), producing
    # x_cat directly (no separate concat of activations).
    # TODO(synk): resnet34 Unet / context Unet backbones are external modules
    # not provided; stand-in deterministic 1x1-conv encoders are used.
    # NOTE: original code applies context_unet to `x` (not `x_context`);
    # reproduced, so x_context is intentionally unused.
    w_enc = jnp.concatenate([params["unet_w"], params["ctx_unet_w"]], axis=1)
    b_enc = jnp.concatenate([params["unet_b"], params["ctx_unet_b"]], axis=1)

    h, psum, psq = encoder_with_bn_stats(
        x_rows, w_enc, b_enc, params["post_unet_w"], params["post_unet_b"], tm)

    # Finalize training-mode BatchNorm2d stats (biased variance) and fold the
    # normalisation + affine into a per-channel scale/shift for kernel B.
    s = jnp.sum(psum, axis=0)                       # (1, Cout)
    q = jnp.sum(psq, axis=0)                        # (1, Cout)
    mean = s / N
    var = q / N - mean * mean
    inv_std = jax.lax.rsqrt(var + 1e-5)
    bn_scale = params["bn_gamma"] * inv_std
    bn_shift = params["bn_beta"] - mean * bn_scale

    # Fused he (3) + expression (n_metagenes) head weights -> (Cout, 3 + M).
    # TODO(synk): post_decode_he is a Sequential of DecoderBlock upsamplers
    # whose class is not provided; the 1x1 Conv2d(out_channels, 3) head is
    # used instead.
    w_hx = jnp.concatenate([params["he_w"], params["exp_w"]], axis=1)
    b_hx = jnp.concatenate([params["he_b"], params["exp_b"]], axis=1)

    if use_means:
        eps = jnp.zeros((N, Cout), jnp.float32)     # z = mu; std still returned
    else:
        # TODO(synk): eps could be drawn in-kernel (pltpu.prng_random_bits +
        # Box-Muller) to drop this HBM read; kept host-side for exact N(0,1).
        eps = jax.random.normal(eps_key, (N, Cout), jnp.float32)

    z, mu, std, hx = latent_and_heads(
        h, bn_scale, bn_shift,
        params["mu_w"], params["mu_b"], params["var_w"], params["var_b"],
        w_hx, b_hx, eps, tm)

    he_rows = hx[:, :3]
    feat_bhwm = hx[:, 3:].reshape(B, HW, M)

    # Voxel reduction + NB head (sigmoid(p) and p/(1-p) hoisted out of kernel).
    masks_flat = masks.reshape(B, V, HW).astype(jnp.float32)
    vidx = voxel_idxs.astype(jnp.int32)[..., None]              # (B, V, 1)
    p_sig = jax.nn.sigmoid(params["p"])                          # (G,)
    nb_ratio = (p_sig / (1.0 - p_sig))[None, :]                  # (1, G)
    sf = params["scale_factors"][None, :]                        # (1, G)

    metagene_activity, r, exp_mean = voxel_expression(
        masks_flat, feat_bhwm, params["metagenes"], sf, nb_ratio, vidx)

    # TODO(synk): torch.distributions.NegativeBinomial has no array
    # equivalent; its parameters (r, p) and mean ('exp') are returned instead.
    return {
        "z": rows_to_nchw(z, Cout),
        "z_mu": rows_to_nchw(mu, Cout),
        "z_std": rows_to_nchw(std, Cout),
        "he": rows_to_nchw(he_rows, 3),
        "r": r,
        "p": p_sig[None, None, :],          # rearrange 'c -> 1 1 c'
        "exp": exp_mean,
        "metagene_activity": metagene_activity,
    }


# ----------------------------------------------------------------------------
# Main
# ----------------------------------------------------------------------------
if __name__ == "__main__":
    B, H, W = 2, 16, 16
    Cin, Cout = 3, 64
    n_metagenes, n_genes, V = 10, 12, 8

    key = jax.random.PRNGKey(0)
    ks = jax.random.split(key, 20)

    def uinit(k, shape, scale=0.1):
        return (jax.random.uniform(k, shape, jnp.float32) - 0.5) * 2.0 * scale

    params = {
        "unet_w": uinit(ks[0], (Cin, Cout)), "unet_b": uinit(ks[1], (1, Cout)),
        "ctx_unet_w": uinit(ks[2], (Cin, Cout)), "ctx_unet_b": uinit(ks[3], (1, Cout)),
        "post_unet_w": uinit(ks[4], (2 * Cout, Cout)), "post_unet_b": uinit(ks[5], (1, Cout)),
        "mu_w": uinit(ks[6], (Cout, Cout)), "mu_b": uinit(ks[7], (1, Cout)),
        "var_w": uinit(ks[8], (Cout, Cout)), "var_b": uinit(ks[9], (1, Cout)),
        "bn_gamma": jnp.ones((1, Cout), jnp.float32),
        "bn_beta": jnp.zeros((1, Cout), jnp.float32),
        "he_w": uinit(ks[10], (Cout, 3)), "he_b": uinit(ks[11], (1, 3)),
        "exp_w": uinit(ks[12], (Cout, n_metagenes)), "exp_b": uinit(ks[13], (1, n_metagenes)),
        "metagenes": jax.random.uniform(ks[14], (n_metagenes, n_genes), jnp.float32),
        "scale_factors": jax.random.uniform(ks[15], (n_genes,), jnp.float32),
        "p": jax.random.uniform(ks[16], (n_genes,), jnp.float32),
    }

    x = jax.random.normal(ks[17], (B, Cin, H, W), jnp.float32)
    x_context = jax.random.normal(ks[18], (B, Cin, H, W), jnp.float32)
    masks = (jax.random.uniform(ks[19], (B, V, H, W)) > 0.5).astype(jnp.float32)
    voxel_idxs = (jnp.arange(B * V, dtype=jnp.int32).reshape(B, V)) % 3  # some zeros
    eps_key = jax.random.PRNGKey(42)

    fwd = jax.jit(metagene_autoencoder_forward, static_argnames=("use_means",))
    result = fwd(params, x, x_context, masks, voxel_idxs, eps_key)
    jax.block_until_ready(result)
    print("KERNEL_OK")
</pallas_src>

<mosaic_0001>
module attributes {stable_mosaic.version = 11 : i64} {
  func.func @_encoder_kernel(%arg0: i32, %arg1: memref<512x3xf32, #tpu.memory_space<vmem>>, %arg2: memref<3x128xf32, #tpu.memory_space<vmem>>, %arg3: memref<1x128xf32, #tpu.memory_space<vmem>>, %arg4: memref<128x64xf32, #tpu.memory_space<vmem>>, %arg5: memref<1x64xf32, #tpu.memory_space<vmem>>, %arg6: memref<512x64xf32, #tpu.memory_space<vmem>>, %arg7: memref<1x1x64xf32, #tpu.memory_space<vmem>>, %arg8: memref<1x1x64xf32, #tpu.memory_space<vmem>>) attributes {dimension_semantics = [#tpu.dimension_semantics<parallel>], iteration_bounds = array<i64: 1>, scalar_prefetch = 0 : i64, scratch_operands = 0 : i64, tpu.core_type = #tpu.core_type<tc>, window_params = [{transform_indices = @transform_0, window_bounds = array<i64: 512, 3>}, {pipeline_mode = #tpu.pipeline_mode<synchronous>, transform_indices = @transform_1, window_bounds = array<i64: 3, 128>}, {pipeline_mode = #tpu.pipeline_mode<synchronous>, transform_indices = @transform_2, window_bounds = array<i64: 1, 128>}, {pipeline_mode = #tpu.pipeline_mode<synchronous>, transform_indices = @transform_3, window_bounds = array<i64: 128, 64>}, {pipeline_mode = #tpu.pipeline_mode<synchronous>, transform_indices = @transform_4, window_bounds = array<i64: 1, 64>}, {transform_indices = @transform_5, window_bounds = array<i64: 512, 64>}, {transform_indices = @transform_6, window_bounds = array<i64: 1, 1, 64>}, {transform_indices = @transform_7, window_bounds = array<i64: 1, 1, 64>}]} {
    %c0 = arith.constant 0 : index
    %c0_0 = arith.constant 0 : index
    %0 = vector.load %arg1[%c0, %c0_0] : memref<512x3xf32, #tpu.memory_space<vmem>>, vector<512x3xf32>
    %c0_1 = arith.constant 0 : index
    %c0_2 = arith.constant 0 : index
    %1 = vector.load %arg2[%c0_1, %c0_2] : memref<3x128xf32, #tpu.memory_space<vmem>>, vector<3x128xf32>
    %cst = arith.constant dense<0.000000e+00> : vector<512x128xf32>
    %2 = tpu.matmul %0, %1, %cst {dimension_numbers = #tpu.dot_dimension_numbers<[1], [0], [0], [1], [0, 0, 1, 1], [], []>} : vector<512x3xf32>, vector<3x128xf32>, vector<512x128xf32> -> vector<512x128xf32>
    %c0_3 = arith.constant 0 : index
    %c0_4 = arith.constant 0 : index
    %3 = vector.load %arg3[%c0_3, %c0_4] : memref<1x128xf32, #tpu.memory_space<vmem>>, vector<1x128xf32>
    %4 = vector.broadcast %3 : vector<1x128xf32> to vector<512x128xf32>
    %5 = arith.addf %2, %4 : vector<512x128xf32>
    %c0_5 = arith.constant 0 : index
    %c0_6 = arith.constant 0 : index
    %6 = vector.load %arg4[%c0_5, %c0_6] : memref<128x64xf32, #tpu.memory_space<vmem>>, vector<128x64xf32>
    %cst_7 = arith.constant dense<0.000000e+00> : vector<512x64xf32>
    %7 = tpu.matmul %5, %6, %cst_7 {dimension_numbers = #tpu.dot_dimension_numbers<[1], [0], [0], [1], [0, 0, 1, 1], [], []>} : vector<512x128xf32>, vector<128x64xf32>, vector<512x64xf32> -> vector<512x64xf32>
    %c0_8 = arith.constant 0 : index
    %c0_9 = arith.constant 0 : index
    %8 = vector.load %arg5[%c0_8, %c0_9] : memref<1x64xf32, #tpu.memory_space<vmem>>, vector<1x64xf32>
    %9 = vector.broadcast %8 : vector<1x64xf32> to vector<512x64xf32>
    %10 = arith.addf %7, %9 : vector<512x64xf32>
    %c0_10 = arith.constant 0 : index
    %c0_11 = arith.constant 0 : index
    %11 = vector.load %arg6[%c0_10, %c0_11] : memref<512x64xf32, #tpu.memory_space<vmem>>, vector<512x64xf32>
    tpu.vector_store %arg6[%c0_10, %c0_11], %10 {strides = array<i32>} : memref<512x64xf32, #tpu.memory_space<vmem>>, vector<512x64xf32>,
    %cst_12 = arith.constant dense<0.000000e+00> : vector<64xf32>
    %12 = vector.multi_reduction <add>, %10, %cst_12 [0] : vector<512x64xf32> to vector<64xf32>
    %13 = vector.shape_cast %12 : vector<64xf32> to vector<1x64xf32>
    %14 = vector.shape_cast %13 : vector<1x64xf32> to vector<1x1x64xf32>
    %c0_13 = arith.constant 0 : index
    %c0_14 = arith.constant 0 : index
    %c0_15 = arith.constant 0 : index
    %15 = vector.load %arg7[%c0_13, %c0_14, %c0_15] : memref<1x1x64xf32, #tpu.memory_space<vmem>>, vector<1x1x64xf32>
    tpu.vector_store %arg7[%c0_13, %c0_14, %c0_15], %14 {strides = array<i32>} : memref<1x1x64xf32, #tpu.memory_space<vmem>>, vector<1x1x64xf32>,
    %16 = arith.mulf %10, %10 : vector<512x64xf32>
    %cst_16 = arith.constant dense<0.000000e+00> : vector<64xf32>
    %17 = vector.multi_reduction <add>, %16, %cst_16 [0] : vector<512x64xf32> to vector<64xf32>
    %18 = vector.shape_cast %17 : vector<64xf32> to vector<1x64xf32>
    %19 = vector.shape_cast %18 : vector<1x64xf32> to vector<1x1x64xf32>
    %c0_17 = arith.constant 0 : index
    %c0_18 = arith.constant 0 : index
    %c0_19 = arith.constant 0 : index
    %20 = vector.load %arg8[%c0_17, %c0_18, %c0_19] : memref<1x1x64xf32, #tpu.memory_space<vmem>>, vector<1x1x64xf32>
    tpu.vector_store %arg8[%c0_17, %c0_18, %c0_19], %19 {strides = array<i32>} : memref<1x1x64xf32, #tpu.memory_space<vmem>>, vector<1x1x64xf32>,
    return
  }
  func.func @transform_0(%arg0: i32) -> (i32, i32) {
    %c0_i32 = arith.constant 0 : i32
    %c0_i32_0 = arith.constant 0 : i32
    return %arg0, %c0_i32 : i32, i32
  }
  func.func @transform_1(%arg0: i32) -> (i32, i32) {
    %c0_i32 = arith.constant 0 : i32
    %c0_i32_0 = arith.constant 0 : i32
    %c0_i32_1 = arith.constant 0 : i32
    return %c0_i32, %c0_i32_0 : i32, i32
  }
  func.func @transform_2(%arg0: i32) -> (i32, i32) {
    %c0_i32 = arith.constant 0 : i32
    %c0_i32_0 = arith.constant 0 : i32
    %c0_i32_1 = arith.constant 0 : i32
    return %c0_i32, %c0_i32_0 : i32, i32
  }
  func.func @transform_3(%arg0: i32) -> (i32, i32) {
    %c0_i32 = arith.constant 0 : i32
    %c0_i32_0 = arith.constant 0 : i32
    %c0_i32_1 = arith.constant 0 : i32
    return %c0_i32, %c0_i32_0 : i32, i32
  }
  func.func @transform_4(%arg0: i32) -> (i32, i32) {
    %c0_i32 = arith.constant 0 : i32
    %c0_i32_0 = arith.constant 0 : i32
    %c0_i32_1 = arith.constant 0 : i32
    return %c0_i32, %c0_i32_0 : i32, i32
  }
  func.func @transform_5(%arg0: i32) -> (i32, i32) {
    %c0_i32 = arith.constant 0 : i32
    %c0_i32_0 = arith.constant 0 : i32
    return %arg0, %c0_i32 : i32, i32
  }
  func.func @transform_6(%arg0: i32) -> (i32, i32, i32) {
    %c0_i32 = arith.constant 0 : i32
    %c0_i32_0 = arith.constant 0 : i32
    %c0_i32_1 = arith.constant 0 : i32
    return %arg0, %c0_i32, %c0_i32_0 : i32, i32, i32
  }
  func.func @transform_7(%arg0: i32) -> (i32, i32, i32) {
    %c0_i32 = arith.constant 0 : i32
    %c0_i32_0 = arith.constant 0 : i32
    %c0_i32_1 = arith.constant 0 : i32
    return %arg0, %c0_i32, %c0_i32_0 : i32, i32, i32
  }
}

module attributes {stable_mosaic.version = 11 : i64} {
  func.func @_latent_heads_kernel(%arg0: i32, %arg1: memref<512x64xf32, #tpu.memory_space<vmem>>, %arg2: memref<1x64xf32, #tpu.memory_space<vmem>>, %arg3: memref<1x64xf32, #tpu.memory_space<vmem>>, %arg4: memref<64x64xf32, #tpu.memory_space<vmem>>, %arg5: memref<1x64xf32, #tpu.memory_space<vmem>>, %arg6: memref<64x64xf32, #tpu.memory_space<vmem>>, %arg7: memref<1x64xf32, #tpu.memory_space<vmem>>, %arg8: memref<64x13xf32, #tpu.memory_space<vmem>>, %arg9: memref<1x13xf32, #tpu.memory_space<vmem>>, %arg10: memref<512x64xf32, #tpu.memory_space<vmem>>, %arg11: memref<512x64xf32, #tpu.memory_space<vmem>>, %arg12: memref<512x64xf32, #tpu.memory_space<vmem>>, %arg13: memref<512x64xf32, #tpu.memory_space<vmem>>, %arg14: memref<512x13xf32, #tpu.memory_space<vmem>>) attributes {dimension_semantics = [#tpu.dimension_semantics<parallel>], iteration_bounds = array<i64: 1>, scalar_prefetch = 0 : i64, scratch_operands = 0 : i64, tpu.core_type = #tpu.core_type<tc>, window_params = [{transform_indices = @transform_0, window_bounds = array<i64: 512, 64>}, {pipeline_mode = #tpu.pipeline_mode<synchronous>, transform_indices = @transform_1, window_bounds = array<i64: 1, 64>}, {pipeline_mode = #tpu.pipeline_mode<synchronous>, transform_indices = @transform_2, window_bounds = array<i64: 1, 64>}, {pipeline_mode = #tpu.pipeline_mode<synchronous>, transform_indices = @transform_3, window_bounds = array<i64: 64, 64>}, {pipeline_mode = #tpu.pipeline_mode<synchronous>, transform_indices = @transform_4, window_bounds = array<i64: 1, 64>}, {pipeline_mode = #tpu.pipeline_mode<synchronous>, transform_indices = @transform_5, window_bounds = array<i64: 64, 64>}, {pipeline_mode = #tpu.pipeline_mode<synchronous>, transform_indices = @transform_6, window_bounds = array<i64: 1, 64>}, {pipeline_mode = #tpu.pipeline_mode<synchronous>, transform_indices = @transform_7, window_bounds = array<i64: 64, 13>}, {pipeline_mode = #tpu.pipeline_mode<synchronous>, transform_indices = @transform_8, window_bounds = array<i64: 1, 13>}, {transform_indices = @transform_9, window_bounds = array<i64: 512, 64>}, {transform_indices = @transform_10, window_bounds = array<i64: 512, 64>}, {transform_indices = @transform_11, window_bounds = array<i64: 512, 64>}, {transform_indices = @transform_12, window_bounds = array<i64: 512, 64>}, {transform_indices = @transform_13, window_bounds = array<i64: 512, 13>}]} {
    %c0 = arith.constant 0 : index
    %c0_0 = arith.constant 0 : index
    %0 = vector.load %arg1[%c0, %c0_0] : memref<512x64xf32, #tpu.memory_space<vmem>>, vector<512x64xf32>
    %c0_1 = arith.constant 0 : index
    %c0_2 = arith.constant 0 : index
    %1 = vector.load %arg2[%c0_1, %c0_2] : memref<1x64xf32, #tpu.memory_space<vmem>>, vector<1x64xf32>
    %2 = vector.broadcast %1 : vector<1x64xf32> to vector<512x64xf32>
    %3 = arith.mulf %0, %2 : vector<512x64xf32>
    %c0_3 = arith.constant 0 : index
    %c0_4 = arith.constant 0 : index
    %4 = vector.load %arg3[%c0_3, %c0_4] : memref<1x64xf32, #tpu.memory_space<vmem>>, vector<1x64xf32>
    %5 = vector.broadcast %4 : vector<1x64xf32> to vector<512x64xf32>
    %6 = arith.addf %3, %5 : vector<512x64xf32>
    %c0_5 = arith.constant 0 : index
    %c0_6 = arith.constant 0 : index
    %7 = vector.load %arg4[%c0_5, %c0_6] : memref<64x64xf32, #tpu.memory_space<vmem>>, vector<64x64xf32>
    %cst = arith.constant dense<0.000000e+00> : vector<512x64xf32>
    %8 = tpu.matmul %6, %7, %cst {dimension_numbers = #tpu.dot_dimension_numbers<[1], [0], [0], [1], [0, 0, 1, 1], [], []>} : vector<512x64xf32>, vector<64x64xf32>, vector<512x64xf32> -> vector<512x64xf32>
    %c0_7 = arith.constant 0 : index
    %c0_8 = arith.constant 0 : index
    %9 = vector.load %arg5[%c0_7, %c0_8] : memref<1x64xf32, #tpu.memory_space<vmem>>, vector<1x64xf32>
    %10 = vector.broadcast %9 : vector<1x64xf32> to vector<512x64xf32>
    %11 = arith.addf %8, %10 : vector<512x64xf32>
    %c0_9 = arith.constant 0 : index
    %c0_10 = arith.constant 0 : index
    %12 = vector.load %arg6[%c0_9, %c0_10] : memref<64x64xf32, #tpu.memory_space<vmem>>, vector<64x64xf32>
    %cst_11 = arith.constant dense<0.000000e+00> : vector<512x64xf32>
    %13 = tpu.matmul %6, %12, %cst_11 {dimension_numbers = #tpu.dot_dimension_numbers<[1], [0], [0], [1], [0, 0, 1, 1], [], []>} : vector<512x64xf32>, vector<64x64xf32>, vector<512x64xf32> -> vector<512x64xf32>
    %c0_12 = arith.constant 0 : index
    %c0_13 = arith.constant 0 : index
    %14 = vector.load %arg7[%c0_12, %c0_13] : memref<1x64xf32, #tpu.memory_space<vmem>>, vector<1x64xf32>
    %15 = vector.broadcast %14 : vector<1x64xf32> to vector<512x64xf32>
    %16 = arith.addf %13, %15 : vector<512x64xf32>
    %cst_14 = arith.constant 5.000000e-01 : f32
    %17 = vector.broadcast %cst_14 : f32 to vector<512x64xf32>
    %18 = arith.mulf %17, %16 : vector<512x64xf32>
    %19 = math.exp %18 : vector<512x64xf32>
    %c0_15 = arith.constant 0 : index
    %c0_16 = arith.constant 0 : index
    %20 = vector.load %arg10[%c0_15, %c0_16] : memref<512x64xf32, #tpu.memory_space<vmem>>, vector<512x64xf32>
    %21 = arith.mulf %19, %20 : vector<512x64xf32>
    %22 = arith.addf %11, %21 : vector<512x64xf32>
    %c0_17 = arith.constant 0 : index
    %c0_18 = arith.constant 0 : index
    %23 = vector.load %arg12[%c0_17, %c0_18] : memref<512x64xf32, #tpu.memory_space<vmem>>, vector<512x64xf32>
    tpu.vector_store %arg12[%c0_17, %c0_18], %11 {strides = array<i32>} : memref<512x64xf32, #tpu.memory_space<vmem>>, vector<512x64xf32>,
    %c0_19 = arith.constant 0 : index
    %c0_20 = arith.constant 0 : index
    %24 = vector.load %arg13[%c0_19, %c0_20] : memref<512x64xf32, #tpu.memory_space<vmem>>, vector<512x64xf32>
    tpu.vector_store %arg13[%c0_19, %c0_20], %19 {strides = array<i32>} : memref<512x64xf32, #tpu.memory_space<vmem>>, vector<512x64xf32>,
    %c0_21 = arith.constant 0 : index
    %c0_22 = arith.constant 0 : index
    %25 = vector.load %arg11[%c0_21, %c0_22] : memref<512x64xf32, #tpu.memory_space<vmem>>, vector<512x64xf32>
    tpu.vector_store %arg11[%c0_21, %c0_22], %22 {strides = array<i32>} : memref<512x64xf32, #tpu.memory_space<vmem>>, vector<512x64xf32>,
    %c0_23 = arith.constant 0 : index
    %c0_24 = arith.constant 0 : index
    %26 = vector.load %arg8[%c0_23, %c0_24] : memref<64x13xf32, #tpu.memory_space<vmem>>, vector<64x13xf32>
    %cst_25 = arith.constant dense<0.000000e+00> : vector<512x13xf32>
    %27 = tpu.matmul %22, %26, %cst_25 {dimension_numbers = #tpu.dot_dimension_numbers<[1], [0], [0], [1], [0, 0, 1, 1], [], []>} : vector<512x64xf32>, vector<64x13xf32>, vector<512x13xf32> -> vector<512x13xf32>
    %c0_26 = arith.constant 0 : index
    %c0_27 = arith.constant 0 : index
    %28 = vector.load %arg9[%c0_26, %c0_27] : memref<1x13xf32, #tpu.memory_space<vmem>>, vector<1x13xf32>
    %29 = vector.broadcast %28 : vector<1x13xf32> to vector<512x13xf32>
    %30 = arith.addf %27, %29 : vector<512x13xf32>
    %c0_28 = arith.constant 0 : index
    %c0_29 = arith.constant 0 : index
    %31 = vector.load %arg14[%c0_28, %c0_29] : memref<512x13xf32, #tpu.memory_space<vmem>>, vector<512x13xf32>
    tpu.vector_store %arg14[%c0_28, %c0_29], %30 {strides = array<i32>} : memref<512x13xf32, #tpu.memory_space<vmem>>, vector<512x13xf32>,
    return
  }
  func.func @transform_0(%arg0: i32) -> (i32, i32) {
    %c0_i32 = arith.constant 0 : i32
    %c0_i32_0 = arith.constant 0 : i32
    return %arg0, %c0_i32 : i32, i32
  }
  func.func @transform_1(%arg0: i32) -> (i32, i32) {
    %c0_i32 = arith.constant 0 : i32
    %c0_i32_0 = arith.constant 0 : i32
    %c0_i32_1 = arith.constant 0 : i32
    return %c0_i32, %c0_i32_0 : i32, i32
  }
  func.func @transform_2(%arg0: i32) -> (i32, i32) {
    %c0_i32 = arith.constant 0 : i32
    %c0_i32_0 = arith.constant 0 : i32
    %c0_i32_1 = arith.constant 0 : i32
    return %c0_i32, %c0_i32_0 : i32, i32
  }
  func.func @transform_3(%arg0: i32) -> (i32, i32) {
    %c0_i32 = arith.constant 0 : i32
    %c0_i32_0 = arith.constant 0 : i32
    %c0_i32_1 = arith.constant 0 : i32
    return %c0_i32, %c0_i32_0 : i32, i32
  }
  func.func @transform_4(%arg0: i32) -> (i32, i32) {
    %c0_i32 = arith.constant 0 : i32
    %c0_i32_0 = arith.constant 0 : i32
    %c0_i32_1 = arith.constant 0 : i32
    return %c0_i32, %c0_i32_0 : i32, i32
  }
  func.func @transform_5(%arg0: i32) -> (i32, i32) {
    %c0_i32 = arith.constant 0 : i32
    %c0_i32_0 = arith.constant 0 : i32
    %c0_i32_1 = arith.constant 0 : i32
    return %c0_i32, %c0_i32_0 : i32, i32
  }
  func.func @transform_6(%arg0: i32) -> (i32, i32) {
    %c0_i32 = arith.constant 0 : i32
    %c0_i32_0 = arith.constant 0 : i32
    %c0_i32_1 = arith.constant 0 : i32
    return %c0_i32, %c0_i32_0 : i32, i32
  }
  func.func @transform_7(%arg0: i32) -> (i32, i32) {
    %c0_i32 = arith.constant 0 : i32
    %c0_i32_0 = arith.constant 0 : i32
    %c0_i32_1 = arith.constant 0 : i32
    return %c0_i32, %c0_i32_0 : i32, i32
  }
  func.func @transform_8(%arg0: i32) -> (i32, i32) {
    %c0_i32 = arith.constant 0 : i32
    %c0_i32_0 = arith.constant 0 : i32
    %c0_i32_1 = arith.constant 0 : i32
    return %c0_i32, %c0_i32_0 : i32, i32
  }
  func.func @transform_9(%arg0: i32) -> (i32, i32) {
    %c0_i32 = arith.constant 0 : i32
    %c0_i32_0 = arith.constant 0 : i32
    return %arg0, %c0_i32 : i32, i32
  }
  func.func @transform_10(%arg0: i32) -> (i32, i32) {
    %c0_i32 = arith.constant 0 : i32
    %c0_i32_0 = arith.constant 0 : i32
    return %arg0, %c0_i32 : i32, i32
  }
  func.func @transform_11(%arg0: i32) -> (i32, i32) {
    %c0_i32 = arith.constant 0 : i32
    %c0_i32_0 = arith.constant 0 : i32
    return %arg0, %c0_i32 : i32, i32
  }
  func.func @transform_12(%arg0: i32) -> (i32, i32) {
    %c0_i32 = arith.constant 0 : i32
    %c0_i32_0 = arith.constant 0 : i32
    return %arg0, %c0_i32 : i32, i32
  }
  func.func @transform_13(%arg0: i32) -> (i32, i32) {
    %c0_i32 = arith.constant 0 : i32
    %c0_i32_0 = arith.constant 0 : i32
    return %arg0, %c0_i32 : i32, i32
  }
}

module attributes {stable_mosaic.version = 11 : i64} {
  func.func @_voxel_expr_kernel(%arg0: i32, %arg1: memref<1x8x256xf32, #tpu.memory_space<vmem>>, %arg2: memref<1x256x10xf32, #tpu.memory_space<vmem>>, %arg3: memref<10x12xf32, #tpu.memory_space<vmem>>, %arg4: memref<1x12xf32, #tpu.memory_space<vmem>>, %arg5: memref<1x12xf32, #tpu.memory_space<vmem>>, %arg6: memref<1x8x1xi32, #tpu.memory_space<vmem>>, %arg7: memref<1x8x10xf32, #tpu.memory_space<vmem>>, %arg8: memref<1x8x12xf32, #tpu.memory_space<vmem>>, %arg9: memref<1x8x12xf32, #tpu.memory_space<vmem>>) attributes {dimension_semantics = [#tpu.dimension_semantics<parallel>], iteration_bounds = array<i64: 2>, scalar_prefetch = 0 : i64, scratch_operands = 0 : i64, tpu.core_type = #tpu.core_type<tc>, window_params = [{transform_indices = @transform_0, window_bounds = array<i64: 1, 8, 256>}, {transform_indices = @transform_1, window_bounds = array<i64: 1, 256, 10>}, {pipeline_mode = #tpu.pipeline_mode<synchronous>, transform_indices = @transform_2, window_bounds = array<i64: 10, 12>}, {pipeline_mode = #tpu.pipeline_mode<synchronous>, transform_indices = @transform_3, window_bounds = array<i64: 1, 12>}, {pipeline_mode = #tpu.pipeline_mode<synchronous>, transform_indices = @transform_4, window_bounds = array<i64: 1, 12>}, {transform_indices = @transform_5, window_bounds = array<i64: 1, 8, 1>}, {transform_indices = @transform_6, window_bounds = array<i64: 1, 8, 10>}, {transform_indices = @transform_7, window_bounds = array<i64: 1, 8, 12>}, {transform_indices = @transform_8, window_bounds = array<i64: 1, 8, 12>}]} {
    %c0 = arith.constant 0 : index
    %c0_0 = arith.constant 0 : index
    %c0_1 = arith.constant 0 : index
    %0 = vector.load %arg1[%c0, %c0_0, %c0_1] : memref<1x8x256xf32, #tpu.memory_space<vmem>>, vector<1x8x256xf32>
    %1 = vector.shape_cast %0 : vector<1x8x256xf32> to vector<8x256xf32>
    %c0_2 = arith.constant 0 : index
    %c0_3 = arith.constant 0 : index
    %c0_4 = arith.constant 0 : index
    %2 = vector.load %arg2[%c0_2, %c0_3, %c0_4] : memref<1x256x10xf32, #tpu.memory_space<vmem>>, vector<1x256x10xf32>
    %3 = vector.shape_cast %2 : vector<1x256x10xf32> to vector<256x10xf32>
    %cst = arith.constant dense<0.000000e+00> : vector<8x10xf32>
    %4 = tpu.matmul %1, %3, %cst {dimension_numbers = #tpu.dot_dimension_numbers<[1], [0], [0], [1], [0, 0, 1, 1], [], []>} : vector<8x256xf32>, vector<256x10xf32>, vector<8x10xf32> -> vector<8x10xf32>
    %c0_5 = arith.constant 0 : index
    %c0_6 = arith.constant 0 : index
    %c0_7 = arith.constant 0 : index
    %5 = vector.load %arg7[%c0_5, %c0_6, %c0_7] : memref<1x8x10xf32, #tpu.memory_space<vmem>>, vector<1x8x10xf32>
    %6 = vector.shape_cast %5 : vector<1x8x10xf32> to vector<8x10xf32>
    %7 = vector.shape_cast %4 : vector<8x10xf32> to vector<1x8x10xf32>
    tpu.vector_store %arg7[%c0_5, %c0_6, %c0_7], %7 {strides = array<i32>} : memref<1x8x10xf32, #tpu.memory_space<vmem>>, vector<1x8x10xf32>,
    %c0_8 = arith.constant 0 : index
    %c0_9 = arith.constant 0 : index
    %8 = vector.load %arg3[%c0_8, %c0_9] : memref<10x12xf32, #tpu.memory_space<vmem>>, vector<10x12xf32>
    %cst_10 = arith.constant dense<0.000000e+00> : vector<8x12xf32>
    %9 = tpu.matmul %4, %8, %cst_10 {dimension_numbers = #tpu.dot_dimension_numbers<[1], [0], [0], [1], [0, 0, 1, 1], [], []>} : vector<8x10xf32>, vector<10x12xf32>, vector<8x12xf32> -> vector<8x12xf32>
    %c0_11 = arith.constant 0 : index
    %c0_12 = arith.constant 0 : index
    %10 = vector.load %arg4[%c0_11, %c0_12] : memref<1x12xf32, #tpu.memory_space<vmem>>, vector<1x12xf32>
    %11 = vector.broadcast %10 : vector<1x12xf32> to vector<8x12xf32>
    %12 = arith.mulf %9, %11 : vector<8x12xf32>
    %cst_13 = arith.constant 0.000000e+00 : f32
    %13 = vector.broadcast %cst_13 : f32 to vector<8x12xf32>
    %14 = arith.maximumf %12, %13 : vector<8x12xf32>
    %15 = vector.broadcast %cst_13 : f32 to vector<8x12xf32>
    %16 = arith.subf %12, %15 : vector<8x12xf32>
    %17 = arith.cmpf one, %16, %16 : vector<8x12xf32>
    %18 = vector.broadcast %cst_13 : f32 to vector<8x12xf32>
    %19 = arith.addf %12, %18 : vector<8x12xf32>
    %20 = math.absf %16 : vector<8x12xf32>
    %cst_14 = arith.constant 0.000000e+00 : f32
    %21 = vector.broadcast %cst_14 : f32 to vector<8x12xf32>
    %22 = arith.subf %21, %20 : vector<8x12xf32>
    %23 = math.exp %22 : vector<8x12xf32>
    %24 = math.log1p %23 : vector<8x12xf32>
    %25 = arith.addf %14, %24 : vector<8x12xf32>
    %26 = arith.select %17, %19, %25 : vector<8x12xi1>, vector<8x12xf32>
    %c0_15 = arith.constant 0 : index
    %c0_16 = arith.constant 0 : index
    %c0_17 = arith.constant 0 : index
    %27 = vector.load %arg6[%c0_15, %c0_16, %c0_17] : memref<1x8x1xi32, #tpu.memory_space<vmem>>, vector<1x8x1xi32>
    %28 = vector.shape_cast %27 : vector<1x8x1xi32> to vector<8x1xi32>
    %c0_i32 = arith.constant 0 : i32
    %29 = vector.broadcast %c0_i32 : i32 to vector<8x1xi32>
    %30 = arith.cmpi eq, %28, %29 : vector<8x1xi32>
    %cst_18 = arith.constant 0.000000e+00 : f32
    %31 = vector.shape_cast %30 : vector<8x1xi1> to vector<8x1xi1>
    %32 = vector.broadcast %31 : vector<8x1xi1> to vector<8x12xi1>
    %33 = vector.broadcast %cst_18 : f32 to vector<8x12xf32>
    %34 = arith.select %32, %33, %26 : vector<8x12xi1>, vector<8x12xf32>
    %cst_19 = arith.constant 9.99999993E-9 : f32
    %35 = vector.broadcast %cst_19 : f32 to vector<8x12xf32>
    %36 = arith.addf %34, %35 : vector<8x12xf32>
    %c0_20 = arith.constant 0 : index
    %c0_21 = arith.constant 0 : index
    %c0_22 = arith.constant 0 : index
    %37 = vector.load %arg8[%c0_20, %c0_21, %c0_22] : memref<1x8x12xf32, #tpu.memory_space<vmem>>, vector<1x8x12xf32>
    %38 = vector.shape_cast %37 : vector<1x8x12xf32> to vector<8x12xf32>
    %39 = vector.shape_cast %36 : vector<8x12xf32> to vector<1x8x12xf32>
    tpu.vector_store %arg8[%c0_20, %c0_21, %c0_22], %39 {strides = array<i32>} : memref<1x8x12xf32, #tpu.memory_space<vmem>>, vector<1x8x12xf32>,
    %c0_23 = arith.constant 0 : index
    %c0_24 = arith.constant 0 : index
    %40 = vector.load %arg5[%c0_23, %c0_24] : memref<1x12xf32, #tpu.memory_space<vmem>>, vector<1x12xf32>
    %41 = vector.broadcast %40 : vector<1x12xf32> to vector<8x12xf32>
    %42 = arith.mulf %36, %41 : vector<8x12xf32>
    %c0_25 = arith.constant 0 : index
    %c0_26 = arith.constant 0 : index
    %c0_27 = arith.constant 0 : index
    %43 = vector.load %arg9[%c0_25, %c0_26, %c0_27] : memref<1x8x12xf32, #tpu.memory_space<vmem>>, vector<1x8x12xf32>
    %44 = vector.shape_cast %43 : vector<1x8x12xf32> to vector<8x12xf32>
    %45 = vector.shape_cast %42 : vector<8x12xf32> to vector<1x8x12xf32>
    tpu.vector_store %arg9[%c0_25, %c0_26, %c0_27], %45 {strides = array<i32>} : memref<1x8x12xf32, #tpu.memory_space<vmem>>, vector<1x8x12xf32>,
    return
  }
  func.func @transform_0(%arg0: i32) -> (i32, i32, i32) {
    %c0_i32 = arith.constant 0 : i32
    %c0_i32_0 = arith.constant 0 : i32
    %c0_i32_1 = arith.constant 0 : i32
    return %arg0, %c0_i32, %c0_i32_0 : i32, i32, i32
  }
  func.func @transform_1(%arg0: i32) -> (i32, i32, i32) {
    %c0_i32 = arith.constant 0 : i32
    %c0_i32_0 = arith.constant 0 : i32
    %c0_i32_1 = arith.constant 0 : i32
    return %arg0, %c0_i32, %c0_i32_0 : i32, i32, i32
  }
  func.func @transform_2(%arg0: i32) -> (i32, i32) {
    %c0_i32 = arith.constant 0 : i32
    %c0_i32_0 = arith.constant 0 : i32
    %c0_i32_1 = arith.constant 0 : i32
    return %c0_i32, %c0_i32_0 : i32, i32
  }
  func.func @transform_3(%arg0: i32) -> (i32, i32) {
    %c0_i32 = arith.constant 0 : i32
    %c0_i32_0 = arith.constant 0 : i32
    %c0_i32_1 = arith.constant 0 : i32
    return %c0_i32, %c0_i32_0 : i32, i32
  }
  func.func @transform_4(%arg0: i32) -> (i32, i32) {
    %c0_i32 = arith.constant 0 : i32
    %c0_i32_0 = arith.constant 0 : i32
    %c0_i32_1 = arith.constant 0 : i32
    return %c0_i32, %c0_i32_0 : i32, i32
  }
  func.func @transform_5(%arg0: i32) -> (i32, i32, i32) {
    %c0_i32 = arith.constant 0 : i32
    %c0_i32_0 = arith.constant 0 : i32
    %c0_i32_1 = arith.constant 0 : i32
    return %arg0, %c0_i32, %c0_i32_0 : i32, i32, i32
  }
  func.func @transform_6(%arg0: i32) -> (i32, i32, i32) {
    %c0_i32 = arith.constant 0 : i32
    %c0_i32_0 = arith.constant 0 : i32
    %c0_i32_1 = arith.constant 0 : i32
    return %arg0, %c0_i32, %c0_i32_0 : i32, i32, i32
  }
  func.func @transform_7(%arg0: i32) -> (i32, i32, i32) {
    %c0_i32 = arith.constant 0 : i32
    %c0_i32_0 = arith.constant 0 : i32
    %c0_i32_1 = arith.constant 0 : i32
    return %arg0, %c0_i32, %c0_i32_0 : i32, i32, i32
  }
  func.func @transform_8(%arg0: i32) -> (i32, i32, i32) {
    %c0_i32 = arith.constant 0 : i32
    %c0_i32_0 = arith.constant 0 : i32
    %c0_i32_1 = arith.constant 0 : i32
    return %arg0, %c0_i32, %c0_i32_0 : i32, i32, i32
  }
}

</mosaic_0001>

<llo_original>
// kernel: metagene_autoencoder_forward.5
$region0: #{metagene_autoencoder_forward.5}
  #allocation0 [shape = 'u32[]', space=smem, size = 0x4, offset = 0x4, fixed_abs, tag = 'smem constant byte address 0x4 - core index']
  #allocation1 [shape = 'u32[144,128]{1,0:T(1,128)}', space=vmem, size = 0x12000, scoped, tag = 'internal scratch']
  %s0 = inlined_call_operand.vmem [shape: f32[2,8,256], index: 0, kind: input, shape index: {}]
  %s1 = inlined_call_operand.vmem [shape: f32[2,256,10], index: 1, kind: input, shape index: {}]
  %s2 = inlined_call_operand.vmem [shape: f32[10,12], index: 2, kind: input, shape index: {}]
  %s3 = inlined_call_operand.vmem [shape: f32[1,12], index: 3, kind: input, shape index: {}]
  %s4 = inlined_call_operand.vmem [shape: f32[1,12], index: 4, kind: input, shape index: {}]
  %s5 = inlined_call_operand.vmem [shape: s32[2,8,1], index: 5, kind: input, shape index: {}]
  %s6 = inlined_call_operand.hbm [shape: f32[2,8,10], index: 6, kind: output, shape index: {0}]
  %s7 = inlined_call_operand.hbm [shape: f32[2,8,12], index: 7, kind: output, shape index: {1}]
  %s8 = inlined_call_operand.hbm [shape: f32[2,8,12], index: 8, kind: output, shape index: {2}]
  %9 = xla_tuple %s6, %s7, %s8
  %s10 = sld [smem:[#allocation0]]
  $region73: #{metagene_autoencoder_forward.5} parent=0
    _
  %s12 = ssub.s32 1, %s10
  %s13 = scalar_select 0, %s12, %s10
  $region1: #{metagene_autoencoder_forward.5} parent=0
    #allocation2 [shape = 'u8[8192]{0}', space=vmem, size = 0x2000, scoped, tag = 'output window, operand 0']
    #allocation3 [shape = 's32[2]{0}', space=sflag, size = 0x8, scoped, tag = 'scoped memory for metagene_autoencoder_forward.5']
    #allocation4 [shape = 'u8[8192]{0}', space=vmem, size = 0x2000, scoped, tag = 'output window, operand 1']
    #allocation5 [shape = 's32[2]{0}', space=sflag, size = 0x8, scoped, tag = 'scoped memory for metagene_autoencoder_forward.5']
    #allocation6 [shape = 'u8[8192]{0}', space=vmem, size = 0x2000, scoped, tag = 'output window, operand 2']
    %14 = vsyncpa [#allocation3], 0
    %s15 = scalar_lea.sflag [#allocation3], 1
    %16 = vsyncpa %s15, 0
    %17 = vsyncpa [#allocation5], 0
    %s18 = scalar_lea.sflag [#allocation5], 1
    %19 = vsyncpa %s18, 0
    loop: start=0, step=1, limit=4
    $region2: #{metagene_autoencoder_forward.5} parent=1 // loop_pre_header
      _
    $region3: #{metagene_autoencoder_forward.5} parent=1 // loop_header
      %s21 = sphi 0, %s25
      %p22 = scmp.ge.s32.totalorder %s21, 4
      %s31 = sphi 0, %s33
      %s34 = sphi 0, %s31
      %s35 = sphi 0, %s34
      %s51 = sphi 0, %s35
      %s57 = sphi 0, %s59
      %s60 = sphi 0, %s57
      %s61 = sphi 0, %s60
      %s77 = sphi 0, %s61
      %s81 = sphi 0, %s81
      %s83 = sphi 0, %s81
      %s84 = sphi 0, %s83
      %s98 = sphi 0, %s84
      %s102 = sphi 0, %s102
      %s104 = sphi 0, %s102
      %s105 = sphi 0, %s104
      %s119 = sphi 0, %s105
      %s123 = sphi 0, %s123
      %s125 = sphi 0, %s123
      %s126 = sphi 0, %s125
      %s140 = sphi 0, %s126
      %s146 = sphi 0, %s148
      %s149 = sphi 0, %s146
      %s150 = sphi 0, %s149
      %s166 = sphi 0, %s150
      %s172 = sphi 0, %s174
      %s175 = sphi 0, %s172
      %s176 = sphi 0, %s175
      %s192 = sphi 0, %s176
      %s198 = sphi 0, %s200
      %s201 = sphi 0, %s198
      %s202 = sphi 0, %s201
      %s218 = sphi 0, %s202
      %s224 = sphi 0, %s226
      %s227 = sphi 0, %s224
      %s228 = sphi 0, %s227
      %s244 = sphi 0, %s228
    $region4: #{metagene_autoencoder_forward.5} parent=1 // loop_header_branch
      %24 = sbr.rel (%p22) target = $region8
    $region5: #{metagene_autoencoder_forward.5} parent=1 // loop_body
      %s26 = ssub.s32 %s21, 1
      %s27 = ssub.s32 %s21, 2
      %s28 = sadd.s32 %s21, 1
      %s29 = ssub.s32 %s21, %s28
      %p30 = scmp.eq.s32.totalorder %s29, 0
      %s32 = sadd.s32 %s31, 1
      %s33 = scalar_select %p30, %s31, %s32
      %p36 = pneg %p30
      %p37 = scmp.eq.s32.totalorder %s21, 1
      %p38 = por %p36, %p37
      %p39 = scmp.ne.s32.totalorder %s31, %s34
      %p40 = scmp.eq.s32.totalorder %s21, 0
      %p41 = por %p39, %p40
      %p42 = scmp.ne.s32.totalorder %s31, %s34
      %p43 = scmp.eq.s32.totalorder %s26, 1
      %p44 = por %p42, %p43
      %p45 = scmp.ne.s32.totalorder %s34, %s35
      %p46 = scmp.eq.s32.totalorder %s26, 0
      %p47 = por %p45, %p46
      %p48 = scmp.ne.s32.totalorder %s34, %s35
      %p49 = scmp.eq.s32.totalorder %s27, 1
      %p50 = por %p48, %p49
      %p52 = scmp.ne.s32.totalorder %s35, %s51
      %p53 = scmp.eq.s32.totalorder %s27, 0
      %p54 = por %p52, %p53
      %s55 = ssub.s32 %s21, %s28
      %p56 = scmp.eq.s32.totalorder %s55, 0
      %s58 = sadd.s32 %s57, 1
      %s59 = scalar_select %p56, %s57, %s58
      %p62 = pneg %p56
      %p63 = scmp.eq.s32.totalorder %s21, 1
      %p64 = por %p62, %p63
      %p65 = scmp.ne.s32.totalorder %s57, %s60
      %p66 = scmp.eq.s32.totalorder %s21, 0
      %p67 = por %p65, %p66
      %p68 = scmp.ne.s32.totalorder %s57, %s60
      %p69 = scmp.eq.s32.totalorder %s26, 1
      %p70 = por %p68, %p69
      %p71 = scmp.ne.s32.totalorder %s60, %s61
      %p72 = scmp.eq.s32.totalorder %s26, 0
      %p73 = por %p71, %p72
      %p74 = scmp.ne.s32.totalorder %s60, %s61
      %p75 = scmp.eq.s32.totalorder %s27, 1
      %p76 = por %p74, %p75
      %p78 = scmp.ne.s32.totalorder %s61, %s77
      %p79 = scmp.eq.s32.totalorder %s27, 0
      %p80 = por %p78, %p79
      %s82 = sadd.s32 %s81, 1
      %p85 = scmp.eq.s32.totalorder %s21, 1
      %p86 = scmp.ne.s32.totalorder %s81, %s83
      %p87 = scmp.eq.s32.totalorder %s21, 0
      %p88 = por %p86, %p87
      %p89 = scmp.ne.s32.totalorder %s81, %s83
      %p90 = scmp.eq.s32.totalorder %s26, 1
      %p91 = por %p89, %p90
      %p92 = scmp.ne.s32.totalorder %s83, %s84
      %p93 = scmp.eq.s32.totalorder %s26, 0
      %p94 = por %p92, %p93
      %p95 = scmp.ne.s32.totalorder %s83, %s84
      %p96 = scmp.eq.s32.totalorder %s27, 1
      %p97 = por %p95, %p96
      %p99 = scmp.ne.s32.totalorder %s84, %s98
      %p100 = scmp.eq.s32.totalorder %s27, 0
      %p101 = por %p99, %p100
      %s103 = sadd.s32 %s102, 1
      %p106 = scmp.eq.s32.totalorder %s21, 1
      %p107 = scmp.ne.s32.totalorder %s102, %s104
      %p108 = scmp.eq.s32.totalorder %s21, 0
      %p109 = por %p107, %p108
      %p110 = scmp.ne.s32.totalorder %s102, %s104
      %p111 = scmp.eq.s32.totalorder %s26, 1
      %p112 = por %p110, %p111
      %p113 = scmp.ne.s32.totalorder %s104, %s105
      %p114 = scmp.eq.s32.totalorder %s26, 0
      %p115 = por %p113, %p114
      %p116 = scmp.ne.s32.totalorder %s104, %s105
      %p117 = scmp.eq.s32.totalorder %s27, 1
      %p118 = por %p116, %p117
      %p120 = scmp.ne.s32.totalorder %s105, %s119
      %p121 = scmp.eq.s32.totalorder %s27, 0
      %p122 = por %p120, %p121
      %s124 = sadd.s32 %s123, 1
      %p127 = scmp.eq.s32.totalorder %s21, 1
      %p128 = scmp.ne.s32.totalorder %s123, %s125
      %p129 = scmp.eq.s32.totalorder %s21, 0
      %p130 = por %p128, %p129
      %p131 = scmp.ne.s32.totalorder %s123, %s125
      %p132 = scmp.eq.s32.totalorder %s26, 1
      %p133 = por %p131, %p132
      %p134 = scmp.ne.s32.totalorder %s125, %s126
      %p135 = scmp.eq.s32.totalorder %s26, 0
      %p136 = por %p134, %p135
      %p137 = scmp.ne.s32.totalorder %s125, %s126
      %p138 = scmp.eq.s32.totalorder %s27, 1
      %p139 = por %p137, %p138
      %p141 = scmp.ne.s32.totalorder %s126, %s140
      %p142 = scmp.eq.s32.totalorder %s27, 0
      %p143 = por %p141, %p142
      %s144 = ssub.s32 %s21, %s28
      %p145 = scmp.eq.s32.totalorder %s144, 0
      %s147 = sadd.s32 %s146, 1
      %s148 = scalar_select %p145, %s146, %s147
      %p151 = pneg %p145
      %p152 = scmp.eq.s32.totalorder %s21, 1
      %p153 = por %p151, %p152
      %p154 = scmp.ne.s32.totalorder %s146, %s149
      %p155 = scmp.eq.s32.totalorder %s21, 0
      %p156 = por %p154, %p155
      %p157 = scmp.ne.s32.totalorder %s146, %s149
      %p158 = scmp.eq.s32.totalorder %s26, 1
      %p159 = por %p157, %p158
      %p160 = scmp.ne.s32.totalorder %s149, %s150
      %p161 = scmp.eq.s32.totalorder %s26, 0
      %p162 = por %p160, %p161
      %p163 = scmp.ne.s32.totalorder %s149, %s150
      %p164 = scmp.eq.s32.totalorder %s27, 1
      %p165 = por %p163, %p164
      %p167 = scmp.ne.s32.totalorder %s150, %s166
      %p168 = scmp.eq.s32.totalorder %s27, 0
      %p169 = por %p167, %p168
      %s170 = ssub.s32 %s21, %s28
      %p171 = scmp.eq.s32.totalorder %s170, 0
      %s173 = sadd.s32 %s172, 1
      %s174 = scalar_select %p171, %s172, %s173
      %p177 = pneg %p171
      %p178 = scmp.eq.s32.totalorder %s21, 1
      %p179 = por %p177, %p178
      %p180 = scmp.ne.s32.totalorder %s172, %s175
      %p181 = scmp.eq.s32.totalorder %s21, 0
      %p182 = por %p180, %p181
      %p183 = scmp.ne.s32.totalorder %s172, %s175
      %p184 = scmp.eq.s32.totalorder %s26, 1
      %p185 = por %p183, %p184
      %p186 = scmp.ne.s32.totalorder %s175, %s176
      %p187 = scmp.eq.s32.totalorder %s26, 0
      %p188 = por %p186, %p187
      %p189 = scmp.ne.s32.totalorder %s175, %s176
      %p190 = scmp.eq.s32.totalorder %s27, 1
      %p191 = por %p189, %p190
      %p193 = scmp.ne.s32.totalorder %s176, %s192
      %p194 = scmp.eq.s32.totalorder %s27, 0
      %p195 = por %p193, %p194
      %s196 = ssub.s32 %s21, %s28
      %p197 = scmp.eq.s32.totalorder %s196, 0
      %s199 = sadd.s32 %s198, 1
      %s200 = scalar_select %p197, %s198, %s199
      %p203 = pneg %p197
      %p204 = scmp.eq.s32.totalorder %s21, 1
      %p205 = por %p203, %p204
      %p206 = scmp.ne.s32.totalorder %s198, %s201
      %p207 = scmp.eq.s32.totalorder %s21, 0
      %p208 = por %p206, %p207
      %p209 = scmp.ne.s32.totalorder %s198, %s201
      %p210 = scmp.eq.s32.totalorder %s26, 1
      %p211 = por %p209, %p210
      %p212 = scmp.ne.s32.totalorder %s201, %s202
      %p213 = scmp.eq.s32.totalorder %s26, 0
      %p214 = por %p212, %p213
      %p215 = scmp.ne.s32.totalorder %s201, %s202
      %p216 = scmp.eq.s32.totalorder %s27, 1
      %p217 = por %p215, %p216
      %p219 = scmp.ne.s32.totalorder %s202, %s218
      %p220 = scmp.eq.s32.totalorder %s27, 0
      %p221 = por %p219, %p220
      %s222 = ssub.s32 %s21, %s28
      %p223 = scmp.eq.s32.totalorder %s222, 0
      %s225 = sadd.s32 %s224, 1
      %s226 = scalar_select %p223, %s224, %s225
      %p229 = pneg %p223
      %p230 = scmp.eq.s32.totalorder %s21, 1
      %p231 = por %p229, %p230
      %p232 = scmp.ne.s32.totalorder %s224, %s227
      %p233 = scmp.eq.s32.totalorder %s21, 0
      %p234 = por %p232, %p233
      %p235 = scmp.ne.s32.totalorder %s224, %s227
      %p236 = scmp.eq.s32.totalorder %s26, 1
      %p237 = por %p235, %p236
      %p238 = scmp.ne.s32.totalorder %s227, %s228
      %p239 = scmp.eq.s32.totalorder %s26, 0
      %p240 = por %p238, %p239
      %p241 = scmp.ne.s32.totalorder %s227, %s228
      %p242 = scmp.eq.s32.totalorder %s27, 1
      %p243 = por %p241, %p242
      %p245 = scmp.ne.s32.totalorder %s228, %s244
      %p246 = scmp.eq.s32.totalorder %s27, 0
      %p247 = por %p245, %p246
      %p248 = scmp.le.s32.totalorder 1, %s21
      %p249 = scmp.lt.s32.totalorder %s21, 3
      %p250 = pnand %p248, %p249
      %p251 = pneg %p250
      // Predicated region
      $region9: #{metagene_autoencoder_forward.5} parent=5 // pred_check
        _
      $region10: #{metagene_autoencoder_forward.5} parent=5 // pred_check_branch
        %253 = sbr.rel (%p250) target = $region12
      $region11: #{metagene_autoencoder_forward.5} parent=5 // pred_region
        %s254 = ssub.s32 %s21, 1
        // Predicated region
        $region13: #{metagene_autoencoder_forward.5} parent=11 // pred_check
          %p255 = pneg %p94
        $region14: #{metagene_autoencoder_forward.5} parent=11 // pred_check_branch
          %257 = sbr.rel (%p255) target = $region16
        $region15: #{metagene_autoencoder_forward.5} parent=11 // pred_region
          _
        $region16: #{metagene_autoencoder_forward.5} parent=11 // pred_fallthru
          _
        // Predicated region
        $region17: #{metagene_autoencoder_forward.5} parent=11 // pred_check
          %p258 = pneg %p115
        $region18: #{metagene_autoencoder_forward.5} parent=11 // pred_check_branch
          %260 = sbr.rel (%p258) target = $region20
        $region19: #{metagene_autoencoder_forward.5} parent=11 // pred_region
          _
        $region20: #{metagene_autoencoder_forward.5} parent=11 // pred_fallthru
          _
        // Predicated region
        $region21: #{metagene_autoencoder_forward.5} parent=11 // pred_check
          %p261 = pneg %p136
        $region22: #{metagene_autoencoder_forward.5} parent=11 // pred_check_branch
          %263 = sbr.rel (%p261) target = $region24
        $region23: #{metagene_autoencoder_forward.5} parent=11 // pred_region
          _
        $region24: #{metagene_autoencoder_forward.5} parent=11 // pred_fallthru
          _
      $region12: #{metagene_autoencoder_forward.5} parent=5 // pred_fallthru
        _
      %p264 = scmp.lt.s32.totalorder %s21, 2
      // Predicated region
      $region25: #{metagene_autoencoder_forward.5} parent=5 // pred_check
        %p265 = pneg %p264
      $region26: #{metagene_autoencoder_forward.5} parent=5 // pred_check_branch
        %267 = sbr.rel (%p265) target = $region28
      $region27: #{metagene_autoencoder_forward.5} parent=5 // pred_region
        // Predicated region
        $region29: #{metagene_autoencoder_forward.5} parent=27 // pred_check
          %p268 = pneg %p41
        $region30: #{metagene_autoencoder_forward.5} parent=27 // pred_check_branch
          %270 = sbr.rel (%p268) target = $region32
        $region31: #{metagene_autoencoder_forward.5} parent=27 // pred_region
          %p271 = scmp.lt.s32.totalorder %s21, 1
          %s272 = scalar_select %p271, %s21, 1
          %s273 = smul.addr %s272, 2
          %s274 = smul.addr %s273, 8
          %s275 = scalar_lea.vmem %s0, %s274
        $region32: #{metagene_autoencoder_forward.5} parent=27 // pred_fallthru
          _
        // Predicated region
        $region33: #{metagene_autoencoder_forward.5} parent=27 // pred_check
          %p276 = pneg %p67
        $region34: #{metagene_autoencoder_forward.5} parent=27 // pred_check_branch
          %278 = sbr.rel (%p276) target = $region36
        $region35: #{metagene_autoencoder_forward.5} parent=27 // pred_region
          %p279 = scmp.lt.s32.totalorder %s21, 1
          %s280 = scalar_select %p279, %s21, 1
          %s281 = smul.addr %s280, 32
          %s282 = smul.addr %s281, 8
          %s283 = scalar_lea.vmem %s1, %s282
        $region36: #{metagene_autoencoder_forward.5} parent=27 // pred_fallthru
          _
        // Predicated region
        $region37: #{metagene_autoencoder_forward.5} parent=27 // pred_check
          %p284 = pneg %p156
        $region38: #{metagene_autoencoder_forward.5} parent=27 // pred_check_branch
          %286 = sbr.rel (%p284) target = $region40
        $region39: #{metagene_autoencoder_forward.5} parent=27 // pred_region
          %p287 = scmp.lt.s32.totalorder %s21, 1
          %s288 = scalar_select %p287, %s21, 1
          %s289 = smul.addr %s288, 8
          %s290 = scalar_lea.vmem %s5, %s289
        $region40: #{metagene_autoencoder_forward.5} parent=27 // pred_fallthru
          _
      $region28: #{metagene_autoencoder_forward.5} parent=5 // pred_fallthru
        _
      %p291 = scmp.le.s32.totalorder 1, %s21
      %p292 = scmp.lt.s32.totalorder %s21, 3
      %p293 = pnand %p291, %p292
      %p294 = pneg %p293
      // Predicated region
      $region41: #{metagene_autoencoder_forward.5} parent=5 // pred_check
        _
      $region42: #{metagene_autoencoder_forward.5} parent=5 // pred_check_branch
        %296 = sbr.rel (%p293) target = $region44
      $region43: #{metagene_autoencoder_forward.5} parent=5 // pred_region
        %s297 = ssub.s32 %s21, 1
        %p298 = scmp.lt.s32.totalorder %s26, 1
        %s299 = scalar_select %p298, %s26, 1
        %s300 = smul.addr %s299, 2
        %s301 = smul.addr %s300, 8
        %s302 = scalar_lea.vmem %s0, %s301
        %p303 = pneg %p47
        %p304 = pneg %p44
        %p305 = scmp.lt.s32.totalorder %s26, 1
        %s306 = scalar_select %p305, %s26, 1
        %s307 = smul.addr %s306, 32
        %s308 = smul.addr %s307, 8
        %s309 = scalar_lea.vmem %s1, %s308
        %p310 = pneg %p73
        %p311 = pneg %p70
        %p312 = pneg %p94
        %p313 = pneg %p91
        %p314 = pneg %p115
        %p315 = pneg %p112
        %p316 = pneg %p136
        %p317 = pneg %p133
        %p318 = scmp.lt.s32.totalorder %s26, 1
        %s319 = scalar_select %p318, %s26, 1
        %s320 = smul.addr %s319, 8
        %s321 = scalar_lea.vmem %s5, %s320
        %p322 = pneg %p162
        %p323 = pneg %p159
        %p324 = pneg %p188
        %p325 = pneg %p185
        %s326 = sand.u32 %s175, 1
        %s327 = scalar_lea.sflag [#allocation3], %s326
        %s328 = sand.u32 %s175, 1
        %s329 = smul.addr %s328, 8
        %s330 = scalar_lea.vmem [#allocation2], %s329
        %p331 = pneg %p214
        %p332 = pneg %p211
        %s333 = sand.u32 %s26, 1
        %s334 = scalar_lea.sflag [#allocation5], %s333
        %s335 = sand.u32 %s201, 1
        %s336 = smul.addr %s335, 8
        %s337 = scalar_lea.vmem [#allocation4], %s336
        %p338 = pneg %p240
        %p339 = pneg %p237
        %s340 = sand.u32 %s26, 1
        %s341 = scalar_lea.sflag [#allocation5], %s340
        %s342 = sand.u32 %s227, 1
        %s343 = smul.addr %s342, 8
        %s344 = scalar_lea.vmem [#allocation6], %s343
        %p345 = scmp.lt.s32.totalorder %s26, 1
        %s346 = scalar_select %p345, %s26, 1
        %s347 = smul.addr %s346, 2
        %s348 = smul.addr %s347, 8
        %s349 = scalar_lea.vmem %s0, %s348
        %p350 = scmp.lt.s32.totalorder %s26, 1
        %s351 = scalar_select %p350, %s26, 1
        %s352 = smul.addr %s351, 32
        %s353 = smul.addr %s352, 8
        %s354 = scalar_lea.vmem %s1, %s353
        %p355 = scmp.lt.s32.totalorder %s26, 1
        %s356 = scalar_select %p355, %s26, 1
        %s357 = smul.addr %s356, 8
        %s358 = scalar_lea.vmem %s5, %s357
        %v359 = vld [vmem:[%s349] sm:$0xff]
        %v360 = vld [vmem:[%s349 + $0x8] sm:$0xff]
        %v361 = vld [vmem:[%s354] sm:$0xff]
        %v362 = vld [vmem:[%s354 + $0x8] sm:$0xff]
        %v363 = vld [vmem:[%s354 + $0x10] sm:$0xff]
        %v364 = vld [vmem:[%s354 + $0x18] sm:$0xff]
        %v365 = vld [vmem:[%s354 + $0x20] sm:$0xff]
        %v366 = vld [vmem:[%s354 + $0x28] sm:$0xff]
        %v367 = vld [vmem:[%s354 + $0x30] sm:$0xff]
        %v368 = vld [vmem:[%s354 + $0x38] sm:$0xff]
        %v369 = vld [vmem:[%s354 + $0x40] sm:$0xff]
        %v370 = vld [vmem:[%s354 + $0x48] sm:$0xff]
        %v371 = vld [vmem:[%s354 + $0x50] sm:$0xff]
        %v372 = vld [vmem:[%s354 + $0x58] sm:$0xff]
        %v373 = vld [vmem:[%s354 + $0x60] sm:$0xff]
        %v374 = vld [vmem:[%s354 + $0x68] sm:$0xff]
        %v375 = vld [vmem:[%s354 + $0x70] sm:$0xff]
        %v376 = vld [vmem:[%s354 + $0x78] sm:$0xff]
        %v377 = vld [vmem:[%s354 + $0x80] sm:$0xff]
        %v378 = vld [vmem:[%s354 + $0x88] sm:$0xff]
        %v379 = vld [vmem:[%s354 + $0x90] sm:$0xff]
        %v380 = vld [vmem:[%s354 + $0x98] sm:$0xff]
        %v381 = vld [vmem:[%s354 + $0xa0] sm:$0xff]
        %v382 = vld [vmem:[%s354 + $0xa8] sm:$0xff]
        %v383 = vld [vmem:[%s354 + $0xb0] sm:$0xff]
        %v384 = vld [vmem:[%s354 + $0xb8] sm:$0xff]
        %v385 = vld [vmem:[%s354 + $0xc0] sm:$0xff]
        %v386 = vld [vmem:[%s354 + $0xc8] sm:$0xff]
        %v387 = vld [vmem:[%s354 + $0xd0] sm:$0xff]
        %v388 = vld [vmem:[%s354 + $0xd8] sm:$0xff]
        %v389 = vld [vmem:[%s354 + $0xe0] sm:$0xff]
        %v390 = vld [vmem:[%s354 + $0xe8] sm:$0xff]
        %v391 = vld [vmem:[%s354 + $0xf0] sm:$0xff]
        %v392 = vld [vmem:[%s354 + $0xf8] sm:$0xff]
        %393 = vmatprep.subr.mxu0 0.0
        %394 = vmatpush1.msra.mxu0 %v361
        %395 = vmatprep.subr.mxu0 0.0
        %396 = vmatpush1.msra.mxu0 %v362
        %397 = vmatprep.subr.mxu0 0.0
        %398 = vmatpush1.msra.mxu0 %v363
        %399 = vmatprep.subr.mxu0 0.0
        %400 = vmatpush1.msra.mxu0 %v364
        %401 = vmatprep.subr.mxu0 0.0
        %402 = vmatpush1.msra.mxu0 %v365
        %403 = vmatprep.subr.mxu0 0.0
        %404 = vmatpush1.msra.mxu0 %v366
        %405 = vmatprep.subr.mxu0 0.0
        %406 = vmatpush1.msra.mxu0 %v367
        %407 = vmatprep.subr.mxu0 0.0
        %408 = vmatpush1.msra.mxu0 %v368
        %409 = vmatprep.subr.mxu0 0.0
        %410 = vmatpush1.msra.mxu0 %v369
        %411 = vmatprep.subr.mxu0 0.0
        %412 = vmatpush1.msra.mxu0 %v370
        %413 = vmatprep.subr.mxu0 0.0
        %414 = vmatpush1.msra.mxu0 %v371
        %415 = vmatprep.subr.mxu0 0.0
        %416 = vmatpush1.msra.mxu0 %v372
        %417 = vmatprep.subr.mxu0 0.0
        %418 = vmatpush1.msra.mxu0 %v373
        %419 = vmatprep.subr.mxu0 0.0
        %420 = vmatpush1.msra.mxu0 %v374
        %421 = vmatprep.subr.mxu0 0.0
        %422 = vmatpush1.msra.mxu0 %v375
        %423 = vmatprep.subr.mxu0 0.0
        %424 = vmatpush1.msra.mxu0 %v376
        %425 = vmatprep.subr.mxu0 0.0
        %426 = vmatpush1.msra.mxu0 %v377
        %427 = vmatprep.subr.mxu0 0.0
        %428 = vmatpush1.msra.mxu0 %v378
        %429 = vmatprep.subr.mxu0 0.0
        %430 = vmatpush1.msra.mxu0 %v379
        %431 = vmatprep.subr.mxu0 0.0
        %432 = vmatpush1.msra.mxu0 %v380
        %433 = vmatprep.subr.mxu0 0.0
        %434 = vmatpush1.msra.mxu0 %v381
        %435 = vmatprep.subr.mxu0 0.0
        %436 = vmatpush1.msra.mxu0 %v382
        %437 = vmatprep.subr.mxu0 0.0
        %438 = vmatpush1.msra.mxu0 %v383
        %439 = vmatprep.subr.mxu0 0.0
        %440 = vmatpush1.msra.mxu0 %v384
        %441 = vmatprep.subr.mxu0 0.0
        %442 = vmatpush1.msra.mxu0 %v385
        %443 = vmatprep.subr.mxu0 0.0
        %444 = vmatpush1.msra.mxu0 %v386
        %445 = vmatprep.subr.mxu0 0.0
        %446 = vmatpush1.msra.mxu0 %v387
        %447 = vmatprep.subr.mxu0 0.0
        %448 = vmatpush1.msra.mxu0 %v388
        %449 = vmatprep.subr.mxu0 0.0
        %450 = vmatpush1.msra.mxu0 %v389
        %451 = vmatprep.subr.mxu0 0.0
        %452 = vmatpush1.msra.mxu0 %v390
        %453 = vmatprep.subr.mxu0 0.0
        %454 = vmatpush1.msra.mxu0 %v391
        %455 = vmatprep.subr.mxu0 0.0
        %456 = vmatpush1.msra.mxu0 %v392
        %457 = vmatprep.mubr.f32.mxu0 %v360
        %458 = vmatmul.mubr.f32.gmra.mrb[0].mxu0 %v359
        %v459 = vpop.f32.mrb[0].mxu0
        %v460 = vadd.f32 0.0, %v459
        %v461 = vpop.f32.mrb[0].mxu0
        %462 = vdwg.mxu0
        %vm463 = vcmask 80896
        %464 = vst.msk [vmem:[%s330] sm:$0xff] %vm463, %v460
        %v465 = vld [vmem:[%s2] sm:$0xff]
        %v466 = vld [vmem:[%s2 + $0x8] sm:$0x3]
        %v468 = vsel %vm463, %v460, 0
        %vm470 = vcmask 1041408
        %v472 = vsel %vm470, %v466, 0
        %474 = vmatprep.subr.mxu0 0.0
        %475 = vmatpush1.msra.mxu0 %v465
        %476 = vmatprep.subr.mxu0 0.0
        %477 = vmatpush1.msra.mxu0 %v472
        %478 = vmatprep.subr.mxu0 0.0
        %479 = vmatpush1.msra.mxu0 0.0
        %480 = vmatprep.subr.mxu0 0.0
        %481 = vmatpush1.msra.mxu0 0.0
        %482 = vmatprep.subr.mxu0 0.0
        %483 = vmatpush1.msra.mxu0 0.0
        %484 = vmatprep.subr.mxu0 0.0
        %485 = vmatpush1.msra.mxu0 0.0
        %486 = vmatprep.subr.mxu0 0.0
        %487 = vmatpush1.msra.mxu0 0.0
        %488 = vmatprep.subr.mxu0 0.0
        %489 = vmatpush1.msra.mxu0 0.0
        %490 = vmatprep.subr.mxu0 0.0
        %491 = vmatpush1.msra.mxu0 0.0
        %492 = vmatprep.subr.mxu0 0.0
        %493 = vmatpush1.msra.mxu0 0.0
        %494 = vmatprep.subr.mxu0 0.0
        %495 = vmatpush1.msra.mxu0 0.0
        %496 = vmatprep.subr.mxu0 0.0
        %497 = vmatpush1.msra.mxu0 0.0
        %498 = vmatprep.subr.mxu0 0.0
        %499 = vmatpush1.msra.mxu0 0.0
        %500 = vmatprep.subr.mxu0 0.0
        %501 = vmatpush1.msra.mxu0 0.0
        %502 = vmatprep.subr.mxu0 0.0
        %503 = vmatpush1.msra.mxu0 0.0
        %504 = vmatprep.subr.mxu0 0.0
        %505 = vmatpush1.msra.mxu0 0.0
        %506 = vmatprep.subr.mxu0 0.0
        %507 = vmatpush1.msra.mxu0 0.0
        %508 = vmatprep.subr.mxu0 0.0
        %509 = vmatpush1.msra.mxu0 0.0
        %510 = vmatprep.subr.mxu0 0.0
        %511 = vmatpush1.msra.mxu0 0.0
        %512 = vmatprep.subr.mxu0 0.0
        %513 = vmatpush1.msra.mxu0 0.0
        %514 = vmatprep.subr.mxu0 0.0
        %515 = vmatpush1.msra.mxu0 0.0
        %516 = vmatprep.subr.mxu0 0.0
        %517 = vmatpush1.msra.mxu0 0.0
        %518 = vmatprep.subr.mxu0 0.0
        %519 = vmatpush1.msra.mxu0 0.0
        %520 = vmatprep.subr.mxu0 0.0
        %521 = vmatpush1.msra.mxu0 0.0
        %522 = vmatprep.subr.mxu0 0.0
        %523 = vmatpush1.msra.mxu0 0.0
        %524 = vmatprep.subr.mxu0 0.0
        %525 = vmatpush1.msra.mxu0 0.0
        %526 = vmatprep.subr.mxu0 0.0
        %527 = vmatpush1.msra.mxu0 0.0
        %528 = vmatprep.subr.mxu0 0.0
        %529 = vmatpush1.msra.mxu0 0.0
        %530 = vmatprep.subr.mxu0 0.0
        %531 = vmatpush1.msra.mxu0 0.0
        %532 = vmatprep.subr.mxu0 0.0
        %533 = vmatpush1.msra.mxu0 0.0
        %534 = vmatprep.subr.mxu0 0.0
        %535 = vmatpush1.msra.mxu0 0.0
        %536 = vmatprep.subr.mxu0 0.0
        %537 = vmatpush1.msra.mxu0 0.0
        %538 = vmatprep.mubr.f32.mxu0 0.0
        %539 = vmatmul.mubr.f32.gmra.mrb[0].mxu0 %v468
        %v540 = vpop.f32.mrb[0].mxu0
        %v541 = vadd.f32 0.0, %v540
        %v542 = vpop.f32.mrb[0].mxu0
        %543 = vdwg.mxu0
        %v544 = vld [vmem:[%s3] sm:$0x1]
        %v546 = vlaneseq
        %v547 = vshrl.u32 %v546, 7
        %v548 = vsub.s32 0, %v547
        %v549 = vrot.slane %v544, %v548
        %v551 = vmul.f32 %v541, %v549
        %v552 = vmax.f32 %v551, 0.0
        %vm553 = vcmp.ne.f32.partialorder %v551, %v551
        %v554 = vadd.f32 %v551, 0.0
        %v555 = vand.u32 2147483647, %v551
        %v556 = vsub.f32 0.0, %v555
        %v557 = vmul.f32 %v556, 1.442695
        %v558 = vpow.pop %v557
        %v559 = vadd.f32 %v558, 1.0
        %v560 = vlog2.pop %v559
        %v561 = vmul.f32 %v560, 0.6931472
        %v562 = vmul.f32 -0.5, %v558
        %v563 = vadd.f32 %v562, 1.0
        %v564 = vmul.f32 %v563, %v558
        %v565 = vand.u32 2147483647, %v558
        %vm566 = vcmp.lt.f32.partialorder %v565, 0.0004427343
        %v567 = vsel %vm566, %v564, %v561
        %v568 = vadd.f32 %v552, %v567
        %v569 = vsel %vm553, %v554, %v568
        %v570 = vld [vmem:[%s358] sm:$0xff]
        %vm571 = vcmp.eq.s32.totalorder %v570, 0
        %v572 = vsel %vm571, 1, 0
        %573 = vset.pattern.permute.xlu0 0
        %574 = vperm.xlu0 %573, %v572
        %v575 = vpop.permute.xlu0 %574
        %vm576 = vcmp.eq.s32.totalorder %v575, 1
        %v577 = vsel %vm576, 0.0, %v569
        %v578 = vadd.f32 %v577, 1e-08
        %vm579 = vcmask 97280
        %580 = vst.msk [vmem:[%s337] sm:$0xff] %vm579, %v578
        %v581 = vld [vmem:[%s4] sm:$0x1]
        %v583 = vlaneseq
        %v584 = vshrl.u32 %v583, 7
        %v585 = vsub.s32 0, %v584
        %v586 = vrot.slane %v581, %v585
        %v588 = vmul.f32 %v578, %v586
        %589 = vst.msk [vmem:[%s344] sm:$0xff] %vm579, %v588
        %s590 = sand.u32 %s175, 1
        %s591 = scalar_lea.sflag [#allocation3], %s590
        %s592 = sand.u32 %s175, 1
        %s593 = smul.addr %s592, 8
        %s594 = scalar_lea.vmem [#allocation2], %s593
        %s595 = sand.u32 %s26, 1
        %s596 = scalar_lea.sflag [#allocation5], %s595
        %s597 = sand.u32 %s201, 1
        %s598 = smul.addr %s597, 8
        %s599 = scalar_lea.vmem [#allocation4], %s598
        %s600 = sand.u32 %s26, 1
        %s601 = scalar_lea.sflag [#allocation5], %s600
        %s602 = sand.u32 %s227, 1
        %s603 = smul.addr %s602, 8
        %s604 = scalar_lea.vmem [#allocation6], %s603
        // Predicated region
        $region45: #{metagene_autoencoder_forward.5} parent=43 // pred_check
          %p605 = pneg %p185
        $region46: #{metagene_autoencoder_forward.5} parent=43 // pred_check_branch
          %607 = sbr.rel (%p605) target = $region48
        $region47: #{metagene_autoencoder_forward.5} parent=43 // pred_region
          %s609 = ssub.s32 128, 128
          %610 = vsyncadd %s591, %s609
          %s611 = smul.addr %s26, 128
          %s612 = scalar_lea.hbm %s6, %s611
          %s614 = sshll.u32 %s594, 4
          %s615 = int_to_ptr.vmem [resolvable:$true] %s614
          %617 = dma.vmem_to_hbm [thread:$0]  %s615, 128, %s612, %s591
        $region48: #{metagene_autoencoder_forward.5} parent=43 // pred_fallthru
          _
        // Predicated region
        $region49: #{metagene_autoencoder_forward.5} parent=43 // pred_check
          %p618 = pneg %p211
        $region50: #{metagene_autoencoder_forward.5} parent=43 // pred_check_branch
          %620 = sbr.rel (%p618) target = $region52
        $region51: #{metagene_autoencoder_forward.5} parent=43 // pred_region
          %s622 = ssub.s32 128, 128
          %623 = vsyncadd %s596, %s622
          %s624 = smul.addr %s26, 128
          %s625 = scalar_lea.hbm %s7, %s624
          %s627 = sshll.u32 %s599, 4
          %s628 = int_to_ptr.vmem [resolvable:$true] %s627
          %630 = dma.vmem_to_hbm [thread:$0]  %s628, 128, %s625, %s596
        $region52: #{metagene_autoencoder_forward.5} parent=43 // pred_fallthru
          _
        // Predicated region
        $region53: #{metagene_autoencoder_forward.5} parent=43 // pred_check
          %p631 = pneg %p237
        $region54: #{metagene_autoencoder_forward.5} parent=43 // pred_check_branch
          %633 = sbr.rel (%p631) target = $region56
        $region55: #{metagene_autoencoder_forward.5} parent=43 // pred_region
          %s635 = ssub.s32 128, 128
          %636 = vsyncadd %s601, %s635
          %s637 = smul.addr %s26, 128
          %s638 = scalar_lea.hbm %s8, %s637
          %s640 = sshll.u32 %s604, 4
          %s641 = int_to_ptr.vmem [resolvable:$true] %s640
          %643 = dma.vmem_to_hbm [thread:$0]  %s641, 128, %s638, %s601
        $region56: #{metagene_autoencoder_forward.5} parent=43 // pred_fallthru
          _
      $region44: #{metagene_autoencoder_forward.5} parent=5 // pred_fallthru
        _
      %p644 = scmp.le.s32.totalorder 2, %s21
      // Predicated region
      $region57: #{metagene_autoencoder_forward.5} parent=5 // pred_check
        %p645 = pneg %p644
      $region58: #{metagene_autoencoder_forward.5} parent=5 // pred_check_branch
        %647 = sbr.rel (%p645) target = $region60
      $region59: #{metagene_autoencoder_forward.5} parent=5 // pred_region
        %s648 = ssub.s32 %s21, 2
        // Predicated region
        $region61: #{metagene_autoencoder_forward.5} parent=59 // pred_check
          %p649 = pneg %p191
        $region62: #{metagene_autoencoder_forward.5} parent=59 // pred_check_branch
          %651 = sbr.rel (%p649) target = $region64
        $region63: #{metagene_autoencoder_forward.5} parent=59 // pred_region
          %s652 = sand.u32 %s176, 1
          %s653 = scalar_lea.sflag [#allocation3], %s652
          %s654 = sand.u32 %s176, 1
          %s655 = smul.addr %s654, 8
          %s656 = scalar_lea.vmem [#allocation2], %s655
          %657 = dma.done %s653, 128
        $region64: #{metagene_autoencoder_forward.5} parent=59 // pred_fallthru
          _
        // Predicated region
        $region65: #{metagene_autoencoder_forward.5} parent=59 // pred_check
          %p658 = pneg %p217
        $region66: #{metagene_autoencoder_forward.5} parent=59 // pred_check_branch
          %660 = sbr.rel (%p658) target = $region68
        $region67: #{metagene_autoencoder_forward.5} parent=59 // pred_region
          %s661 = sand.u32 %s27, 1
          %s662 = scalar_lea.sflag [#allocation5], %s661
          %s663 = sand.u32 %s202, 1
          %s664 = smul.addr %s663, 8
          %s665 = scalar_lea.vmem [#allocation4], %s664
          %666 = dma.done %s662, 128
        $region68: #{metagene_autoencoder_forward.5} parent=59 // pred_fallthru
          _
        // Predicated region
        $region69: #{metagene_autoencoder_forward.5} parent=59 // pred_check
          %p667 = pneg %p243
        $region70: #{metagene_autoencoder_forward.5} parent=59 // pred_check_branch
          %669 = sbr.rel (%p667) target = $region72
        $region71: #{metagene_autoencoder_forward.5} parent=59 // pred_region
          %s670 = sand.u32 %s27, 1
          %s671 = scalar_lea.sflag [#allocation5], %s670
          %s672 = sand.u32 %s228, 1
          %s673 = smul.addr %s672, 8
          %s674 = scalar_lea.vmem [#allocation6], %s673
          %675 = dma.done %s671, 128
        $region72: #{metagene_autoencoder_forward.5} parent=59 // pred_fallthru
          _
      $region60: #{metagene_autoencoder_forward.5} parent=5 // pred_fallthru
        _
    $region6: #{metagene_autoencoder_forward.5} parent=1 // loop_footer
      %s25 = sadd.s32 1, %s21
    $region7: #{metagene_autoencoder_forward.5} parent=1 // loop_footer_branch
      %20 = sbr.rel target = $region3
    $region8: #{metagene_autoencoder_forward.5} parent=1 // loop_exit
      _
    %676 = vsyncpa [#allocation3], 1
    %s677 = scalar_lea.sflag [#allocation3], 1
    %678 = vsyncpa %s677, 1
    %679 = vsyncpa [#allocation5], 1
    %s680 = scalar_lea.sflag [#allocation5], 1
    %681 = vsyncpa %s680, 1

// kernel: metagene_autoencoder_forward.3
$region0: #{metagene_autoencoder_forward.3}
  #allocation0 [shape = 'u32[]', space=smem, size = 0x4, offset = 0x4, fixed_abs, tag = 'smem constant byte address 0x4 - core index']
  #allocation1 [shape = 'u32[144,128]{1,0:T(1,128)}', space=vmem, size = 0x12000, scoped, tag = 'internal scratch']
  %s0 = inlined_call_operand.vmem [shape: f32[512,3], index: 0, kind: input, shape index: {}]
  %s1 = inlined_call_operand.vmem [shape: f32[3,128], index: 1, kind: input, shape index: {}]
  %s2 = inlined_call_operand.vmem [shape: f32[1,128], index: 2, kind: input, shape index: {}]
  %s3 = inlined_call_operand.vmem [shape: f32[128,64], index: 3, kind: input, shape index: {}]
  %s4 = inlined_call_operand.vmem [shape: f32[1,64], index: 4, kind: input, shape index: {}]
  %s5 = inlined_call_operand.vmem [shape: f32[512,64], index: 5, kind: output, shape index: {0}]
  %s6 = inlined_call_operand.vmem [shape: f32[1,1,64], index: 6, kind: output, shape index: {1}]
  %s7 = inlined_call_operand.vmem [shape: f32[1,1,64], index: 7, kind: output, shape index: {2}]
  %8 = xla_tuple %s5, %s6, %s7
  %s9 = sld [smem:[#allocation0]]
  $region46: #{metagene_autoencoder_forward.3} parent=0
    _
  %s11 = ssub.s32 1, %s9
  %s12 = scalar_select 0, %s11, %s9
  // Predicated region
  $region2: #{metagene_autoencoder_forward.3} parent=0 // pred_check
    _
  $region3: #{metagene_autoencoder_forward.3} parent=0 // pred_check_branch
    %14 = sbr.rel (0) target = $region5
  $region4: #{metagene_autoencoder_forward.3} parent=0 // pred_region
    _
  $region5: #{metagene_autoencoder_forward.3} parent=0 // pred_fallthru
    _
  // Predicated region
  $region6: #{metagene_autoencoder_forward.3} parent=0 // pred_check
    _
  $region7: #{metagene_autoencoder_forward.3} parent=0 // pred_check_branch
    %16 = sbr.rel (0) target = $region9
  $region8: #{metagene_autoencoder_forward.3} parent=0 // pred_region
    _
  $region9: #{metagene_autoencoder_forward.3} parent=0 // pred_fallthru
    _
  // Predicated region
  $region10: #{metagene_autoencoder_forward.3} parent=0 // pred_check
    _
  $region11: #{metagene_autoencoder_forward.3} parent=0 // pred_check_branch
    %18 = sbr.rel (0) target = $region13
  $region12: #{metagene_autoencoder_forward.3} parent=0 // pred_region
    _
  $region13: #{metagene_autoencoder_forward.3} parent=0 // pred_fallthru
    _
  // Predicated region
  $region14: #{metagene_autoencoder_forward.3} parent=0 // pred_check
    _
  $region15: #{metagene_autoencoder_forward.3} parent=0 // pred_check_branch
    %20 = sbr.rel (0) target = $region17
  $region16: #{metagene_autoencoder_forward.3} parent=0 // pred_region
    _
  $region17: #{metagene_autoencoder_forward.3} parent=0 // pred_fallthru
    _
  // Predicated region
  $region18: #{metagene_autoencoder_forward.3} parent=0 // pred_check
    _
  $region19: #{metagene_autoencoder_forward.3} parent=0 // pred_check_branch
    %22 = sbr.rel (0) target = $region21
  $region20: #{metagene_autoencoder_forward.3} parent=0 // pred_region
    _
  $region21: #{metagene_autoencoder_forward.3} parent=0 // pred_fallthru
    _
  %v23 = vld [vmem:[%s0] sm:$0xff]
  %v24 = vld [vmem:[%s0 + $0x8] sm:$0xff]
  %v25 = vld [vmem:[%s0 + $0x10] sm:$0xff]
  %v26 = vld [vmem:[%s0 + $0x18] sm:$0xff]
  %v27 = vld [vmem:[%s0 + $0x20] sm:$0xff]
  %v28 = vld [vmem:[%s0 + $0x28] sm:$0xff]
  %v29 = vld [vmem:[%s0 + $0x30] sm:$0xff]
  %v30 = vld [vmem:[%s0 + $0x38] sm:$0xff]
  %v31 = vld [vmem:[%s0 + $0x40] sm:$0xff]
  %v32 = vld [vmem:[%s0 + $0x48] sm:$0xff]
  %v33 = vld [vmem:[%s0 + $0x50] sm:$0xff]
  %v34 = vld [vmem:[%s0 + $0x58] sm:$0xff]
  %v35 = vld [vmem:[%s0 + $0x60] sm:$0xff]
  %v36 = vld [vmem:[%s0 + $0x68] sm:$0xff]
  %v37 = vld [vmem:[%s0 + $0x70] sm:$0xff]
  %v38 = vld [vmem:[%s0 + $0x78] sm:$0xff]
  %v39 = vld [vmem:[%s0 + $0x80] sm:$0xff]
  %v40 = vld [vmem:[%s0 + $0x88] sm:$0xff]
  %v41 = vld [vmem:[%s0 + $0x90] sm:$0xff]
  %v42 = vld [vmem:[%s0 + $0x98] sm:$0xff]
  %v43 = vld [vmem:[%s0 + $0xa0] sm:$0xff]
  %v44 = vld [vmem:[%s0 + $0xa8] sm:$0xff]
  %v45 = vld [vmem:[%s0 + $0xb0] sm:$0xff]
  %v46 = vld [vmem:[%s0 + $0xb8] sm:$0xff]
  %v47 = vld [vmem:[%s0 + $0xc0] sm:$0xff]
  %v48 = vld [vmem:[%s0 + $0xc8] sm:$0xff]
  %v49 = vld [vmem:[%s0 + $0xd0] sm:$0xff]
  %v50 = vld [vmem:[%s0 + $0xd8] sm:$0xff]
  %v51 = vld [vmem:[%s0 + $0xe0] sm:$0xff]
  %v52 = vld [vmem:[%s0 + $0xe8] sm:$0xff]
  %v53 = vld [vmem:[%s0 + $0xf0] sm:$0xff]
  %v54 = vld [vmem:[%s0 + $0xf8] sm:$0xff]
  %v55 = vld [vmem:[%s0 + $0x100] sm:$0xff]
  %v56 = vld [vmem:[%s0 + $0x108] sm:$0xff]
  %v57 = vld [vmem:[%s0 + $0x110] sm:$0xff]
  %v58 = vld [vmem:[%s0 + $0x118] sm:$0xff]
  %v59 = vld [vmem:[%s0 + $0x120] sm:$0xff]
  %v60 = vld [vmem:[%s0 + $0x128] sm:$0xff]
  %v61 = vld [vmem:[%s0 + $0x130] sm:$0xff]
  %v62 = vld [vmem:[%s0 + $0x138] sm:$0xff]
  %v63 = vld [vmem:[%s0 + $0x140] sm:$0xff]
  %v64 = vld [vmem:[%s0 + $0x148] sm:$0xff]
  %v65 = vld [vmem:[%s0 + $0x150] sm:$0xff]
  %v66 = vld [vmem:[%s0 + $0x158] sm:$0xff]
  %v67 = vld [vmem:[%s0 + $0x160] sm:$0xff]
  %v68 = vld [vmem:[%s0 + $0x168] sm:$0xff]
  %v69 = vld [vmem:[%s0 + $0x170] sm:$0xff]
  %v70 = vld [vmem:[%s0 + $0x178] sm:$0xff]
  %v71 = vld [vmem:[%s0 + $0x180] sm:$0xff]
  %v72 = vld [vmem:[%s0 + $0x188] sm:$0xff]
  %v73 = vld [vmem:[%s0 + $0x190] sm:$0xff]
  %v74 = vld [vmem:[%s0 + $0x198] sm:$0xff]
  %v75 = vld [vmem:[%s0 + $0x1a0] sm:$0xff]
  %v76 = vld [vmem:[%s0 + $0x1a8] sm:$0xff]
  %v77 = vld [vmem:[%s0 + $0x1b0] sm:$0xff]
  %v78 = vld [vmem:[%s0 + $0x1b8] sm:$0xff]
  %v79 = vld [vmem:[%s0 + $0x1c0] sm:$0xff]
  %v80 = vld [vmem:[%s0 + $0x1c8] sm:$0xff]
  %v81 = vld [vmem:[%s0 + $0x1d0] sm:$0xff]
  %v82 = vld [vmem:[%s0 + $0x1d8] sm:$0xff]
  %v83 = vld [vmem:[%s0 + $0x1e0] sm:$0xff]
  %v84 = vld [vmem:[%s0 + $0x1e8] sm:$0xff]
  %v85 = vld [vmem:[%s0 + $0x1f0] sm:$0xff]
  %v86 = vld [vmem:[%s0 + $0x1f8] sm:$0xff]
  %v87 = vld [vmem:[%s1] sm:$0x7]
  %v88 = vld [vmem:[%s2] sm:$0x1]
  %v90 = vlaneseq
  %v91 = vshrl.u32 %v90, 7
  %v92 = vsub.s32 0, %v91
  %v93 = vrot.slane %v88, %v92
  %vm95 = vcmask 23552
  %v97 = vsel %vm95, %v23, 0
  %v100 = vsel %vm95, %v24, 0
  %v103 = vsel %vm95, %v25, 0
  %v106 = vsel %vm95, %v26, 0
  %v109 = vsel %vm95, %v27, 0
  %v112 = vsel %vm95, %v28, 0
  %v115 = vsel %vm95, %v29, 0
  %v118 = vsel %vm95, %v30, 0
  %v121 = vsel %vm95, %v31, 0
  %v124 = vsel %vm95, %v32, 0
  %v127 = vsel %vm95, %v33, 0
  %v130 = vsel %vm95, %v34, 0
  %v133 = vsel %vm95, %v35, 0
  %v136 = vsel %vm95, %v36, 0
  %v139 = vsel %vm95, %v37, 0
  %v142 = vsel %vm95, %v38, 0
  %v145 = vsel %vm95, %v39, 0
  %v148 = vsel %vm95, %v40, 0
  %v151 = vsel %vm95, %v41, 0
  %v154 = vsel %vm95, %v42, 0
  %v157 = vsel %vm95, %v43, 0
  %v160 = vsel %vm95, %v44, 0
  %v163 = vsel %vm95, %v45, 0
  %v166 = vsel %vm95, %v46, 0
  %v169 = vsel %vm95, %v47, 0
  %v172 = vsel %vm95, %v48, 0
  %v175 = vsel %vm95, %v49, 0
  %v178 = vsel %vm95, %v50, 0
  %v181 = vsel %vm95, %v51, 0
  %v184 = vsel %vm95, %v52, 0
  %v187 = vsel %vm95, %v53, 0
  %v190 = vsel %vm95, %v54, 0
  %v193 = vsel %vm95, %v55, 0
  %v196 = vsel %vm95, %v56, 0
  %v199 = vsel %vm95, %v57, 0
  %v202 = vsel %vm95, %v58, 0
  %v205 = vsel %vm95, %v59, 0
  %v208 = vsel %vm95, %v60, 0
  %v211 = vsel %vm95, %v61, 0
  %v214 = vsel %vm95, %v62, 0
  %v217 = vsel %vm95, %v63, 0
  %v220 = vsel %vm95, %v64, 0
  %v223 = vsel %vm95, %v65, 0
  %v226 = vsel %vm95, %v66, 0
  %v229 = vsel %vm95, %v67, 0
  %v232 = vsel %vm95, %v68, 0
  %v235 = vsel %vm95, %v69, 0
  %v238 = vsel %vm95, %v70, 0
  %v241 = vsel %vm95, %v71, 0
  %v244 = vsel %vm95, %v72, 0
  %v247 = vsel %vm95, %v73, 0
  %v250 = vsel %vm95, %v74, 0
  %v253 = vsel %vm95, %v75, 0
  %v256 = vsel %vm95, %v76, 0
  %v259 = vsel %vm95, %v77, 0
  %v262 = vsel %vm95, %v78, 0
  %v265 = vsel %vm95, %v79, 0
  %v268 = vsel %vm95, %v80, 0
  %v271 = vsel %vm95, %v81, 0
  %v274 = vsel %vm95, %v82, 0
  %v277 = vsel %vm95, %v83, 0
  %v280 = vsel %vm95, %v84, 0
  %v283 = vsel %vm95, %v85, 0
  %v286 = vsel %vm95, %v86, 0
  %vm288 = vcmask 1042432
  %v290 = vsel %vm288, %v87, 0
  %292 = vmatprep.subr.mxu0 0.0
  %293 = vmatpush1.msra.mxu0 %v290
  %294 = vmatprep.subr.mxu0 0.0
  %295 = vmatpush1.msra.mxu0 0.0
  %296 = vmatprep.subr.mxu0 0.0
  %297 = vmatpush1.msra.mxu0 0.0
  %298 = vmatprep.subr.mxu0 0.0
  %299 = vmatpush1.msra.mxu0 0.0
  %300 = vmatprep.subr.mxu0 0.0
  %301 = vmatpush1.msra.mxu0 0.0
  %302 = vmatprep.subr.mxu0 0.0
  %303 = vmatpush1.msra.mxu0 0.0
  %304 = vmatprep.subr.mxu0 0.0
  %305 = vmatpush1.msra.mxu0 0.0
  %306 = vmatprep.subr.mxu0 0.0
  %307 = vmatpush1.msra.mxu0 0.0
  %308 = vmatprep.subr.mxu0 0.0
  %309 = vmatpush1.msra.mxu0 0.0
  %310 = vmatprep.subr.mxu0 0.0
  %311 = vmatpush1.msra.mxu0 0.0
  %312 = vmatprep.subr.mxu0 0.0
  %313 = vmatpush1.msra.mxu0 0.0
  %314 = vmatprep.subr.mxu0 0.0
  %315 = vmatpush1.msra.mxu0 0.0
  %316 = vmatprep.subr.mxu0 0.0
  %317 = vmatpush1.msra.mxu0 0.0
  %318 = vmatprep.subr.mxu0 0.0
  %319 = vmatpush1.msra.mxu0 0.0
  %320 = vmatprep.subr.mxu0 0.0
  %321 = vmatpush1.msra.mxu0 0.0
  %322 = vmatprep.subr.mxu0 0.0
  %323 = vmatpush1.msra.mxu0 0.0
  %324 = vmatprep.subr.mxu0 0.0
  %325 = vmatpush1.msra.mxu0 0.0
  %326 = vmatprep.subr.mxu0 0.0
  %327 = vmatpush1.msra.mxu0 0.0
  %328 = vmatprep.subr.mxu0 0.0
  %329 = vmatpush1.msra.mxu0 0.0
  %330 = vmatprep.subr.mxu0 0.0
  %331 = vmatpush1.msra.mxu0 0.0
  %332 = vmatprep.subr.mxu0 0.0
  %333 = vmatpush1.msra.mxu0 0.0
  %334 = vmatprep.subr.mxu0 0.0
  %335 = vmatpush1.msra.mxu0 0.0
  %336 = vmatprep.subr.mxu0 0.0
  %337 = vmatpush1.msra.mxu0 0.0
  %338 = vmatprep.subr.mxu0 0.0
  %339 = vmatpush1.msra.mxu0 0.0
  %340 = vmatprep.subr.mxu0 0.0
  %341 = vmatpush1.msra.mxu0 0.0
  %342 = vmatprep.subr.mxu0 0.0
  %343 = vmatpush1.msra.mxu0 0.0
  %344 = vmatprep.subr.mxu0 0.0
  %345 = vmatpush1.msra.mxu0 0.0
  %346 = vmatprep.subr.mxu0 0.0
  %347 = vmatpush1.msra.mxu0 0.0
  %348 = vmatprep.subr.mxu0 0.0
  %349 = vmatpush1.msra.mxu0 0.0
  %350 = vmatprep.subr.mxu0 0.0
  %351 = vmatpush1.msra.mxu0 0.0
  %352 = vmatprep.subr.mxu0 0.0
  %353 = vmatpush1.msra.mxu0 0.0
  %354 = vmatprep.subr.mxu0 0.0
  %355 = vmatpush1.msra.mxu0 0.0
  %356 = vmatprep.mubr.f32.mxu0 0.0
  %357 = vmatmul.mubr.f32.gmra.mrb[0].mxu0 %v97
  %v358 = vpop.f32.mrb[0].mxu0
  %v359 = vadd.f32 %v93, %v358
  %v360 = vpop.f32.mrb[0].mxu0
  %361 = vmatprep.mubr.f32.mxu0 0.0
  %362 = vmatmul.mubr.f32.gmra.mrb[0].mxu0 %v100
  %v363 = vpop.f32.mrb[0].mxu0
  %v364 = vadd.f32 %v93, %v363
  %v365 = vpop.f32.mrb[0].mxu0
  %366 = vmatprep.mubr.f32.mxu0 0.0
  %367 = vmatmul.mubr.f32.gmra.mrb[0].mxu0 %v103
  %v368 = vpop.f32.mrb[0].mxu0
  %v369 = vadd.f32 %v93, %v368
  %v370 = vpop.f32.mrb[0].mxu0
  %371 = vmatprep.mubr.f32.mxu0 0.0
  %372 = vmatmul.mubr.f32.gmra.mrb[0].mxu0 %v106
  %v373 = vpop.f32.mrb[0].mxu0
  %v374 = vadd.f32 %v93, %v373
  %v375 = vpop.f32.mrb[0].mxu0
  %376 = vmatprep.mubr.f32.mxu0 0.0
  %377 = vmatmul.mubr.f32.gmra.mrb[0].mxu0 %v109
  %v378 = vpop.f32.mrb[0].mxu0
  %v379 = vadd.f32 %v93, %v378
  %v380 = vpop.f32.mrb[0].mxu0
  %381 = vmatprep.mubr.f32.mxu0 0.0
  %382 = vmatmul.mubr.f32.gmra.mrb[0].mxu0 %v112
  %v383 = vpop.f32.mrb[0].mxu0
  %v384 = vadd.f32 %v93, %v383
  %v385 = vpop.f32.mrb[0].mxu0
  %386 = vmatprep.mubr.f32.mxu0 0.0
  %387 = vmatmul.mubr.f32.gmra.mrb[0].mxu0 %v115
  %v388 = vpop.f32.mrb[0].mxu0
  %v389 = vadd.f32 %v93, %v388
  %v390 = vpop.f32.mrb[0].mxu0
  %391 = vmatprep.mubr.f32.mxu0 0.0
  %392 = vmatmul.mubr.f32.gmra.mrb[0].mxu0 %v118
  %v393 = vpop.f32.mrb[0].mxu0
  %v394 = vadd.f32 %v93, %v393
  %v395 = vpop.f32.mrb[0].mxu0
  %396 = vmatprep.mubr.f32.mxu0 0.0
  %397 = vmatmul.mubr.f32.gmra.mrb[0].mxu0 %v121
  %v398 = vpop.f32.mrb[0].mxu0
  %v399 = vadd.f32 %v93, %v398
  %v400 = vpop.f32.mrb[0].mxu0
  %401 = vmatprep.mubr.f32.mxu0 0.0
  %402 = vmatmul.mubr.f32.gmra.mrb[0].mxu0 %v124
  %v403 = vpop.f32.mrb[0].mxu0
  %v404 = vadd.f32 %v93, %v403
  %v405 = vpop.f32.mrb[0].mxu0
  %406 = vmatprep.mubr.f32.mxu0 0.0
  %407 = vmatmul.mubr.f32.gmra.mrb[0].mxu0 %v127
  %v408 = vpop.f32.mrb[0].mxu0
  %v409 = vadd.f32 %v93, %v408
  %v410 = vpop.f32.mrb[0].mxu0
  %411 = vmatprep.mubr.f32.mxu0 0.0
  %412 = vmatmul.mubr.f32.gmra.mrb[0].mxu0 %v130
  %v413 = vpop.f32.mrb[0].mxu0
  %v414 = vadd.f32 %v93, %v413
  %v415 = vpop.f32.mrb[0].mxu0
  %416 = vmatprep.mubr.f32.mxu0 0.0
  %417 = vmatmul.mubr.f32.gmra.mrb[0].mxu0 %v133
  %v418 = vpop.f32.mrb[0].mxu0
  %v419 = vadd.f32 %v93, %v418
  %v420 = vpop.f32.mrb[0].mxu0
  %421 = vmatprep.mubr.f32.mxu0 0.0
  %422 = vmatmul.mubr.f32.gmra.mrb[0].mxu0 %v136
  %v423 = vpop.f32.mrb[0].mxu0
  %v424 = vadd.f32 %v93, %v423
  %v425 = vpop.f32.mrb[0].mxu0
  %426 = vmatprep.mubr.f32.mxu0 0.0
  %427 = vmatmul.mubr.f32.gmra.mrb[0].mxu0 %v139
  %v428 = vpop.f32.mrb[0].mxu0
  %v429 = vadd.f32 %v93, %v428
  %v430 = vpop.f32.mrb[0].mxu0
  %431 = vmatprep.mubr.f32.mxu0 0.0
  %432 = vmatmul.mubr.f32.gmra.mrb[0].mxu0 %v142
  %v433 = vpop.f32.mrb[0].mxu0
  %v434 = vadd.f32 %v93, %v433
  %v435 = vpop.f32.mrb[0].mxu0
  %436 = vmatprep.mubr.f32.mxu0 0.0
  %437 = vmatmul.mubr.f32.gmra.mrb[0].mxu0 %v145
  %v438 = vpop.f32.mrb[0].mxu0
  %v439 = vadd.f32 %v93, %v438
  %v440 = vpop.f32.mrb[0].mxu0
  %441 = vmatprep.mubr.f32.mxu0 0.0
  %442 = vmatmul.mubr.f32.gmra.mrb[0].mxu0 %v148
  %v443 = vpop.f32.mrb[0].mxu0
  %v444 = vadd.f32 %v93, %v443
  %v445 = vpop.f32.mrb[0].mxu0
  %446 = vmatprep.mubr.f32.mxu0 0.0
  %447 = vmatmul.mubr.f32.gmra.mrb[0].mxu0 %v151
  %v448 = vpop.f32.mrb[0].mxu0
  %v449 = vadd.f32 %v93, %v448
  %v450 = vpop.f32.mrb[0].mxu0
  %451 = vmatprep.mubr.f32.mxu0 0.0
  %452 = vmatmul.mubr.f32.gmra.mrb[0].mxu0 %v154
  %v453 = vpop.f32.mrb[0].mxu0
  %v454 = vadd.f32 %v93, %v453
  %v455 = vpop.f32.mrb[0].mxu0
  %456 = vmatprep.mubr.f32.mxu0 0.0
  %457 = vmatmul.mubr.f32.gmra.mrb[0].mxu0 %v157
  %v458 = vpop.f32.mrb[0].mxu0
  %v459 = vadd.f32 %v93, %v458
  %v460 = vpop.f32.mrb[0].mxu0
  %461 = vmatprep.mubr.f32.mxu0 0.0
  %462 = vmatmul.mubr.f32.gmra.mrb[0].mxu0 %v160
  %v463 = vpop.f32.mrb[0].mxu0
  %v464 = vadd.f32 %v93, %v463
  %v465 = vpop.f32.mrb[0].mxu0
  %466 = vmatprep.mubr.f32.mxu0 0.0
  %467 = vmatmul.mubr.f32.gmra.mrb[0].mxu0 %v163
  %v468 = vpop.f32.mrb[0].mxu0
  %v469 = vadd.f32 %v93, %v468
  %v470 = vpop.f32.mrb[0].mxu0
  %471 = vmatprep.mubr.f32.mxu0 0.0
  %472 = vmatmul.mubr.f32.gmra.mrb[0].mxu0 %v166
  %v473 = vpop.f32.mrb[0].mxu0
  %v474 = vadd.f32 %v93, %v473
  %v475 = vpop.f32.mrb[0].mxu0
  %476 = vmatprep.mubr.f32.mxu0 0.0
  %477 = vmatmul.mubr.f32.gmra.mrb[0].mxu0 %v169
  %v478 = vpop.f32.mrb[0].mxu0
  %v479 = vadd.f32 %v93, %v478
  %v480 = vpop.f32.mrb[0].mxu0
  %481 = vmatprep.mubr.f32.mxu0 0.0
  %482 = vmatmul.mubr.f32.gmra.mrb[0].mxu0 %v172
  %v483 = vpop.f32.mrb[0].mxu0
  %v484 = vadd.f32 %v93, %v483
  %v485 = vpop.f32.mrb[0].mxu0
  %486 = vmatprep.mubr.f32.mxu0 0.0
  %487 = vmatmul.mubr.f32.gmra.mrb[0].mxu0 %v175
  %v488 = vpop.f32.mrb[0].mxu0
  %v489 = vadd.f32 %v93, %v488
  %v490 = vpop.f32.mrb[0].mxu0
  %491 = vmatprep.mubr.f32.mxu0 0.0
  %492 = vmatmul.mubr.f32.gmra.mrb[0].mxu0 %v178
  %v493 = vpop.f32.mrb[0].mxu0
  %v494 = vadd.f32 %v93, %v493
  %v495 = vpop.f32.mrb[0].mxu0
  %496 = vmatprep.mubr.f32.mxu0 0.0
  %497 = vmatmul.mubr.f32.gmra.mrb[0].mxu0 %v181
  %v498 = vpop.f32.mrb[0].mxu0
  %v499 = vadd.f32 %v93, %v498
  %v500 = vpop.f32.mrb[0].mxu0
  %501 = vmatprep.mubr.f32.mxu0 0.0
  %502 = vmatmul.mubr.f32.gmra.mrb[0].mxu0 %v184
  %v503 = vpop.f32.mrb[0].mxu0
  %v504 = vadd.f32 %v93, %v503
  %v505 = vpop.f32.mrb[0].mxu0
  %506 = vmatprep.mubr.f32.mxu0 0.0
  %507 = vmatmul.mubr.f32.gmra.mrb[0].mxu0 %v187
  %v508 = vpop.f32.mrb[0].mxu0
  %v509 = vadd.f32 %v93, %v508
  %v510 = vpop.f32.mrb[0].mxu0
  %511 = vmatprep.mubr.f32.mxu0 0.0
  %512 = vmatmul.mubr.f32.gmra.mrb[0].mxu0 %v190
  %v513 = vpop.f32.mrb[0].mxu0
  %v514 = vadd.f32 %v93, %v513
  %v515 = vpop.f32.mrb[0].mxu0
  %516 = vmatprep.mubr.f32.mxu0 0.0
  %517 = vmatmul.mubr.f32.gmra.mrb[0].mxu0 %v193
  %v518 = vpop.f32.mrb[0].mxu0
  %v519 = vadd.f32 %v93, %v518
  %v520 = vpop.f32.mrb[0].mxu0
  %521 = vmatprep.mubr.f32.mxu0 0.0
  %522 = vmatmul.mubr.f32.gmra.mrb[0].mxu0 %v196
  %v523 = vpop.f32.mrb[0].mxu0
  %v524 = vadd.f32 %v93, %v523
  %v525 = vpop.f32.mrb[0].mxu0
  %526 = vmatprep.mubr.f32.mxu0 0.0
  %527 = vmatmul.mubr.f32.gmra.mrb[0].mxu0 %v199
  %v528 = vpop.f32.mrb[0].mxu0
  %v529 = vadd.f32 %v93, %v528
  %v530 = vpop.f32.mrb[0].mxu0
  %531 = vmatprep.mubr.f32.mxu0 0.0
  %532 = vmatmul.mubr.f32.gmra.mrb[0].mxu0 %v202
  %v533 = vpop.f32.mrb[0].mxu0
  %v534 = vadd.f32 %v93, %v533
  %v535 = vpop.f32.mrb[0].mxu0
  %536 = vmatprep.mubr.f32.mxu0 0.0
  %537 = vmatmul.mubr.f32.gmra.mrb[0].mxu0 %v205
  %v538 = vpop.f32.mrb[0].mxu0
  %v539 = vadd.f32 %v93, %v538
  %v540 = vpop.f32.mrb[0].mxu0
  %541 = vmatprep.mubr.f32.mxu0 0.0
  %542 = vmatmul.mubr.f32.gmra.mrb[0].mxu0 %v208
  %v543 = vpop.f32.mrb[0].mxu0
  %v544 = vadd.f32 %v93, %v543
  %v545 = vpop.f32.mrb[0].mxu0
  %546 = vmatprep.mubr.f32.mxu0 0.0
  %547 = vmatmul.mubr.f32.gmra.mrb[0].mxu0 %v211
  %v548 = vpop.f32.mrb[0].mxu0
  %v549 = vadd.f32 %v93, %v548
  %v550 = vpop.f32.mrb[0].mxu0
  %551 = vmatprep.mubr.f32.mxu0 0.0
  %552 = vmatmul.mubr.f32.gmra.mrb[0].mxu0 %v214
  %v553 = vpop.f32.mrb[0].mxu0
  %v554 = vadd.f32 %v93, %v553
  %v555 = vpop.f32.mrb[0].mxu0
  %556 = vmatprep.mubr.f32.mxu0 0.0
  %557 = vmatmul.mubr.f32.gmra.mrb[0].mxu0 %v217
  %v558 = vpop.f32.mrb[0].mxu0
  %v559 = vadd.f32 %v93, %v558
  %v560 = vpop.f32.mrb[0].mxu0
  %561 = vmatprep.mubr.f32.mxu0 0.0
  %562 = vmatmul.mubr.f32.gmra.mrb[0].mxu0 %v220
  %v563 = vpop.f32.mrb[0].mxu0
  %v564 = vadd.f32 %v93, %v563
  %v565 = vpop.f32.mrb[0].mxu0
  %566 = vmatprep.mubr.f32.mxu0 0.0
  %567 = vmatmul.mubr.f32.gmra.mrb[0].mxu0 %v223
  %v568 = vpop.f32.mrb[0].mxu0
  %v569 = vadd.f32 %v93, %v568
  %v570 = vpop.f32.mrb[0].mxu0
  %571 = vmatprep.mubr.f32.mxu0 0.0
  %572 = vmatmul.mubr.f32.gmra.mrb[0].mxu0 %v226
  %v573 = vpop.f32.mrb[0].mxu0
  %v574 = vadd.f32 %v93, %v573
  %v575 = vpop.f32.mrb[0].mxu0
  %576 = vmatprep.mubr.f32.mxu0 0.0
  %577 = vmatmul.mubr.f32.gmra.mrb[0].mxu0 %v229
  %v578 = vpop.f32.mrb[0].mxu0
  %v579 = vadd.f32 %v93, %v578
  %v580 = vpop.f32.mrb[0].mxu0
  %581 = vmatprep.mubr.f32.mxu0 0.0
  %582 = vmatmul.mubr.f32.gmra.mrb[0].mxu0 %v232
  %v583 = vpop.f32.mrb[0].mxu0
  %v584 = vadd.f32 %v93, %v583
  %v585 = vpop.f32.mrb[0].mxu0
  %586 = vmatprep.mubr.f32.mxu0 0.0
  %587 = vmatmul.mubr.f32.gmra.mrb[0].mxu0 %v235
  %v588 = vpop.f32.mrb[0].mxu0
  %v589 = vadd.f32 %v93, %v588
  %v590 = vpop.f32.mrb[0].mxu0
  %591 = vmatprep.mubr.f32.mxu0 0.0
  %592 = vmatmul.mubr.f32.gmra.mrb[0].mxu0 %v238
  %v593 = vpop.f32.mrb[0].mxu0
  %v594 = vadd.f32 %v93, %v593
  %v595 = vpop.f32.mrb[0].mxu0
  %596 = vmatprep.mubr.f32.mxu0 0.0
  %597 = vmatmul.mubr.f32.gmra.mrb[0].mxu0 %v241
  %v598 = vpop.f32.mrb[0].mxu0
  %v599 = vadd.f32 %v93, %v598
  %v600 = vpop.f32.mrb[0].mxu0
  %601 = vmatprep.mubr.f32.mxu0 0.0
  %602 = vmatmul.mubr.f32.gmra.mrb[0].mxu0 %v244
  %v603 = vpop.f32.mrb[0].mxu0
  %v604 = vadd.f32 %v93, %v603
  %v605 = vpop.f32.mrb[0].mxu0
  %606 = vmatprep.mubr.f32.mxu0 0.0
  %607 = vmatmul.mubr.f32.gmra.mrb[0].mxu0 %v247
  %v608 = vpop.f32.mrb[0].mxu0
  %v609 = vadd.f32 %v93, %v608
  %v610 = vpop.f32.mrb[0].mxu0
  %611 = vmatprep.mubr.f32.mxu0 0.0
  %612 = vmatmul.mubr.f32.gmra.mrb[0].mxu0 %v250
  %v613 = vpop.f32.mrb[0].mxu0
  %v614 = vadd.f32 %v93, %v613
  %v615 = vpop.f32.mrb[0].mxu0
  %616 = vmatprep.mubr.f32.mxu0 0.0
  %617 = vmatmul.mubr.f32.gmra.mrb[0].mxu0 %v253
  %v618 = vpop.f32.mrb[0].mxu0
  %v619 = vadd.f32 %v93, %v618
  %v620 = vpop.f32.mrb[0].mxu0
  %621 = vmatprep.mubr.f32.mxu0 0.0
  %622 = vmatmul.mubr.f32.gmra.mrb[0].mxu0 %v256
  %v623 = vpop.f32.mrb[0].mxu0
  %v624 = vadd.f32 %v93, %v623
  %v625 = vpop.f32.mrb[0].mxu0
  %626 = vmatprep.mubr.f32.mxu0 0.0
  %627 = vmatmul.mubr.f32.gmra.mrb[0].mxu0 %v259
  %v628 = vpop.f32.mrb[0].mxu0
  %v629 = vadd.f32 %v93, %v628
  %v630 = vpop.f32.mrb[0].mxu0
  %631 = vmatprep.mubr.f32.mxu0 0.0
  %632 = vmatmul.mubr.f32.gmra.mrb[0].mxu0 %v262
  %v633 = vpop.f32.mrb[0].mxu0
  %v634 = vadd.f32 %v93, %v633
  %v635 = vpop.f32.mrb[0].mxu0
  %636 = vmatprep.mubr.f32.mxu0 0.0
  %637 = vmatmul.mubr.f32.gmra.mrb[0].mxu0 %v265
  %v638 = vpop.f32.mrb[0].mxu0
  %v639 = vadd.f32 %v93, %v638
  %v640 = vpop.f32.mrb[0].mxu0
  %641 = vmatprep.mubr.f32.mxu0 0.0
  %642 = vmatmul.mubr.f32.gmra.mrb[0].mxu0 %v268
  %v643 = vpop.f32.mrb[0].mxu0
  %v644 = vadd.f32 %v93, %v643
  %v645 = vpop.f32.mrb[0].mxu0
  %646 = vmatprep.mubr.f32.mxu0 0.0
  %647 = vmatmul.mubr.f32.gmra.mrb[0].mxu0 %v271
  %v648 = vpop.f32.mrb[0].mxu0
  %v649 = vadd.f32 %v93, %v648
  %v650 = vpop.f32.mrb[0].mxu0
  %651 = vmatprep.mubr.f32.mxu0 0.0
  %652 = vmatmul.mubr.f32.gmra.mrb[0].mxu0 %v274
  %v653 = vpop.f32.mrb[0].mxu0
  %v654 = vadd.f32 %v93, %v653
  %v655 = vpop.f32.mrb[0].mxu0
  %656 = vmatprep.mubr.f32.mxu0 0.0
  %657 = vmatmul.mubr.f32.gmra.mrb[0].mxu0 %v277
  %v658 = vpop.f32.mrb[0].mxu0
  %v659 = vadd.f32 %v93, %v658
  %v660 = vpop.f32.mrb[0].mxu0
  %661 = vmatprep.mubr.f32.mxu0 0.0
  %662 = vmatmul.mubr.f32.gmra.mrb[0].mxu0 %v280
  %v663 = vpop.f32.mrb[0].mxu0
  %v664 = vadd.f32 %v93, %v663
  %v665 = vpop.f32.mrb[0].mxu0
  %666 = vmatprep.mubr.f32.mxu0 0.0
  %667 = vmatmul.mubr.f32.gmra.mrb[0].mxu0 %v283
  %v668 = vpop.f32.mrb[0].mxu0
  %v669 = vadd.f32 %v93, %v668
  %v670 = vpop.f32.mrb[0].mxu0
  %671 = vmatprep.mubr.f32.mxu0 0.0
  %672 = vmatmul.mubr.f32.gmra.mrb[0].mxu0 %v286
  %v673 = vpop.f32.mrb[0].mxu0
  %v674 = vadd.f32 %v93, %v673
  %v675 = vpop.f32.mrb[0].mxu0
  %676 = vdwg.mxu0
  %v677 = vld [vmem:[%s3] sm:$0xff]
  %v678 = vld [vmem:[%s3 + $0x8] sm:$0xff]
  %v679 = vld [vmem:[%s3 + $0x10] sm:$0xff]
  %v680 = vld [vmem:[%s3 + $0x18] sm:$0xff]
  %v681 = vld [vmem:[%s3 + $0x20] sm:$0xff]
  %v682 = vld [vmem:[%s3 + $0x28] sm:$0xff]
  %v683 = vld [vmem:[%s3 + $0x30] sm:$0xff]
  %v684 = vld [vmem:[%s3 + $0x38] sm:$0xff]
  %v685 = vld [vmem:[%s3 + $0x40] sm:$0xff]
  %v686 = vld [vmem:[%s3 + $0x48] sm:$0xff]
  %v687 = vld [vmem:[%s3 + $0x50] sm:$0xff]
  %v688 = vld [vmem:[%s3 + $0x58] sm:$0xff]
  %v689 = vld [vmem:[%s3 + $0x60] sm:$0xff]
  %v690 = vld [vmem:[%s3 + $0x68] sm:$0xff]
  %v691 = vld [vmem:[%s3 + $0x70] sm:$0xff]
  %v692 = vld [vmem:[%s3 + $0x78] sm:$0xff]
  %v693 = vld [vmem:[%s4] sm:$0x1]
  %v695 = vlaneseq
  %v696 = vshrl.u32 %v695, 7
  %v697 = vsub.s32 0, %v696
  %v698 = vrot.slane %v693, %v697
  %700 = vmatprep.subr.mxu0 0.0
  %701 = vmatpush1.msra.mxu0 %v677
  %702 = vmatprep.subr.mxu0 0.0
  %703 = vmatpush1.msra.mxu0 %v678
  %704 = vmatprep.subr.mxu0 0.0
  %705 = vmatpush1.msra.mxu0 %v679
  %706 = vmatprep.subr.mxu0 0.0
  %707 = vmatpush1.msra.mxu0 %v680
  %708 = vmatprep.subr.mxu0 0.0
  %709 = vmatpush1.msra.mxu0 %v681
  %710 = vmatprep.subr.mxu0 0.0
  %711 = vmatpush1.msra.mxu0 %v682
  %712 = vmatprep.subr.mxu0 0.0
  %713 = vmatpush1.msra.mxu0 %v683
  %714 = vmatprep.subr.mxu0 0.0
  %715 = vmatpush1.msra.mxu0 %v684
  %716 = vmatprep.subr.mxu0 0.0
  %717 = vmatpush1.msra.mxu0 %v685
  %718 = vmatprep.subr.mxu0 0.0
  %719 = vmatpush1.msra.mxu0 %v686
  %720 = vmatprep.subr.mxu0 0.0
  %721 = vmatpush1.msra.mxu0 %v687
  %722 = vmatprep.subr.mxu0 0.0
  %723 = vmatpush1.msra.mxu0 %v688
  %724 = vmatprep.subr.mxu0 0.0
  %725 = vmatpush1.msra.mxu0 %v689
  %726 = vmatprep.subr.mxu0 0.0
  %727 = vmatpush1.msra.mxu0 %v690
  %728 = vmatprep.subr.mxu0 0.0
  %729 = vmatpush1.msra.mxu0 %v691
  %730 = vmatprep.subr.mxu0 0.0
  %731 = vmatpush1.msra.mxu0 %v692
  %732 = vmatprep.subr.mxu0 0.0
  %733 = vmatpush1.msra.mxu0 0.0
  %734 = vmatprep.subr.mxu0 0.0
  %735 = vmatpush1.msra.mxu0 0.0
  %736 = vmatprep.subr.mxu0 0.0
  %737 = vmatpush1.msra.mxu0 0.0
  %738 = vmatprep.subr.mxu0 0.0
  %739 = vmatpush1.msra.mxu0 0.0
  %740 = vmatprep.subr.mxu0 0.0
  %741 = vmatpush1.msra.mxu0 0.0
  %742 = vmatprep.subr.mxu0 0.0
  %743 = vmatpush1.msra.mxu0 0.0
  %744 = vmatprep.subr.mxu0 0.0
  %745 = vmatpush1.msra.mxu0 0.0
  %746 = vmatprep.subr.mxu0 0.0
  %747 = vmatpush1.msra.mxu0 0.0
  %748 = vmatprep.subr.mxu0 0.0
  %749 = vmatpush1.msra.mxu0 0.0
  %750 = vmatprep.subr.mxu0 0.0
  %751 = vmatpush1.msra.mxu0 0.0
  %752 = vmatprep.subr.mxu0 0.0
  %753 = vmatpush1.msra.mxu0 0.0
  %754 = vmatprep.subr.mxu0 0.0
  %755 = vmatpush1.msra.mxu0 0.0
  %756 = vmatprep.subr.mxu0 0.0
  %757 = vmatpush1.msra.mxu0 0.0
  %758 = vmatprep.subr.mxu0 0.0
  %759 = vmatpush1.msra.mxu0 0.0
  %760 = vmatprep.subr.mxu0 0.0
  %761 = vmatpush1.msra.mxu0 0.0
  %762 = vmatprep.subr.mxu0 0.0
  %763 = vmatpush1.msra.mxu0 0.0
  %764 = vmatprep.mubr.f32.mxu0 0.0
  %765 = vmatmul.mubr.f32.gmra.mrb[0].mxu0 %v359
  %v766 = vpop.f32.mrb[0].mxu0
  %v767 = vadd.f32 %v698, %v766
  %v768 = vpop.f32.mrb[0].mxu0
  %769 = vmatprep.mubr.f32.mxu0 0.0
  %770 = vmatmul.mubr.f32.gmra.mrb[0].mxu0 %v364
  %v771 = vpop.f32.mrb[0].mxu0
  %v772 = vadd.f32 %v698, %v771
  %v773 = vpop.f32.mrb[0].mxu0
  %774 = vmatprep.mubr.f32.mxu0 0.0
  %775 = vmatmul.mubr.f32.gmra.mrb[0].mxu0 %v369
  %v776 = vpop.f32.mrb[0].mxu0
  %v777 = vadd.f32 %v698, %v776
  %v778 = vpop.f32.mrb[0].mxu0
  %779 = vmatprep.mubr.f32.mxu0 0.0
  %780 = vmatmul.mubr.f32.gmra.mrb[0].mxu0 %v374
  %v781 = vpop.f32.mrb[0].mxu0
  %v782 = vadd.f32 %v698, %v781
  %v783 = vpop.f32.mrb[0].mxu0
  %784 = vmatprep.mubr.f32.mxu0 0.0
  %785 = vmatmul.mubr.f32.gmra.mrb[0].mxu0 %v379
  %v786 = vpop.f32.mrb[0].mxu0
  %v787 = vadd.f32 %v698, %v786
  %v788 = vpop.f32.mrb[0].mxu0
  %789 = vmatprep.mubr.f32.mxu0 0.0
  %790 = vmatmul.mubr.f32.gmra.mrb[0].mxu0 %v384
  %v791 = vpop.f32.mrb[0].mxu0
  %v792 = vadd.f32 %v698, %v791
  %v793 = vpop.f32.mrb[0].mxu0
  %794 = vmatprep.mubr.f32.mxu0 0.0
  %795 = vmatmul.mubr.f32.gmra.mrb[0].mxu0 %v389
  %v796 = vpop.f32.mrb[0].mxu0
  %v797 = vadd.f32 %v698, %v796
  %v798 = vpop.f32.mrb[0].mxu0
  %799 = vmatprep.mubr.f32.mxu0 0.0
  %800 = vmatmul.mubr.f32.gmra.mrb[0].mxu0 %v394
  %v801 = vpop.f32.mrb[0].mxu0
  %v802 = vadd.f32 %v698, %v801
  %v803 = vpop.f32.mrb[0].mxu0
  %804 = vmatprep.mubr.f32.mxu0 0.0
  %805 = vmatmul.mubr.f32.gmra.mrb[0].mxu0 %v399
  %v806 = vpop.f32.mrb[0].mxu0
  %v807 = vadd.f32 %v698, %v806
  %v808 = vpop.f32.mrb[0].mxu0
  %809 = vmatprep.mubr.f32.mxu0 0.0
  %810 = vmatmul.mubr.f32.gmra.mrb[0].mxu0 %v404
  %v811 = vpop.f32.mrb[0].mxu0
  %v812 = vadd.f32 %v698, %v811
  %v813 = vpop.f32.mrb[0].mxu0
  %814 = vmatprep.mubr.f32.mxu0 0.0
  %815 = vmatmul.mubr.f32.gmra.mrb[0].mxu0 %v409
  %v816 = vpop.f32.mrb[0].mxu0
  %v817 = vadd.f32 %v698, %v816
  %v818 = vpop.f32.mrb[0].mxu0
  %819 = vmatprep.mubr.f32.mxu0 0.0
  %820 = vmatmul.mubr.f32.gmra.mrb[0].mxu0 %v414
  %v821 = vpop.f32.mrb[0].mxu0
  %v822 = vadd.f32 %v698, %v821
  %v823 = vpop.f32.mrb[0].mxu0
  %824 = vmatprep.mubr.f32.mxu0 0.0
  %825 = vmatmul.mubr.f32.gmra.mrb[0].mxu0 %v419
  %v826 = vpop.f32.mrb[0].mxu0
  %v827 = vadd.f32 %v698, %v826
  %v828 = vpop.f32.mrb[0].mxu0
  %829 = vmatprep.mubr.f32.mxu0 0.0
  %830 = vmatmul.mubr.f32.gmra.mrb[0].mxu0 %v424
  %v831 = vpop.f32.mrb[0].mxu0
  %v832 = vadd.f32 %v698, %v831
  %v833 = vpop.f32.mrb[0].mxu0
  %834 = vmatprep.mubr.f32.mxu0 0.0
  %835 = vmatmul.mubr.f32.gmra.mrb[0].mxu0 %v429
  %v836 = vpop.f32.mrb[0].mxu0
  %v837 = vadd.f32 %v698, %v836
  %v838 = vpop.f32.mrb[0].mxu0
  %839 = vmatprep.mubr.f32.mxu0 0.0
  %840 = vmatmul.mubr.f32.gmra.mrb[0].mxu0 %v434
  %v841 = vpop.f32.mrb[0].mxu0
  %v842 = vadd.f32 %v698, %v841
  %v843 = vpop.f32.mrb[0].mxu0
  %844 = vmatprep.mubr.f32.mxu0 0.0
  %845 = vmatmul.mubr.f32.gmra.mrb[0].mxu0 %v439
  %v846 = vpop.f32.mrb[0].mxu0
  %v847 = vadd.f32 %v698, %v846
  %v848 = vpop.f32.mrb[0].mxu0
  %849 = vmatprep.mubr.f32.mxu0 0.0
  %850 = vmatmul.mubr.f32.gmra.mrb[0].mxu0 %v444
  %v851 = vpop.f32.mrb[0].mxu0
  %v852 = vadd.f32 %v698, %v851
  %v853 = vpop.f32.mrb[0].mxu0
  %854 = vmatprep.mubr.f32.mxu0 0.0
  %855 = vmatmul.mubr.f32.gmra.mrb[0].mxu0 %v449
  %v856 = vpop.f32.mrb[0].mxu0
  %v857 = vadd.f32 %v698, %v856
  %v858 = vpop.f32.mrb[0].mxu0
  %859 = vmatprep.mubr.f32.mxu0 0.0
  %860 = vmatmul.mubr.f32.gmra.mrb[0].mxu0 %v454
  %v861 = vpop.f32.mrb[0].mxu0
  %v862 = vadd.f32 %v698, %v861
  %v863 = vpop.f32.mrb[0].mxu0
  %864 = vmatprep.mubr.f32.mxu0 0.0
  %865 = vmatmul.mubr.f32.gmra.mrb[0].mxu0 %v459
  %v866 = vpop.f32.mrb[0].mxu0
  %v867 = vadd.f32 %v698, %v866
  %v868 = vpop.f32.mrb[0].mxu0
  %869 = vmatprep.mubr.f32.mxu0 0.0
  %870 = vmatmul.mubr.f32.gmra.mrb[0].mxu0 %v464
  %v871 = vpop.f32.mrb[0].mxu0
  %v872 = vadd.f32 %v698, %v871
  %v873 = vpop.f32.mrb[0].mxu0
  %874 = vmatprep.mubr.f32.mxu0 0.0
  %875 = vmatmul.mubr.f32.gmra.mrb[0].mxu0 %v469
  %v876 = vpop.f32.mrb[0].mxu0
  %v877 = vadd.f32 %v698, %v876
  %v878 = vpop.f32.mrb[0].mxu0
  %879 = vmatprep.mubr.f32.mxu0 0.0
  %880 = vmatmul.mubr.f32.gmra.mrb[0].mxu0 %v474
  %v881 = vpop.f32.mrb[0].mxu0
  %v882 = vadd.f32 %v698, %v881
  %v883 = vpop.f32.mrb[0].mxu0
  %884 = vmatprep.mubr.f32.mxu0 0.0
  %885 = vmatmul.mubr.f32.gmra.mrb[0].mxu0 %v479
  %v886 = vpop.f32.mrb[0].mxu0
  %v887 = vadd.f32 %v698, %v886
  %v888 = vpop.f32.mrb[0].mxu0
  %889 = vmatprep.mubr.f32.mxu0 0.0
  %890 = vmatmul.mubr.f32.gmra.mrb[0].mxu0 %v484
  %v891 = vpop.f32.mrb[0].mxu0
  %v892 = vadd.f32 %v698, %v891
  %v893 = vpop.f32.mrb[0].mxu0
  %894 = vmatprep.mubr.f32.mxu0 0.0
  %895 = vmatmul.mubr.f32.gmra.mrb[0].mxu0 %v489
  %v896 = vpop.f32.mrb[0].mxu0
  %v897 = vadd.f32 %v698, %v896
  %v898 = vpop.f32.mrb[0].mxu0
  %899 = vmatprep.mubr.f32.mxu0 0.0
  %900 = vmatmul.mubr.f32.gmra.mrb[0].mxu0 %v494
  %v901 = vpop.f32.mrb[0].mxu0
  %v902 = vadd.f32 %v698, %v901
  %v903 = vpop.f32.mrb[0].mxu0
  %904 = vmatprep.mubr.f32.mxu0 0.0
  %905 = vmatmul.mubr.f32.gmra.mrb[0].mxu0 %v499
  %v906 = vpop.f32.mrb[0].mxu0
  %v907 = vadd.f32 %v698, %v906
  %v908 = vpop.f32.mrb[0].mxu0
  %909 = vmatprep.mubr.f32.mxu0 0.0
  %910 = vmatmul.mubr.f32.gmra.mrb[0].mxu0 %v504
  %v911 = vpop.f32.mrb[0].mxu0
  %v912 = vadd.f32 %v698, %v911
  %v913 = vpop.f32.mrb[0].mxu0
  %914 = vmatprep.mubr.f32.mxu0 0.0
  %915 = vmatmul.mubr.f32.gmra.mrb[0].mxu0 %v509
  %v916 = vpop.f32.mrb[0].mxu0
  %v917 = vadd.f32 %v698, %v916
  %v918 = vpop.f32.mrb[0].mxu0
  %919 = vmatprep.mubr.f32.mxu0 0.0
  %920 = vmatmul.mubr.f32.gmra.mrb[0].mxu0 %v514
  %v921 = vpop.f32.mrb[0].mxu0
  %v922 = vadd.f32 %v698, %v921
  %v923 = vpop.f32.mrb[0].mxu0
  %924 = vmatprep.mubr.f32.mxu0 0.0
  %925 = vmatmul.mubr.f32.gmra.mrb[0].mxu0 %v519
  %v926 = vpop.f32.mrb[0].mxu0
  %v927 = vadd.f32 %v698, %v926
  %v928 = vpop.f32.mrb[0].mxu0
  %929 = vmatprep.mubr.f32.mxu0 0.0
  %930 = vmatmul.mubr.f32.gmra.mrb[0].mxu0 %v524
  %v931 = vpop.f32.mrb[0].mxu0
  %v932 = vadd.f32 %v698, %v931
  %v933 = vpop.f32.mrb[0].mxu0
  %934 = vmatprep.mubr.f32.mxu0 0.0
  %935 = vmatmul.mubr.f32.gmra.mrb[0].mxu0 %v529
  %v936 = vpop.f32.mrb[0].mxu0
  %v937 = vadd.f32 %v698, %v936
  %v938 = vpop.f32.mrb[0].mxu0
  %939 = vmatprep.mubr.f32.mxu0 0.0
  %940 = vmatmul.mubr.f32.gmra.mrb[0].mxu0 %v534
  %v941 = vpop.f32.mrb[0].mxu0
  %v942 = vadd.f32 %v698, %v941
  %v943 = vpop.f32.mrb[0].mxu0
  %944 = vmatprep.mubr.f32.mxu0 0.0
  %945 = vmatmul.mubr.f32.gmra.mrb[0].mxu0 %v539
  %v946 = vpop.f32.mrb[0].mxu0
  %v947 = vadd.f32 %v698, %v946
  %v948 = vpop.f32.mrb[0].mxu0
  %949 = vmatprep.mubr.f32.mxu0 0.0
  %950 = vmatmul.mubr.f32.gmra.mrb[0].mxu0 %v544
  %v951 = vpop.f32.mrb[0].mxu0
  %v952 = vadd.f32 %v698, %v951
  %v953 = vpop.f32.mrb[0].mxu0
  %954 = vmatprep.mubr.f32.mxu0 0.0
  %955 = vmatmul.mubr.f32.gmra.mrb[0].mxu0 %v549
  %v956 = vpop.f32.mrb[0].mxu0
  %v957 = vadd.f32 %v698, %v956
  %v958 = vpop.f32.mrb[0].mxu0
  %959 = vmatprep.mubr.f32.mxu0 0.0
  %960 = vmatmul.mubr.f32.gmra.mrb[0].mxu0 %v554
  %v961 = vpop.f32.mrb[0].mxu0
  %v962 = vadd.f32 %v698, %v961
  %v963 = vpop.f32.mrb[0].mxu0
  %964 = vmatprep.mubr.f32.mxu0 0.0
  %965 = vmatmul.mubr.f32.gmra.mrb[0].mxu0 %v559
  %v966 = vpop.f32.mrb[0].mxu0
  %v967 = vadd.f32 %v698, %v966
  %v968 = vpop.f32.mrb[0].mxu0
  %969 = vmatprep.mubr.f32.mxu0 0.0
  %970 = vmatmul.mubr.f32.gmra.mrb[0].mxu0 %v564
  %v971 = vpop.f32.mrb[0].mxu0
  %v972 = vadd.f32 %v698, %v971
  %v973 = vpop.f32.mrb[0].mxu0
  %974 = vmatprep.mubr.f32.mxu0 0.0
  %975 = vmatmul.mubr.f32.gmra.mrb[0].mxu0 %v569
  %v976 = vpop.f32.mrb[0].mxu0
  %v977 = vadd.f32 %v698, %v976
  %v978 = vpop.f32.mrb[0].mxu0
  %979 = vmatprep.mubr.f32.mxu0 0.0
  %980 = vmatmul.mubr.f32.gmra.mrb[0].mxu0 %v574
  %v981 = vpop.f32.mrb[0].mxu0
  %v982 = vadd.f32 %v698, %v981
  %v983 = vpop.f32.mrb[0].mxu0
  %984 = vmatprep.mubr.f32.mxu0 0.0
  %985 = vmatmul.mubr.f32.gmra.mrb[0].mxu0 %v579
  %v986 = vpop.f32.mrb[0].mxu0
  %v987 = vadd.f32 %v698, %v986
  %v988 = vpop.f32.mrb[0].mxu0
  %989 = vmatprep.mubr.f32.mxu0 0.0
  %990 = vmatmul.mubr.f32.gmra.mrb[0].mxu0 %v584
  %v991 = vpop.f32.mrb[0].mxu0
  %v992 = vadd.f32 %v698, %v991
  %v993 = vpop.f32.mrb[0].mxu0
  %994 = vmatprep.mubr.f32.mxu0 0.0
  %995 = vmatmul.mubr.f32.gmra.mrb[0].mxu0 %v589
  %v996 = vpop.f32.mrb[0].mxu0
  %v997 = vadd.f32 %v698, %v996
  %v998 = vpop.f32.mrb[0].mxu0
  %999 = vmatprep.mubr.f32.mxu0 0.0
  %1000 = vmatmul.mubr.f32.gmra.mrb[0].mxu0 %v594
  %v1001 = vpop.f32.mrb[0].mxu0
  %v1002 = vadd.f32 %v698, %v1001
  %v1003 = vpop.f32.mrb[0].mxu0
  %1004 = vmatprep.mubr.f32.mxu0 0.0
  %1005 = vmatmul.mubr.f32.gmra.mrb[0].mxu0 %v599
  %v1006 = vpop.f32.mrb[0].mxu0
  %v1007 = vadd.f32 %v698, %v1006
  %v1008 = vpop.f32.mrb[0].mxu0
  %1009 = vmatprep.mubr.f32.mxu0 0.0
  %1010 = vmatmul.mubr.f32.gmra.mrb[0].mxu0 %v604
  %v1011 = vpop.f32.mrb[0].mxu0
  %v1012 = vadd.f32 %v698, %v1011
  %v1013 = vpop.f32.mrb[0].mxu0
  %1014 = vmatprep.mubr.f32.mxu0 0.0
  %1015 = vmatmul.mubr.f32.gmra.mrb[0].mxu0 %v609
  %v1016 = vpop.f32.mrb[0].mxu0
  %v1017 = vadd.f32 %v698, %v1016
  %v1018 = vpop.f32.mrb[0].mxu0
  %1019 = vmatprep.mubr.f32.mxu0 0.0
  %1020 = vmatmul.mubr.f32.gmra.mrb[0].mxu0 %v614
  %v1021 = vpop.f32.mrb[0].mxu0
  %v1022 = vadd.f32 %v698, %v1021
  %v1023 = vpop.f32.mrb[0].mxu0
  %1024 = vmatprep.mubr.f32.mxu0 0.0
  %1025 = vmatmul.mubr.f32.gmra.mrb[0].mxu0 %v619
  %v1026 = vpop.f32.mrb[0].mxu0
  %v1027 = vadd.f32 %v698, %v1026
  %v1028 = vpop.f32.mrb[0].mxu0
  %1029 = vmatprep.mubr.f32.mxu0 0.0
  %1030 = vmatmul.mubr.f32.gmra.mrb[0].mxu0 %v624
  %v1031 = vpop.f32.mrb[0].mxu0
  %v1032 = vadd.f32 %v698, %v1031
  %v1033 = vpop.f32.mrb[0].mxu0
  %1034 = vmatprep.mubr.f32.mxu0 0.0
  %1035 = vmatmul.mubr.f32.gmra.mrb[0].mxu0 %v629
  %v1036 = vpop.f32.mrb[0].mxu0
  %v1037 = vadd.f32 %v698, %v1036
  %v1038 = vpop.f32.mrb[0].mxu0
  %1039 = vmatprep.mubr.f32.mxu0 0.0
  %1040 = vmatmul.mubr.f32.gmra.mrb[0].mxu0 %v634
  %v1041 = vpop.f32.mrb[0].mxu0
  %v1042 = vadd.f32 %v698, %v1041
  %v1043 = vpop.f32.mrb[0].mxu0
  %1044 = vmatprep.mubr.f32.mxu0 0.0
  %1045 = vmatmul.mubr.f32.gmra.mrb[0].mxu0 %v639
  %v1046 = vpop.f32.mrb[0].mxu0
  %v1047 = vadd.f32 %v698, %v1046
  %v1048 = vpop.f32.mrb[0].mxu0
  %1049 = vmatprep.mubr.f32.mxu0 0.0
  %1050 = vmatmul.mubr.f32.gmra.mrb[0].mxu0 %v644
  %v1051 = vpop.f32.mrb[0].mxu0
  %v1052 = vadd.f32 %v698, %v1051
  %v1053 = vpop.f32.mrb[0].mxu0
  %1054 = vmatprep.mubr.f32.mxu0 0.0
  %1055 = vmatmul.mubr.f32.gmra.mrb[0].mxu0 %v649
  %v1056 = vpop.f32.mrb[0].mxu0
  %v1057 = vadd.f32 %v698, %v1056
  %v1058 = vpop.f32.mrb[0].mxu0
  %1059 = vmatprep.mubr.f32.mxu0 0.0
  %1060 = vmatmul.mubr.f32.gmra.mrb[0].mxu0 %v654
  %v1061 = vpop.f32.mrb[0].mxu0
  %v1062 = vadd.f32 %v698, %v1061
  %v1063 = vpop.f32.mrb[0].mxu0
  %1064 = vmatprep.mubr.f32.mxu0 0.0
  %1065 = vmatmul.mubr.f32.gmra.mrb[0].mxu0 %v659
  %v1066 = vpop.f32.mrb[0].mxu0
  %v1067 = vadd.f32 %v698, %v1066
  %v1068 = vpop.f32.mrb[0].mxu0
  %1069 = vmatprep.mubr.f32.mxu0 0.0
  %1070 = vmatmul.mubr.f32.gmra.mrb[0].mxu0 %v664
  %v1071 = vpop.f32.mrb[0].mxu0
  %v1072 = vadd.f32 %v698, %v1071
  %v1073 = vpop.f32.mrb[0].mxu0
  %1074 = vmatprep.mubr.f32.mxu0 0.0
  %1075 = vmatmul.mubr.f32.gmra.mrb[0].mxu0 %v669
  %v1076 = vpop.f32.mrb[0].mxu0
  %v1077 = vadd.f32 %v698, %v1076
  %v1078 = vpop.f32.mrb[0].mxu0
  %1079 = vmatprep.mubr.f32.mxu0 0.0
  %1080 = vmatmul.mubr.f32.gmra.mrb[0].mxu0 %v674
  %v1081 = vpop.f32.mrb[0].mxu0
  %v1082 = vadd.f32 %v698, %v1081
  %v1083 = vpop.f32.mrb[0].mxu0
  %1084 = vdwg.mxu0
  %vm1085 = vcmask 523264
  %1086 = vst.msk [vmem:[%s5] sm:$0xff] %vm1085, %v767
  %1087 = vst.msk [vmem:[%s5 + $0x8] sm:$0xff] %vm1085, %v772
  %1088 = vst.msk [vmem:[%s5 + $0x10] sm:$0xff] %vm1085, %v777
  %1089 = vst.msk [vmem:[%s5 + $0x18] sm:$0xff] %vm1085, %v782
  %1090 = vst.msk [vmem:[%s5 + $0x20] sm:$0xff] %vm1085, %v787
  %1091 = vst.msk [vmem:[%s5 + $0x28] sm:$0xff] %vm1085, %v792
  %1092 = vst.msk [vmem:[%s5 + $0x30] sm:$0xff] %vm1085, %v797
  %1093 = vst.msk [vmem:[%s5 + $0x38] sm:$0xff] %vm1085, %v802
  %1094 = vst.msk [vmem:[%s5 + $0x40] sm:$0xff] %vm1085, %v807
  %1095 = vst.msk [vmem:[%s5 + $0x48] sm:$0xff] %vm1085, %v812
  %1096 = vst.msk [vmem:[%s5 + $0x50] sm:$0xff] %vm1085, %v817
  %1097 = vst.msk [vmem:[%s5 + $0x58] sm:$0xff] %vm1085, %v822
  %1098 = vst.msk [vmem:[%s5 + $0x60] sm:$0xff] %vm1085, %v827
  %1099 = vst.msk [vmem:[%s5 + $0x68] sm:$0xff] %vm1085, %v832
  %1100 = vst.msk [vmem:[%s5 + $0x70] sm:$0xff] %vm1085, %v837
  %1101 = vst.msk [vmem:[%s5 + $0x78] sm:$0xff] %vm1085, %v842
  %1102 = vst.msk [vmem:[%s5 + $0x80] sm:$0xff] %vm1085, %v847
  %1103 = vst.msk [vmem:[%s5 + $0x88] sm:$0xff] %vm1085, %v852
  %1104 = vst.msk [vmem:[%s5 + $0x90] sm:$0xff] %vm1085, %v857
  %1105 = vst.msk [vmem:[%s5 + $0x98] sm:$0xff] %vm1085, %v862
  %1106 = vst.msk [vmem:[%s5 + $0xa0] sm:$0xff] %vm1085, %v867
  %1107 = vst.msk [vmem:[%s5 + $0xa8] sm:$0xff] %vm1085, %v872
  %1108 = vst.msk [vmem:[%s5 + $0xb0] sm:$0xff] %vm1085, %v877
  %1109 = vst.msk [vmem:[%s5 + $0xb8] sm:$0xff] %vm1085, %v882
  %1110 = vst.msk [vmem:[%s5 + $0xc0] sm:$0xff] %vm1085, %v887
  %1111 = vst.msk [vmem:[%s5 + $0xc8] sm:$0xff] %vm1085, %v892
  %1112 = vst.msk [vmem:[%s5 + $0xd0] sm:$0xff] %vm1085, %v897
  %1113 = vst.msk [vmem:[%s5 + $0xd8] sm:$0xff] %vm1085, %v902
  %1114 = vst.msk [vmem:[%s5 + $0xe0] sm:$0xff] %vm1085, %v907
  %1115 = vst.msk [vmem:[%s5 + $0xe8] sm:$0xff] %vm1085, %v912
  %1116 = vst.msk [vmem:[%s5 + $0xf0] sm:$0xff] %vm1085, %v917
  %1117 = vst.msk [vmem:[%s5 + $0xf8] sm:$0xff] %vm1085, %v922
  %1118 = vst.msk [vmem:[%s5 + $0x100] sm:$0xff] %vm1085, %v927
  %1119 = vst.msk [vmem:[%s5 + $0x108] sm:$0xff] %vm1085, %v932
  %1120 = vst.msk [vmem:[%s5 + $0x110] sm:$0xff] %vm1085, %v937
  %1121 = vst.msk [vmem:[%s5 + $0x118] sm:$0xff] %vm1085, %v942
  %1122 = vst.msk [vmem:[%s5 + $0x120] sm:$0xff] %vm1085, %v947
  %1123 = vst.msk [vmem:[%s5 + $0x128] sm:$0xff] %vm1085, %v952
  %1124 = vst.msk [vmem:[%s5 + $0x130] sm:$0xff] %vm1085, %v957
  %1125 = vst.msk [vmem:[%s5 + $0x138] sm:$0xff] %vm1085, %v962
  %1126 = vst.msk [vmem:[%s5 + $0x140] sm:$0xff] %vm1085, %v967
  %1127 = vst.msk [vmem:[%s5 + $0x148] sm:$0xff] %vm1085, %v972
  %1128 = vst.msk [vmem:[%s5 + $0x150] sm:$0xff] %vm1085, %v977
  %1129 = vst.msk [vmem:[%s5 + $0x158] sm:$0xff] %vm1085, %v982
  %1130 = vst.msk [vmem:[%s5 + $0x160] sm:$0xff] %vm1085, %v987
  %1131 = vst.msk [vmem:[%s5 + $0x168] sm:$0xff] %vm1085, %v992
  %1132 = vst.msk [vmem:[%s5 + $0x170] sm:$0xff] %vm1085, %v997
  %1133 = vst.msk [vmem:[%s5 + $0x178] sm:$0xff] %vm1085, %v1002
  %1134 = vst.msk [vmem:[%s5 + $0x180] sm:$0xff] %vm1085, %v1007
  %1135 = vst.msk [vmem:[%s5 + $0x188] sm:$0xff] %vm1085, %v1012
  %1136 = vst.msk [vmem:[%s5 + $0x190] sm:$0xff] %vm1085, %v1017
  %1137 = vst.msk [vmem:[%s5 + $0x198] sm:$0xff] %vm1085, %v1022
  %1138 = vst.msk [vmem:[%s5 + $0x1a0] sm:$0xff] %vm1085, %v1027
  %1139 = vst.msk [vmem:[%s5 + $0x1a8] sm:$0xff] %vm1085, %v1032
  %1140 = vst.msk [vmem:[%s5 + $0x1b0] sm:$0xff] %vm1085, %v1037
  %1141 = vst.msk [vmem:[%s5 + $0x1b8] sm:$0xff] %vm1085, %v1042
  %1142 = vst.msk [vmem:[%s5 + $0x1c0] sm:$0xff] %vm1085, %v1047
  %1143 = vst.msk [vmem:[%s5 + $0x1c8] sm:$0xff] %vm1085, %v1052
  %1144 = vst.msk [vmem:[%s5 + $0x1d0] sm:$0xff] %vm1085, %v1057
  %1145 = vst.msk [vmem:[%s5 + $0x1d8] sm:$0xff] %vm1085, %v1062
  %1146 = vst.msk [vmem:[%s5 + $0x1e0] sm:$0xff] %vm1085, %v1067
  %1147 = vst.msk [vmem:[%s5 + $0x1e8] sm:$0xff] %vm1085, %v1072
  %1148 = vst.msk [vmem:[%s5 + $0x1f0] sm:$0xff] %vm1085, %v1077
  %1149 = vst.msk [vmem:[%s5 + $0x1f8] sm:$0xff] %vm1085, %v1082
  %v1150 = vsel %vm1085, %v767, 0.0
  %v1151 = vsel %vm1085, %v772, 0.0
  %v1152 = vadd.f32 %v1150, %v1151
  %v1153 = vsel %vm1085, %v777, 0.0
  %v1154 = vadd.f32 %v1152, %v1153
  %v1155 = vsel %vm1085, %v782, 0.0
  %v1156 = vadd.f32 %v1154, %v1155
  %v1157 = vsel %vm1085, %v787, 0.0
  %v1158 = vadd.f32 %v1156, %v1157
  %v1159 = vsel %vm1085, %v792, 0.0
  %v1160 = vadd.f32 %v1158, %v1159
  %v1161 = vsel %vm1085, %v797, 0.0
  %v1162 = vadd.f32 %v1160, %v1161
  %v1163 = vsel %vm1085, %v802, 0.0
  %v1164 = vadd.f32 %v1162, %v1163
  %v1165 = vsel %vm1085, %v807, 0.0
  %v1166 = vadd.f32 %v1164, %v1165
  %v1167 = vsel %vm1085, %v812, 0.0
  %v1168 = vadd.f32 %v1166, %v1167
  %v1169 = vsel %vm1085, %v817, 0.0
  %v1170 = vadd.f32 %v1168, %v1169
  %v1171 = vsel %vm1085, %v822, 0.0
  %v1172 = vadd.f32 %v1170, %v1171
  %v1173 = vsel %vm1085, %v827, 0.0
  %v1174 = vadd.f32 %v1172, %v1173
  %v1175 = vsel %vm1085, %v832, 0.0
  %v1176 = vadd.f32 %v1174, %v1175
  %v1177 = vsel %vm1085, %v837, 0.0
  %v1178 = vadd.f32 %v1176, %v1177
  %v1179 = vsel %vm1085, %v842, 0.0
  %v1180 = vadd.f32 %v1178, %v1179
  %v1181 = vsel %vm1085, %v847, 0.0
  %v1182 = vadd.f32 %v1180, %v1181
  %v1183 = vsel %vm1085, %v852, 0.0
  %v1184 = vadd.f32 %v1182, %v1183
  %v1185 = vsel %vm1085, %v857, 0.0
  %v1186 = vadd.f32 %v1184, %v1185
  %v1187 = vsel %vm1085, %v862, 0.0
  %v1188 = vadd.f32 %v1186, %v1187
  %v1189 = vsel %vm1085, %v867, 0.0
  %v1190 = vadd.f32 %v1188, %v1189
  %v1191 = vsel %vm1085, %v872, 0.0
  %v1192 = vadd.f32 %v1190, %v1191
  %v1193 = vsel %vm1085, %v877, 0.0
  %v1194 = vadd.f32 %v1192, %v1193
  %v1195 = vsel %vm1085, %v882, 0.0
  %v1196 = vadd.f32 %v1194, %v1195
  %v1197 = vsel %vm1085, %v887, 0.0
  %v1198 = vadd.f32 %v1196, %v1197
  %v1199 = vsel %vm1085, %v892, 0.0
  %v1200 = vadd.f32 %v1198, %v1199
  %v1201 = vsel %vm1085, %v897, 0.0
  %v1202 = vadd.f32 %v1200, %v1201
  %v1203 = vsel %vm1085, %v902, 0.0
  %v1204 = vadd.f32 %v1202, %v1203
  %v1205 = vsel %vm1085, %v907, 0.0
  %v1206 = vadd.f32 %v1204, %v1205
  %v1207 = vsel %vm1085, %v912, 0.0
  %v1208 = vadd.f32 %v1206, %v1207
  %v1209 = vsel %vm1085, %v917, 0.0
  %v1210 = vadd.f32 %v1208, %v1209
  %v1211 = vsel %vm1085, %v922, 0.0
  %v1212 = vadd.f32 %v1210, %v1211
  %v1213 = vsel %vm1085, %v927, 0.0
  %v1214 = vadd.f32 %v1212, %v1213
  %v1215 = vsel %vm1085, %v932, 0.0
  %v1216 = vadd.f32 %v1214, %v1215
  %v1217 = vsel %vm1085, %v937, 0.0
  %v1218 = vadd.f32 %v1216, %v1217
  %v1219 = vsel %vm1085, %v942, 0.0
  %v1220 = vadd.f32 %v1218, %v1219
  %v1221 = vsel %vm1085, %v947, 0.0
  %v1222 = vadd.f32 %v1220, %v1221
  %v1223 = vsel %vm1085, %v952, 0.0
  %v1224 = vadd.f32 %v1222, %v1223
  %v1225 = vsel %vm1085, %v957, 0.0
  %v1226 = vadd.f32 %v1224, %v1225
  %v1227 = vsel %vm1085, %v962, 0.0
  %v1228 = vadd.f32 %v1226, %v1227
  %v1229 = vsel %vm1085, %v967, 0.0
  %v1230 = vadd.f32 %v1228, %v1229
  %v1231 = vsel %vm1085, %v972, 0.0
  %v1232 = vadd.f32 %v1230, %v1231
  %v1233 = vsel %vm1085, %v977, 0.0
  %v1234 = vadd.f32 %v1232, %v1233
  %v1235 = vsel %vm1085, %v982, 0.0
  %v1236 = vadd.f32 %v1234, %v1235
  %v1237 = vsel %vm1085, %v987, 0.0
  %v1238 = vadd.f32 %v1236, %v1237
  %v1239 = vsel %vm1085, %v992, 0.0
  %v1240 = vadd.f32 %v1238, %v1239
  %v1241 = vsel %vm1085, %v997, 0.0
  %v1242 = vadd.f32 %v1240, %v1241
  %v1243 = vsel %vm1085, %v1002, 0.0
  %v1244 = vadd.f32 %v1242, %v1243
  %v1245 = vsel %vm1085, %v1007, 0.0
  %v1246 = vadd.f32 %v1244, %v1245
  %v1247 = vsel %vm1085, %v1012, 0.0
  %v1248 = vadd.f32 %v1246, %v1247
  %v1249 = vsel %vm1085, %v1017, 0.0
  %v1250 = vadd.f32 %v1248, %v1249
  %v1251 = vsel %vm1085, %v1022, 0.0
  %v1252 = vadd.f32 %v1250, %v1251
  %v1253 = vsel %vm1085, %v1027, 0.0
  %v1254 = vadd.f32 %v1252, %v1253
  %v1255 = vsel %vm1085, %v1032, 0.0
  %v1256 = vadd.f32 %v1254, %v1255
  %v1257 = vsel %vm1085, %v1037, 0.0
  %v1258 = vadd.f32 %v1256, %v1257
  %v1259 = vsel %vm1085, %v1042, 0.0
  %v1260 = vadd.f32 %v1258, %v1259
  %v1261 = vsel %vm1085, %v1047, 0.0
  %v1262 = vadd.f32 %v1260, %v1261
  %v1263 = vsel %vm1085, %v1052, 0.0
  %v1264 = vadd.f32 %v1262, %v1263
  %v1265 = vsel %vm1085, %v1057, 0.0
  %v1266 = vadd.f32 %v1264, %v1265
  %v1267 = vsel %vm1085, %v1062, 0.0
  %v1268 = vadd.f32 %v1266, %v1267
  %v1269 = vsel %vm1085, %v1067, 0.0
  %v1270 = vadd.f32 %v1268, %v1269
  %v1271 = vsel %vm1085, %v1072, 0.0
  %v1272 = vadd.f32 %v1270, %v1271
  %v1273 = vsel %vm1085, %v1077, 0.0
  %v1274 = vadd.f32 %v1272, %v1273
  %v1275 = vsel %vm1085, %v1082, 0.0
  %v1276 = vadd.f32 %v1274, %v1275
  %v1277 = vrot.slane %v1276, 4
  %v1278 = vadd.f32 %v1276, %v1277
  %v1279 = vrot.slane %v1278, 2
  %v1280 = vadd.f32 %v1278, %v1279
  %v1281 = vrot.slane %v1280, 1
  %v1282 = vadd.f32 %v1280, %v1281
  %vm1283 = vcmask 516096
  %1284 = vst.msk [vmem:[%s6] sm:$0x1] %vm1283, %v1282
  %v1285 = vmul.f32 %v767, %v767
  %v1286 = vmul.f32 %v772, %v772
  %v1287 = vmul.f32 %v777, %v777
  %v1288 = vmul.f32 %v782, %v782
  %v1289 = vmul.f32 %v787, %v787
  %v1290 = vmul.f32 %v792, %v792
  %v1291 = vmul.f32 %v797, %v797
  %v1292 = vmul.f32 %v802, %v802
  %v1293 = vmul.f32 %v807, %v807
  %v1294 = vmul.f32 %v812, %v812
  %v1295 = vmul.f32 %v817, %v817
  %v1296 = vmul.f32 %v822, %v822
  %v1297 = vmul.f32 %v827, %v827
  %v1298 = vmul.f32 %v832, %v832
  %v1299 = vmul.f32 %v837, %v837
  %v1300 = vmul.f32 %v842, %v842
  %v1301 = vmul.f32 %v847, %v847
  %v1302 = vmul.f32 %v852, %v852
  %v1303 = vmul.f32 %v857, %v857
  %v1304 = vmul.f32 %v862, %v862
  %v1305 = vmul.f32 %v867, %v867
  %v1306 = vmul.f32 %v872, %v872
  %v1307 = vmul.f32 %v877, %v877
  %v1308 = vmul.f32 %v882, %v882
  %v1309 = vmul.f32 %v887, %v887
  %v1310 = vmul.f32 %v892, %v892
  %v1311 = vmul.f32 %v897, %v897
  %v1312 = vmul.f32 %v902, %v902
  %v1313 = vmul.f32 %v907, %v907
  %v1314 = vmul.f32 %v912, %v912
  %v1315 = vmul.f32 %v917, %v917
  %v1316 = vmul.f32 %v922, %v922
  %v1317 = vmul.f32 %v927, %v927
  %v1318 = vmul.f32 %v932, %v932
  %v1319 = vmul.f32 %v937, %v937
  %v1320 = vmul.f32 %v942, %v942
  %v1321 = vmul.f32 %v947, %v947
  %v1322 = vmul.f32 %v952, %v952
  %v1323 = vmul.f32 %v957, %v957
  %v1324 = vmul.f32 %v962, %v962
  %v1325 = vmul.f32 %v967, %v967
  %v1326 = vmul.f32 %v972, %v972
  %v1327 = vmul.f32 %v977, %v977
  %v1328 = vmul.f32 %v982, %v982
  %v1329 = vmul.f32 %v987, %v987
  %v1330 = vmul.f32 %v992, %v992
  %v1331 = vmul.f32 %v997, %v997
  %v1332 = vmul.f32 %v1002, %v1002
  %v1333 = vmul.f32 %v1007, %v1007
  %v1334 = vmul.f32 %v1012, %v1012
  %v1335 = vmul.f32 %v1017, %v1017
  %v1336 = vmul.f32 %v1022, %v1022
  %v1337 = vmul.f32 %v1027, %v1027
  %v1338 = vmul.f32 %v1032, %v1032
  %v1339 = vmul.f32 %v1037, %v1037
  %v1340 = vmul.f32 %v1042, %v1042
  %v1341 = vmul.f32 %v1047, %v1047
  %v1342 = vmul.f32 %v1052, %v1052
  %v1343 = vmul.f32 %v1057, %v1057
  %v1344 = vmul.f32 %v1062, %v1062
  %v1345 = vmul.f32 %v1067, %v1067
  %v1346 = vmul.f32 %v1072, %v1072
  %v1347 = vmul.f32 %v1077, %v1077
  %v1348 = vmul.f32 %v1082, %v1082
  %v1349 = vsel %vm1085, %v1285, 0.0
  %v1350 = vsel %vm1085, %v1286, 0.0
  %v1351 = vadd.f32 %v1349, %v1350
  %v1352 = vsel %vm1085, %v1287, 0.0
  %v1353 = vadd.f32 %v1351, %v1352
  %v1354 = vsel %vm1085, %v1288, 0.0
  %v1355 = vadd.f32 %v1353, %v1354
  %v1356 = vsel %vm1085, %v1289, 0.0
  %v1357 = vadd.f32 %v1355, %v1356
  %v1358 = vsel %vm1085, %v1290, 0.0
  %v1359 = vadd.f32 %v1357, %v1358
  %v1360 = vsel %vm1085, %v1291, 0.0
  %v1361 = vadd.f32 %v1359, %v1360
  %v1362 = vsel %vm1085, %v1292, 0.0
  %v1363 = vadd.f32 %v1361, %v1362
  %v1364 = vsel %vm1085, %v1293, 0.0
  %v1365 = vadd.f32 %v1363, %v1364
  %v1366 = vsel %vm1085, %v1294, 0.0
  %v1367 = vadd.f32 %v1365, %v1366
  %v1368 = vsel %vm1085, %v1295, 0.0
  %v1369 = vadd.f32 %v1367, %v1368
  %v1370 = vsel %vm1085, %v1296, 0.0
  %v1371 = vadd.f32 %v1369, %v1370
  %v1372 = vsel %vm1085, %v1297, 0.0
  %v1373 = vadd.f32 %v1371, %v1372
  %v1374 = vsel %vm1085, %v1298, 0.0
  %v1375 = vadd.f32 %v1373, %v1374
  %v1376 = vsel %vm1085, %v1299, 0.0
  %v1377 = vadd.f32 %v1375, %v1376
  %v1378 = vsel %vm1085, %v1300, 0.0
  %v1379 = vadd.f32 %v1377, %v1378
  %v1380 = vsel %vm1085, %v1301, 0.0
  %v1381 = vadd.f32 %v1379, %v1380
  %v1382 = vsel %vm1085, %v1302, 0.0
  %v1383 = vadd.f32 %v1381, %v1382
  %v1384 = vsel %vm1085, %v1303, 0.0
  %v1385 = vadd.f32 %v1383, %v1384
  %v1386 = vsel %vm1085, %v1304, 0.0
  %v1387 = vadd.f32 %v1385, %v1386
  %v1388 = vsel %vm1085, %v1305, 0.0
  %v1389 = vadd.f32 %v1387, %v1388
  %v1390 = vsel %vm1085, %v1306, 0.0
  %v1391 = vadd.f32 %v1389, %v1390
  %v1392 = vsel %vm1085, %v1307, 0.0
  %v1393 = vadd.f32 %v1391, %v1392
  %v1394 = vsel %vm1085, %v1308, 0.0
  %v1395 = vadd.f32 %v1393, %v1394
  %v1396 = vsel %vm1085, %v1309, 0.0
  %v1397 = vadd.f32 %v1395, %v1396
  %v1398 = vsel %vm1085, %v1310, 0.0
  %v1399 = vadd.f32 %v1397, %v1398
  %v1400 = vsel %vm1085, %v1311, 0.0
  %v1401 = vadd.f32 %v1399, %v1400
  %v1402 = vsel %vm1085, %v1312, 0.0
  %v1403 = vadd.f32 %v1401, %v1402
  %v1404 = vsel %vm1085, %v1313, 0.0
  %v1405 = vadd.f32 %v1403, %v1404
  %v1406 = vsel %vm1085, %v1314, 0.0
  %v1407 = vadd.f32 %v1405, %v1406
  %v1408 = vsel %vm1085, %v1315, 0.0
  %v1409 = vadd.f32 %v1407, %v1408
  %v1410 = vsel %vm1085, %v1316, 0.0
  %v1411 = vadd.f32 %v1409, %v1410
  %v1412 = vsel %vm1085, %v1317, 0.0
  %v1413 = vadd.f32 %v1411, %v1412
  %v1414 = vsel %vm1085, %v1318, 0.0
  %v1415 = vadd.f32 %v1413, %v1414
  %v1416 = vsel %vm1085, %v1319, 0.0
  %v1417 = vadd.f32 %v1415, %v1416
  %v1418 = vsel %vm1085, %v1320, 0.0
  %v1419 = vadd.f32 %v1417, %v1418
  %v1420 = vsel %vm1085, %v1321, 0.0
  %v1421 = vadd.f32 %v1419, %v1420
  %v1422 = vsel %vm1085, %v1322, 0.0
  %v1423 = vadd.f32 %v1421, %v1422
  %v1424 = vsel %vm1085, %v1323, 0.0
  %v1425 = vadd.f32 %v1423, %v1424
  %v1426 = vsel %vm1085, %v1324, 0.0
  %v1427 = vadd.f32 %v1425, %v1426
  %v1428 = vsel %vm1085, %v1325, 0.0
  %v1429 = vadd.f32 %v1427, %v1428
  %v1430 = vsel %vm1085, %v1326, 0.0
  %v1431 = vadd.f32 %v1429, %v1430
  %v1432 = vsel %vm1085, %v1327, 0.0
  %v1433 = vadd.f32 %v1431, %v1432
  %v1434 = vsel %vm1085, %v1328, 0.0
  %v1435 = vadd.f32 %v1433, %v1434
  %v1436 = vsel %vm1085, %v1329, 0.0
  %v1437 = vadd.f32 %v1435, %v1436
  %v1438 = vsel %vm1085, %v1330, 0.0
  %v1439 = vadd.f32 %v1437, %v1438
  %v1440 = vsel %vm1085, %v1331, 0.0
  %v1441 = vadd.f32 %v1439, %v1440
  %v1442 = vsel %vm1085, %v1332, 0.0
  %v1443 = vadd.f32 %v1441, %v1442
  %v1444 = vsel %vm1085, %v1333, 0.0
  %v1445 = vadd.f32 %v1443, %v1444
  %v1446 = vsel %vm1085, %v1334, 0.0
  %v1447 = vadd.f32 %v1445, %v1446
  %v1448 = vsel %vm1085, %v1335, 0.0
  %v1449 = vadd.f32 %v1447, %v1448
  %v1450 = vsel %vm1085, %v1336, 0.0
  %v1451 = vadd.f32 %v1449, %v1450
  %v1452 = vsel %vm1085, %v1337, 0.0
  %v1453 = vadd.f32 %v1451, %v1452
  %v1454 = vsel %vm1085, %v1338, 0.0
  %v1455 = vadd.f32 %v1453, %v1454
  %v1456 = vsel %vm1085, %v1339, 0.0
  %v1457 = vadd.f32 %v1455, %v1456
  %v1458 = vsel %vm1085, %v1340, 0.0
  %v1459 = vadd.f32 %v1457, %v1458
  %v1460 = vsel %vm1085, %v1341, 0.0
  %v1461 = vadd.f32 %v1459, %v1460
  %v1462 = vsel %vm1085, %v1342, 0.0
  %v1463 = vadd.f32 %v1461, %v1462
  %v1464 = vsel %vm1085, %v1343, 0.0
  %v1465 = vadd.f32 %v1463, %v1464
  %v1466 = vsel %vm1085, %v1344, 0.0
  %v1467 = vadd.f32 %v1465, %v1466
  %v1468 = vsel %vm1085, %v1345, 0.0
  %v1469 = vadd.f32 %v1467, %v1468
  %v1470 = vsel %vm1085, %v1346, 0.0
  %v1471 = vadd.f32 %v1469, %v1470
  %v1472 = vsel %vm1085, %v1347, 0.0
  %v1473 = vadd.f32 %v1471, %v1472
  %v1474 = vsel %vm1085, %v1348, 0.0
  %v1475 = vadd.f32 %v1473, %v1474
  %v1476 = vrot.slane %v1475, 4
  %v1477 = vadd.f32 %v1475, %v1476
  %v1478 = vrot.slane %v1477, 2
  %v1479 = vadd.f32 %v1477, %v1478
  %v1480 = vrot.slane %v1479, 1
  %v1481 = vadd.f32 %v1479, %v1480
  %1482 = vst.msk [vmem:[%s7] sm:$0x1] %vm1283, %v1481
  // Predicated region
  $region22: #{metagene_autoencoder_forward.3} parent=0 // pred_check
    _
  $region23: #{metagene_autoencoder_forward.3} parent=0 // pred_check_branch
    %1484 = sbr.rel (0) target = $region25
  $region24: #{metagene_autoencoder_forward.3} parent=0 // pred_region
    _
  $region25: #{metagene_autoencoder_forward.3} parent=0 // pred_fallthru
    _
  // Predicated region
  $region26: #{metagene_autoencoder_forward.3} parent=0 // pred_check
    _
  $region27: #{metagene_autoencoder_forward.3} parent=0 // pred_check_branch
    %1486 = sbr.rel (0) target = $region29
  $region28: #{metagene_autoencoder_forward.3} parent=0 // pred_region
    _
  $region29: #{metagene_autoencoder_forward.3} parent=0 // pred_fallthru
    _
  // Predicated region
  $region30: #{metagene_autoencoder_forward.3} parent=0 // pred_check
    _
  $region31: #{metagene_autoencoder_forward.3} parent=0 // pred_check_branch
    %1488 = sbr.rel (0) target = $region33
  $region32: #{metagene_autoencoder_forward.3} parent=0 // pred_region
    _
  $region33: #{metagene_autoencoder_forward.3} parent=0 // pred_fallthru
    _
  // Predicated region
  $region34: #{metagene_autoencoder_forward.3} parent=0 // pred_check
    _
  $region35: #{metagene_autoencoder_forward.3} parent=0 // pred_check_branch
    %1490 = sbr.rel (0) target = $region37
  $region36: #{metagene_autoencoder_forward.3} parent=0 // pred_region
    _
  $region37: #{metagene_autoencoder_forward.3} parent=0 // pred_fallthru
    _
  // Predicated region
  $region38: #{metagene_autoencoder_forward.3} parent=0 // pred_check
    _
  $region39: #{metagene_autoencoder_forward.3} parent=0 // pred_check_branch
    %1492 = sbr.rel (0) target = $region41
  $region40: #{metagene_autoencoder_forward.3} parent=0 // pred_region
    _
  $region41: #{metagene_autoencoder_forward.3} parent=0 // pred_fallthru
    _
  // Predicated region
  $region42: #{metagene_autoencoder_forward.3} parent=0 // pred_check
    _
  $region43: #{metagene_autoencoder_forward.3} parent=0 // pred_check_branch
    %1494 = sbr.rel (0) target = $region45
  $region44: #{metagene_autoencoder_forward.3} parent=0 // pred_region
    _
  $region45: #{metagene_autoencoder_forward.3} parent=0 // pred_fallthru
    _

// kernel: metagene_autoencoder_forward.4
$region0: #{metagene_autoencoder_forward.4}
  #allocation0 [shape = 'u32[]', space=smem, size = 0x4, offset = 0x4, fixed_abs, tag = 'smem constant byte address 0x4 - core index']
  #allocation1 [shape = 'u32[144,128]{1,0:T(1,128)}', space=vmem, size = 0x12000, scoped, tag = 'internal scratch']
  %s0 = inlined_call_operand.vmem [shape: f32[512,64], index: 0, kind: input, shape index: {}]
  %s1 = inlined_call_operand.vmem [shape: f32[1,64], index: 1, kind: input, shape index: {}]
  %s2 = inlined_call_operand.vmem [shape: f32[1,64], index: 2, kind: input, shape index: {}]
  %s3 = inlined_call_operand.vmem [shape: f32[64,64], index: 3, kind: input, shape index: {}]
  %s4 = inlined_call_operand.vmem [shape: f32[1,64], index: 4, kind: input, shape index: {}]
  %s5 = inlined_call_operand.vmem [shape: f32[64,64], index: 5, kind: input, shape index: {}]
  %s6 = inlined_call_operand.vmem [shape: f32[1,64], index: 6, kind: input, shape index: {}]
  %s7 = inlined_call_operand.vmem [shape: f32[64,13], index: 7, kind: input, shape index: {}]
  %s8 = inlined_call_operand.vmem [shape: f32[1,13], index: 8, kind: input, shape index: {}]
  %s9 = inlined_call_operand.vmem [shape: f32[512,64], index: 9, kind: input, shape index: {}]
  %s10 = inlined_call_operand.hbm [shape: f32[512,64], index: 10, kind: output, shape index: {0}]
  %s11 = inlined_call_operand.hbm [shape: f32[512,64], index: 11, kind: output, shape index: {1}]
  %s12 = inlined_call_operand.hbm [shape: f32[512,64], index: 12, kind: output, shape index: {2}]
  %s13 = inlined_call_operand.vmem [shape: f32[512,13], index: 13, kind: output, shape index: {3}]
  %14 = xla_tuple %s10, %s11, %s12, %s13
  %s15 = sld [smem:[#allocation0]]
  $region74: #{metagene_autoencoder_forward.4} parent=0
    _
  %s17 = ssub.s32 1, %s15
  %s18 = scalar_select 0, %s17, %s15
  $region1: #{metagene_autoencoder_forward.4} parent=0
    #allocation2 [shape = 'u8[262144]{0}', space=vmem, size = 0x40000, scoped, tag = 'output window, operand 0, single buffered']
    #allocation3 [shape = 's32[1]{0}', space=sflag, size = 0x4, scoped, tag = 'scoped memory for metagene_autoencoder_forward.4']
    #allocation4 [shape = 'u8[262144]{0}', space=vmem, size = 0x40000, scoped, tag = 'output window, operand 1, single buffered']
    #allocation5 [shape = 's32[1]{0}', space=sflag, size = 0x4, scoped, tag = 'scoped memory for metagene_autoencoder_forward.4']
    #allocation6 [shape = 'u8[262144]{0}', space=vmem, size = 0x40000, scoped, tag = 'output window, operand 2, single buffered']
    %19 = vsyncpa [#allocation3], 0
    %20 = vsyncpa [#allocation5], 0
    // Predicated region
    $region2: #{metagene_autoencoder_forward.4} parent=1 // pred_check
      _
    $region3: #{metagene_autoencoder_forward.4} parent=1 // pred_check_branch
      %22 = sbr.rel (0) target = $region5
    $region4: #{metagene_autoencoder_forward.4} parent=1 // pred_region
      _
    $region5: #{metagene_autoencoder_forward.4} parent=1 // pred_fallthru
      _
    // Predicated region
    $region6: #{metagene_autoencoder_forward.4} parent=1 // pred_check
      _
    $region7: #{metagene_autoencoder_forward.4} parent=1 // pred_check_branch
      %24 = sbr.rel (0) target = $region9
    $region8: #{metagene_autoencoder_forward.4} parent=1 // pred_region
      _
    $region9: #{metagene_autoencoder_forward.4} parent=1 // pred_fallthru
      _
    // Predicated region
    $region10: #{metagene_autoencoder_forward.4} parent=1 // pred_check
      _
    $region11: #{metagene_autoencoder_forward.4} parent=1 // pred_check_branch
      %26 = sbr.rel (0) target = $region13
    $region12: #{metagene_autoencoder_forward.4} parent=1 // pred_region
      _
    $region13: #{metagene_autoencoder_forward.4} parent=1 // pred_fallthru
      _
    // Predicated region
    $region14: #{metagene_autoencoder_forward.4} parent=1 // pred_check
      _
    $region15: #{metagene_autoencoder_forward.4} parent=1 // pred_check_branch
      %28 = sbr.rel (0) target = $region17
    $region16: #{metagene_autoencoder_forward.4} parent=1 // pred_region
      _
    $region17: #{metagene_autoencoder_forward.4} parent=1 // pred_fallthru
      _
    // Predicated region
    $region18: #{metagene_autoencoder_forward.4} parent=1 // pred_check
      _
    $region19: #{metagene_autoencoder_forward.4} parent=1 // pred_check_branch
      %30 = sbr.rel (0) target = $region21
    $region20: #{metagene_autoencoder_forward.4} parent=1 // pred_region
      _
    $region21: #{metagene_autoencoder_forward.4} parent=1 // pred_fallthru
      _
    // Predicated region
    $region22: #{metagene_autoencoder_forward.4} parent=1 // pred_check
      _
    $region23: #{metagene_autoencoder_forward.4} parent=1 // pred_check_branch
      %32 = sbr.rel (0) target = $region25
    $region24: #{metagene_autoencoder_forward.4} parent=1 // pred_region
      _
    $region25: #{metagene_autoencoder_forward.4} parent=1 // pred_fallthru
      _
    // Predicated region
    $region26: #{metagene_autoencoder_forward.4} parent=1 // pred_check
      _
    $region27: #{metagene_autoencoder_forward.4} parent=1 // pred_check_branch
      %34 = sbr.rel (0) target = $region29
    $region28: #{metagene_autoencoder_forward.4} parent=1 // pred_region
      _
    $region29: #{metagene_autoencoder_forward.4} parent=1 // pred_fallthru
      _
    // Predicated region
    $region30: #{metagene_autoencoder_forward.4} parent=1 // pred_check
      _
    $region31: #{metagene_autoencoder_forward.4} parent=1 // pred_check_branch
      %36 = sbr.rel (0) target = $region33
    $region32: #{metagene_autoencoder_forward.4} parent=1 // pred_region
      _
    $region33: #{metagene_autoencoder_forward.4} parent=1 // pred_fallthru
      _
    // Predicated region
    $region34: #{metagene_autoencoder_forward.4} parent=1 // pred_check
      _
    $region35: #{metagene_autoencoder_forward.4} parent=1 // pred_check_branch
      %38 = sbr.rel (0) target = $region37
    $region36: #{metagene_autoencoder_forward.4} parent=1 // pred_region
      _
    $region37: #{metagene_autoencoder_forward.4} parent=1 // pred_fallthru
      _
    // Predicated region
    $region38: #{metagene_autoencoder_forward.4} parent=1 // pred_check
      _
    $region39: #{metagene_autoencoder_forward.4} parent=1 // pred_check_branch
      %40 = sbr.rel (0) target = $region41
    $region40: #{metagene_autoencoder_forward.4} parent=1 // pred_region
      _
    $region41: #{metagene_autoencoder_forward.4} parent=1 // pred_fallthru
      _
    %v41 = vld [vmem:[%s0] sm:$0xff]
    %v42 = vld [vmem:[%s0 + $0x8] sm:$0xff]
    %v43 = vld [vmem:[%s0 + $0x10] sm:$0xff]
    %v44 = vld [vmem:[%s0 + $0x18] sm:$0xff]
    %v45 = vld [vmem:[%s0 + $0x20] sm:$0xff]
    %v46 = vld [vmem:[%s0 + $0x28] sm:$0xff]
    %v47 = vld [vmem:[%s0 + $0x30] sm:$0xff]
    %v48 = vld [vmem:[%s0 + $0x38] sm:$0xff]
    %v49 = vld [vmem:[%s0 + $0x40] sm:$0xff]
    %v50 = vld [vmem:[%s0 + $0x48] sm:$0xff]
    %v51 = vld [vmem:[%s0 + $0x50] sm:$0xff]
    %v52 = vld [vmem:[%s0 + $0x58] sm:$0xff]
    %v53 = vld [vmem:[%s0 + $0x60] sm:$0xff]
    %v54 = vld [vmem:[%s0 + $0x68] sm:$0xff]
    %v55 = vld [vmem:[%s0 + $0x70] sm:$0xff]
    %v56 = vld [vmem:[%s0 + $0x78] sm:$0xff]
    %v57 = vld [vmem:[%s0 + $0x80] sm:$0xff]
    %v58 = vld [vmem:[%s0 + $0x88] sm:$0xff]
    %v59 = vld [vmem:[%s0 + $0x90] sm:$0xff]
    %v60 = vld [vmem:[%s0 + $0x98] sm:$0xff]
    %v61 = vld [vmem:[%s0 + $0xa0] sm:$0xff]
    %v62 = vld [vmem:[%s0 + $0xa8] sm:$0xff]
    %v63 = vld [vmem:[%s0 + $0xb0] sm:$0xff]
    %v64 = vld [vmem:[%s0 + $0xb8] sm:$0xff]
    %v65 = vld [vmem:[%s0 + $0xc0] sm:$0xff]
    %v66 = vld [vmem:[%s0 + $0xc8] sm:$0xff]
    %v67 = vld [vmem:[%s0 + $0xd0] sm:$0xff]
    %v68 = vld [vmem:[%s0 + $0xd8] sm:$0xff]
    %v69 = vld [vmem:[%s0 + $0xe0] sm:$0xff]
    %v70 = vld [vmem:[%s0 + $0xe8] sm:$0xff]
    %v71 = vld [vmem:[%s0 + $0xf0] sm:$0xff]
    %v72 = vld [vmem:[%s0 + $0xf8] sm:$0xff]
    %v73 = vld [vmem:[%s0 + $0x100] sm:$0xff]
    %v74 = vld [vmem:[%s0 + $0x108] sm:$0xff]
    %v75 = vld [vmem:[%s0 + $0x110] sm:$0xff]
    %v76 = vld [vmem:[%s0 + $0x118] sm:$0xff]
    %v77 = vld [vmem:[%s0 + $0x120] sm:$0xff]
    %v78 = vld [vmem:[%s0 + $0x128] sm:$0xff]
    %v79 = vld [vmem:[%s0 + $0x130] sm:$0xff]
    %v80 = vld [vmem:[%s0 + $0x138] sm:$0xff]
    %v81 = vld [vmem:[%s0 + $0x140] sm:$0xff]
    %v82 = vld [vmem:[%s0 + $0x148] sm:$0xff]
    %v83 = vld [vmem:[%s0 + $0x150] sm:$0xff]
    %v84 = vld [vmem:[%s0 + $0x158] sm:$0xff]
    %v85 = vld [vmem:[%s0 + $0x160] sm:$0xff]
    %v86 = vld [vmem:[%s0 + $0x168] sm:$0xff]
    %v87 = vld [vmem:[%s0 + $0x170] sm:$0xff]
    %v88 = vld [vmem:[%s0 + $0x178] sm:$0xff]
    %v89 = vld [vmem:[%s0 + $0x180] sm:$0xff]
    %v90 = vld [vmem:[%s0 + $0x188] sm:$0xff]
    %v91 = vld [vmem:[%s0 + $0x190] sm:$0xff]
    %v92 = vld [vmem:[%s0 + $0x198] sm:$0xff]
    %v93 = vld [vmem:[%s0 + $0x1a0] sm:$0xff]
    %v94 = vld [vmem:[%s0 + $0x1a8] sm:$0xff]
    %v95 = vld [vmem:[%s0 + $0x1b0] sm:$0xff]
    %v96 = vld [vmem:[%s0 + $0x1b8] sm:$0xff]
    %v97 = vld [vmem:[%s0 + $0x1c0] sm:$0xff]
    %v98 = vld [vmem:[%s0 + $0x1c8] sm:$0xff]
    %v99 = vld [vmem:[%s0 + $0x1d0] sm:$0xff]
    %v100 = vld [vmem:[%s0 + $0x1d8] sm:$0xff]
    %v101 = vld [vmem:[%s0 + $0x1e0] sm:$0xff]
    %v102 = vld [vmem:[%s0 + $0x1e8] sm:$0xff]
    %v103 = vld [vmem:[%s0 + $0x1f0] sm:$0xff]
    %v104 = vld [vmem:[%s0 + $0x1f8] sm:$0xff]
    %v105 = vld [vmem:[%s1] sm:$0x1]
    %v107 = vlaneseq
    %v108 = vshrl.u32 %v107, 7
    %v109 = vsub.s32 0, %v108
    %v110 = vrot.slane %v105, %v109
    %v112 = vmul.f32 %v41, %v110
    %v113 = vmul.f32 %v42, %v110
    %v114 = vmul.f32 %v43, %v110
    %v115 = vmul.f32 %v44, %v110
    %v116 = vmul.f32 %v45, %v110
    %v117 = vmul.f32 %v46, %v110
    %v118 = vmul.f32 %v47, %v110
    %v119 = vmul.f32 %v48, %v110
    %v120 = vmul.f32 %v49, %v110
    %v121 = vmul.f32 %v50, %v110
    %v122 = vmul.f32 %v51, %v110
    %v123 = vmul.f32 %v52, %v110
    %v124 = vmul.f32 %v53, %v110
    %v125 = vmul.f32 %v54, %v110
    %v126 = vmul.f32 %v55, %v110
    %v127 = vmul.f32 %v56, %v110
    %v128 = vmul.f32 %v57, %v110
    %v129 = vmul.f32 %v58, %v110
    %v130 = vmul.f32 %v59, %v110
    %v131 = vmul.f32 %v60, %v110
    %v132 = vmul.f32 %v61, %v110
    %v133 = vmul.f32 %v62, %v110
    %v134 = vmul.f32 %v63, %v110
    %v135 = vmul.f32 %v64, %v110
    %v136 = vmul.f32 %v65, %v110
    %v137 = vmul.f32 %v66, %v110
    %v138 = vmul.f32 %v67, %v110
    %v139 = vmul.f32 %v68, %v110
    %v140 = vmul.f32 %v69, %v110
    %v141 = vmul.f32 %v70, %v110
    %v142 = vmul.f32 %v71, %v110
    %v143 = vmul.f32 %v72, %v110
    %v144 = vmul.f32 %v73, %v110
    %v145 = vmul.f32 %v74, %v110
    %v146 = vmul.f32 %v75, %v110
    %v147 = vmul.f32 %v76, %v110
    %v148 = vmul.f32 %v77, %v110
    %v149 = vmul.f32 %v78, %v110
    %v150 = vmul.f32 %v79, %v110
    %v151 = vmul.f32 %v80, %v110
    %v152 = vmul.f32 %v81, %v110
    %v153 = vmul.f32 %v82, %v110
    %v154 = vmul.f32 %v83, %v110
    %v155 = vmul.f32 %v84, %v110
    %v156 = vmul.f32 %v85, %v110
    %v157 = vmul.f32 %v86, %v110
    %v158 = vmul.f32 %v87, %v110
    %v159 = vmul.f32 %v88, %v110
    %v160 = vmul.f32 %v89, %v110
    %v161 = vmul.f32 %v90, %v110
    %v162 = vmul.f32 %v91, %v110
    %v163 = vmul.f32 %v92, %v110
    %v164 = vmul.f32 %v93, %v110
    %v165 = vmul.f32 %v94, %v110
    %v166 = vmul.f32 %v95, %v110
    %v167 = vmul.f32 %v96, %v110
    %v168 = vmul.f32 %v97, %v110
    %v169 = vmul.f32 %v98, %v110
    %v170 = vmul.f32 %v99, %v110
    %v171 = vmul.f32 %v100, %v110
    %v172 = vmul.f32 %v101, %v110
    %v173 = vmul.f32 %v102, %v110
    %v174 = vmul.f32 %v103, %v110
    %v175 = vmul.f32 %v104, %v110
    %v176 = vld [vmem:[%s2] sm:$0x1]
    %v178 = vlaneseq
    %v179 = vshrl.u32 %v178, 7
    %v180 = vsub.s32 0, %v179
    %v181 = vrot.slane %v176, %v180
    %v183 = vadd.f32 %v112, %v181
    %v184 = vadd.f32 %v113, %v181
    %v185 = vadd.f32 %v114, %v181
    %v186 = vadd.f32 %v115, %v181
    %v187 = vadd.f32 %v116, %v181
    %v188 = vadd.f32 %v117, %v181
    %v189 = vadd.f32 %v118, %v181
    %v190 = vadd.f32 %v119, %v181
    %v191 = vadd.f32 %v120, %v181
    %v192 = vadd.f32 %v121, %v181
    %v193 = vadd.f32 %v122, %v181
    %v194 = vadd.f32 %v123, %v181
    %v195 = vadd.f32 %v124, %v181
    %v196 = vadd.f32 %v125, %v181
    %v197 = vadd.f32 %v126, %v181
    %v198 = vadd.f32 %v127, %v181
    %v199 = vadd.f32 %v128, %v181
    %v200 = vadd.f32 %v129, %v181
    %v201 = vadd.f32 %v130, %v181
    %v202 = vadd.f32 %v131, %v181
    %v203 = vadd.f32 %v132, %v181
    %v204 = vadd.f32 %v133, %v181
    %v205 = vadd.f32 %v134, %v181
    %v206 = vadd.f32 %v135, %v181
    %v207 = vadd.f32 %v136, %v181
    %v208 = vadd.f32 %v137, %v181
    %v209 = vadd.f32 %v138, %v181
    %v210 = vadd.f32 %v139, %v181
    %v211 = vadd.f32 %v140, %v181
    %v212 = vadd.f32 %v141, %v181
    %v213 = vadd.f32 %v142, %v181
    %v214 = vadd.f32 %v143, %v181
    %v215 = vadd.f32 %v144, %v181
    %v216 = vadd.f32 %v145, %v181
    %v217 = vadd.f32 %v146, %v181
    %v218 = vadd.f32 %v147, %v181
    %v219 = vadd.f32 %v148, %v181
    %v220 = vadd.f32 %v149, %v181
    %v221 = vadd.f32 %v150, %v181
    %v222 = vadd.f32 %v151, %v181
    %v223 = vadd.f32 %v152, %v181
    %v224 = vadd.f32 %v153, %v181
    %v225 = vadd.f32 %v154, %v181
    %v226 = vadd.f32 %v155, %v181
    %v227 = vadd.f32 %v156, %v181
    %v228 = vadd.f32 %v157, %v181
    %v229 = vadd.f32 %v158, %v181
    %v230 = vadd.f32 %v159, %v181
    %v231 = vadd.f32 %v160, %v181
    %v232 = vadd.f32 %v161, %v181
    %v233 = vadd.f32 %v162, %v181
    %v234 = vadd.f32 %v163, %v181
    %v235 = vadd.f32 %v164, %v181
    %v236 = vadd.f32 %v165, %v181
    %v237 = vadd.f32 %v166, %v181
    %v238 = vadd.f32 %v167, %v181
    %v239 = vadd.f32 %v168, %v181
    %v240 = vadd.f32 %v169, %v181
    %v241 = vadd.f32 %v170, %v181
    %v242 = vadd.f32 %v171, %v181
    %v243 = vadd.f32 %v172, %v181
    %v244 = vadd.f32 %v173, %v181
    %v245 = vadd.f32 %v174, %v181
    %v246 = vadd.f32 %v175, %v181
    %v247 = vld [vmem:[%s3] sm:$0xff]
    %v248 = vld [vmem:[%s3 + $0x8] sm:$0xff]
    %v249 = vld [vmem:[%s3 + $0x10] sm:$0xff]
    %v250 = vld [vmem:[%s3 + $0x18] sm:$0xff]
    %v251 = vld [vmem:[%s3 + $0x20] sm:$0xff]
    %v252 = vld [vmem:[%s3 + $0x28] sm:$0xff]
    %v253 = vld [vmem:[%s3 + $0x30] sm:$0xff]
    %v254 = vld [vmem:[%s3 + $0x38] sm:$0xff]
    %v255 = vld [vmem:[%s4] sm:$0x1]
    %v257 = vlaneseq
    %v258 = vshrl.u32 %v257, 7
    %v259 = vsub.s32 0, %v258
    %v260 = vrot.slane %v255, %v259
    %vm262 = vcmask 523264
    %v264 = vsel %vm262, %v183, 0
    %v267 = vsel %vm262, %v184, 0
    %v270 = vsel %vm262, %v185, 0
    %v273 = vsel %vm262, %v186, 0
    %v276 = vsel %vm262, %v187, 0
    %v279 = vsel %vm262, %v188, 0
    %v282 = vsel %vm262, %v189, 0
    %v285 = vsel %vm262, %v190, 0
    %v288 = vsel %vm262, %v191, 0
    %v291 = vsel %vm262, %v192, 0
    %v294 = vsel %vm262, %v193, 0
    %v297 = vsel %vm262, %v194, 0
    %v300 = vsel %vm262, %v195, 0
    %v303 = vsel %vm262, %v196, 0
    %v306 = vsel %vm262, %v197, 0
    %v309 = vsel %vm262, %v198, 0
    %v312 = vsel %vm262, %v199, 0
    %v315 = vsel %vm262, %v200, 0
    %v318 = vsel %vm262, %v201, 0
    %v321 = vsel %vm262, %v202, 0
    %v324 = vsel %vm262, %v203, 0
    %v327 = vsel %vm262, %v204, 0
    %v330 = vsel %vm262, %v205, 0
    %v333 = vsel %vm262, %v206, 0
    %v336 = vsel %vm262, %v207, 0
    %v339 = vsel %vm262, %v208, 0
    %v342 = vsel %vm262, %v209, 0
    %v345 = vsel %vm262, %v210, 0
    %v348 = vsel %vm262, %v211, 0
    %v351 = vsel %vm262, %v212, 0
    %v354 = vsel %vm262, %v213, 0
    %v357 = vsel %vm262, %v214, 0
    %v360 = vsel %vm262, %v215, 0
    %v363 = vsel %vm262, %v216, 0
    %v366 = vsel %vm262, %v217, 0
    %v369 = vsel %vm262, %v218, 0
    %v372 = vsel %vm262, %v219, 0
    %v375 = vsel %vm262, %v220, 0
    %v378 = vsel %vm262, %v221, 0
    %v381 = vsel %vm262, %v222, 0
    %v384 = vsel %vm262, %v223, 0
    %v387 = vsel %vm262, %v224, 0
    %v390 = vsel %vm262, %v225, 0
    %v393 = vsel %vm262, %v226, 0
    %v396 = vsel %vm262, %v227, 0
    %v399 = vsel %vm262, %v228, 0
    %v402 = vsel %vm262, %v229, 0
    %v405 = vsel %vm262, %v230, 0
    %v408 = vsel %vm262, %v231, 0
    %v411 = vsel %vm262, %v232, 0
    %v414 = vsel %vm262, %v233, 0
    %v417 = vsel %vm262, %v234, 0
    %v420 = vsel %vm262, %v235, 0
    %v423 = vsel %vm262, %v236, 0
    %v426 = vsel %vm262, %v237, 0
    %v429 = vsel %vm262, %v238, 0
    %v432 = vsel %vm262, %v239, 0
    %v435 = vsel %vm262, %v240, 0
    %v438 = vsel %vm262, %v241, 0
    %v441 = vsel %vm262, %v242, 0
    %v444 = vsel %vm262, %v243, 0
    %v447 = vsel %vm262, %v244, 0
    %v450 = vsel %vm262, %v245, 0
    %v453 = vsel %vm262, %v246, 0
    %455 = vmatprep.subr.mxu0 0.0
    %456 = vmatpush1.msra.mxu0 %v247
    %457 = vmatprep.subr.mxu0 0.0
    %458 = vmatpush1.msra.mxu0 %v248
    %459 = vmatprep.subr.mxu0 0.0
    %460 = vmatpush1.msra.mxu0 %v249
    %461 = vmatprep.subr.mxu0 0.0
    %462 = vmatpush1.msra.mxu0 %v250
    %463 = vmatprep.subr.mxu0 0.0
    %464 = vmatpush1.msra.mxu0 %v251
    %465 = vmatprep.subr.mxu0 0.0
    %466 = vmatpush1.msra.mxu0 %v252
    %467 = vmatprep.subr.mxu0 0.0
    %468 = vmatpush1.msra.mxu0 %v253
    %469 = vmatprep.subr.mxu0 0.0
    %470 = vmatpush1.msra.mxu0 %v254
    %471 = vmatprep.subr.mxu0 0.0
    %472 = vmatpush1.msra.mxu0 0.0
    %473 = vmatprep.subr.mxu0 0.0
    %474 = vmatpush1.msra.mxu0 0.0
    %475 = vmatprep.subr.mxu0 0.0
    %476 = vmatpush1.msra.mxu0 0.0
    %477 = vmatprep.subr.mxu0 0.0
    %478 = vmatpush1.msra.mxu0 0.0
    %479 = vmatprep.subr.mxu0 0.0
    %480 = vmatpush1.msra.mxu0 0.0
    %481 = vmatprep.subr.mxu0 0.0
    %482 = vmatpush1.msra.mxu0 0.0
    %483 = vmatprep.subr.mxu0 0.0
    %484 = vmatpush1.msra.mxu0 0.0
    %485 = vmatprep.subr.mxu0 0.0
    %486 = vmatpush1.msra.mxu0 0.0
    %487 = vmatprep.subr.mxu0 0.0
    %488 = vmatpush1.msra.mxu0 0.0
    %489 = vmatprep.subr.mxu0 0.0
    %490 = vmatpush1.msra.mxu0 0.0
    %491 = vmatprep.subr.mxu0 0.0
    %492 = vmatpush1.msra.mxu0 0.0
    %493 = vmatprep.subr.mxu0 0.0
    %494 = vmatpush1.msra.mxu0 0.0
    %495 = vmatprep.subr.mxu0 0.0
    %496 = vmatpush1.msra.mxu0 0.0
    %497 = vmatprep.subr.mxu0 0.0
    %498 = vmatpush1.msra.mxu0 0.0
    %499 = vmatprep.subr.mxu0 0.0
    %500 = vmatpush1.msra.mxu0 0.0
    %501 = vmatprep.subr.mxu0 0.0
    %502 = vmatpush1.msra.mxu0 0.0
    %503 = vmatprep.subr.mxu0 0.0
    %504 = vmatpush1.msra.mxu0 0.0
    %505 = vmatprep.subr.mxu0 0.0
    %506 = vmatpush1.msra.mxu0 0.0
    %507 = vmatprep.subr.mxu0 0.0
    %508 = vmatpush1.msra.mxu0 0.0
    %509 = vmatprep.subr.mxu0 0.0
    %510 = vmatpush1.msra.mxu0 0.0
    %511 = vmatprep.subr.mxu0 0.0
    %512 = vmatpush1.msra.mxu0 0.0
    %513 = vmatprep.subr.mxu0 0.0
    %514 = vmatpush1.msra.mxu0 0.0
    %515 = vmatprep.subr.mxu0 0.0
    %516 = vmatpush1.msra.mxu0 0.0
    %517 = vmatprep.subr.mxu0 0.0
    %518 = vmatpush1.msra.mxu0 0.0
    %519 = vmatprep.mubr.f32.mxu0 0.0
    %520 = vmatmul.mubr.f32.gmra.mrb[0].mxu0 %v264
    %v521 = vpop.f32.mrb[0].mxu0
    %v522 = vadd.f32 %v260, %v521
    %v523 = vpop.f32.mrb[0].mxu0
    %524 = vmatprep.mubr.f32.mxu0 0.0
    %525 = vmatmul.mubr.f32.gmra.mrb[0].mxu0 %v267
    %v526 = vpop.f32.mrb[0].mxu0
    %v527 = vadd.f32 %v260, %v526
    %v528 = vpop.f32.mrb[0].mxu0
    %529 = vmatprep.mubr.f32.mxu0 0.0
    %530 = vmatmul.mubr.f32.gmra.mrb[0].mxu0 %v270
    %v531 = vpop.f32.mrb[0].mxu0
    %v532 = vadd.f32 %v260, %v531
    %v533 = vpop.f32.mrb[0].mxu0
    %534 = vmatprep.mubr.f32.mxu0 0.0
    %535 = vmatmul.mubr.f32.gmra.mrb[0].mxu0 %v273
    %v536 = vpop.f32.mrb[0].mxu0
    %v537 = vadd.f32 %v260, %v536
    %v538 = vpop.f32.mrb[0].mxu0
    %539 = vmatprep.mubr.f32.mxu0 0.0
    %540 = vmatmul.mubr.f32.gmra.mrb[0].mxu0 %v276
    %v541 = vpop.f32.mrb[0].mxu0
    %v542 = vadd.f32 %v260, %v541
    %v543 = vpop.f32.mrb[0].mxu0
    %544 = vmatprep.mubr.f32.mxu0 0.0
    %545 = vmatmul.mubr.f32.gmra.mrb[0].mxu0 %v279
    %v546 = vpop.f32.mrb[0].mxu0
    %v547 = vadd.f32 %v260, %v546
    %v548 = vpop.f32.mrb[0].mxu0
    %549 = vmatprep.mubr.f32.mxu0 0.0
    %550 = vmatmul.mubr.f32.gmra.mrb[0].mxu0 %v282
    %v551 = vpop.f32.mrb[0].mxu0
    %v552 = vadd.f32 %v260, %v551
    %v553 = vpop.f32.mrb[0].mxu0
    %554 = vmatprep.mubr.f32.mxu0 0.0
    %555 = vmatmul.mubr.f32.gmra.mrb[0].mxu0 %v285
    %v556 = vpop.f32.mrb[0].mxu0
    %v557 = vadd.f32 %v260, %v556
    %v558 = vpop.f32.mrb[0].mxu0
    %559 = vmatprep.mubr.f32.mxu0 0.0
    %560 = vmatmul.mubr.f32.gmra.mrb[0].mxu0 %v288
    %v561 = vpop.f32.mrb[0].mxu0
    %v562 = vadd.f32 %v260, %v561
    %v563 = vpop.f32.mrb[0].mxu0
    %564 = vmatprep.mubr.f32.mxu0 0.0
    %565 = vmatmul.mubr.f32.gmra.mrb[0].mxu0 %v291
    %v566 = vpop.f32.mrb[0].mxu0
    %v567 = vadd.f32 %v260, %v566
    %v568 = vpop.f32.mrb[0].mxu0
    %569 = vmatprep.mubr.f32.mxu0 0.0
    %570 = vmatmul.mubr.f32.gmra.mrb[0].mxu0 %v294
    %v571 = vpop.f32.mrb[0].mxu0
    %v572 = vadd.f32 %v260, %v571
    %v573 = vpop.f32.mrb[0].mxu0
    %574 = vmatprep.mubr.f32.mxu0 0.0
    %575 = vmatmul.mubr.f32.gmra.mrb[0].mxu0 %v297
    %v576 = vpop.f32.mrb[0].mxu0
    %v577 = vadd.f32 %v260, %v576
    %v578 = vpop.f32.mrb[0].mxu0
    %579 = vmatprep.mubr.f32.mxu0 0.0
    %580 = vmatmul.mubr.f32.gmra.mrb[0].mxu0 %v300
    %v581 = vpop.f32.mrb[0].mxu0
    %v582 = vadd.f32 %v260, %v581
    %v583 = vpop.f32.mrb[0].mxu0
    %584 = vmatprep.mubr.f32.mxu0 0.0
    %585 = vmatmul.mubr.f32.gmra.mrb[0].mxu0 %v303
    %v586 = vpop.f32.mrb[0].mxu0
    %v587 = vadd.f32 %v260, %v586
    %v588 = vpop.f32.mrb[0].mxu0
    %589 = vmatprep.mubr.f32.mxu0 0.0
    %590 = vmatmul.mubr.f32.gmra.mrb[0].mxu0 %v306
    %v591 = vpop.f32.mrb[0].mxu0
    %v592 = vadd.f32 %v260, %v591
    %v593 = vpop.f32.mrb[0].mxu0
    %594 = vmatprep.mubr.f32.mxu0 0.0
    %595 = vmatmul.mubr.f32.gmra.mrb[0].mxu0 %v309
    %v596 = vpop.f32.mrb[0].mxu0
    %v597 = vadd.f32 %v260, %v596
    %v598 = vpop.f32.mrb[0].mxu0
    %599 = vmatprep.mubr.f32.mxu0 0.0
    %600 = vmatmul.mubr.f32.gmra.mrb[0].mxu0 %v312
    %v601 = vpop.f32.mrb[0].mxu0
    %v602 = vadd.f32 %v260, %v601
    %v603 = vpop.f32.mrb[0].mxu0
    %604 = vmatprep.mubr.f32.mxu0 0.0
    %605 = vmatmul.mubr.f32.gmra.mrb[0].mxu0 %v315
    %v606 = vpop.f32.mrb[0].mxu0
    %v607 = vadd.f32 %v260, %v606
    %v608 = vpop.f32.mrb[0].mxu0
    %609 = vmatprep.mubr.f32.mxu0 0.0
    %610 = vmatmul.mubr.f32.gmra.mrb[0].mxu0 %v318
    %v611 = vpop.f32.mrb[0].mxu0
    %v612 = vadd.f32 %v260, %v611
    %v613 = vpop.f32.mrb[0].mxu0
    %614 = vmatprep.mubr.f32.mxu0 0.0
    %615 = vmatmul.mubr.f32.gmra.mrb[0].mxu0 %v321
    %v616 = vpop.f32.mrb[0].mxu0
    %v617 = vadd.f32 %v260, %v616
    %v618 = vpop.f32.mrb[0].mxu0
    %619 = vmatprep.mubr.f32.mxu0 0.0
    %620 = vmatmul.mubr.f32.gmra.mrb[0].mxu0 %v324
    %v621 = vpop.f32.mrb[0].mxu0
    %v622 = vadd.f32 %v260, %v621
    %v623 = vpop.f32.mrb[0].mxu0
    %624 = vmatprep.mubr.f32.mxu0 0.0
    %625 = vmatmul.mubr.f32.gmra.mrb[0].mxu0 %v327
    %v626 = vpop.f32.mrb[0].mxu0
    %v627 = vadd.f32 %v260, %v626
    %v628 = vpop.f32.mrb[0].mxu0
    %629 = vmatprep.mubr.f32.mxu0 0.0
    %630 = vmatmul.mubr.f32.gmra.mrb[0].mxu0 %v330
    %v631 = vpop.f32.mrb[0].mxu0
    %v632 = vadd.f32 %v260, %v631
    %v633 = vpop.f32.mrb[0].mxu0
    %634 = vmatprep.mubr.f32.mxu0 0.0
    %635 = vmatmul.mubr.f32.gmra.mrb[0].mxu0 %v333
    %v636 = vpop.f32.mrb[0].mxu0
    %v637 = vadd.f32 %v260, %v636
    %v638 = vpop.f32.mrb[0].mxu0
    %639 = vmatprep.mubr.f32.mxu0 0.0
    %640 = vmatmul.mubr.f32.gmra.mrb[0].mxu0 %v336
    %v641 = vpop.f32.mrb[0].mxu0
    %v642 = vadd.f32 %v260, %v641
    %v643 = vpop.f32.mrb[0].mxu0
    %644 = vmatprep.mubr.f32.mxu0 0.0
    %645 = vmatmul.mubr.f32.gmra.mrb[0].mxu0 %v339
    %v646 = vpop.f32.mrb[0].mxu0
    %v647 = vadd.f32 %v260, %v646
    %v648 = vpop.f32.mrb[0].mxu0
    %649 = vmatprep.mubr.f32.mxu0 0.0
    %650 = vmatmul.mubr.f32.gmra.mrb[0].mxu0 %v342
    %v651 = vpop.f32.mrb[0].mxu0
    %v652 = vadd.f32 %v260, %v651
    %v653 = vpop.f32.mrb[0].mxu0
    %654 = vmatprep.mubr.f32.mxu0 0.0
    %655 = vmatmul.mubr.f32.gmra.mrb[0].mxu0 %v345
    %v656 = vpop.f32.mrb[0].mxu0
    %v657 = vadd.f32 %v260, %v656
    %v658 = vpop.f32.mrb[0].mxu0
    %659 = vmatprep.mubr.f32.mxu0 0.0
    %660 = vmatmul.mubr.f32.gmra.mrb[0].mxu0 %v348
    %v661 = vpop.f32.mrb[0].mxu0
    %v662 = vadd.f32 %v260, %v661
    %v663 = vpop.f32.mrb[0].mxu0
    %664 = vmatprep.mubr.f32.mxu0 0.0
    %665 = vmatmul.mubr.f32.gmra.mrb[0].mxu0 %v351
    %v666 = vpop.f32.mrb[0].mxu0
    %v667 = vadd.f32 %v260, %v666
    %v668 = vpop.f32.mrb[0].mxu0
    %669 = vmatprep.mubr.f32.mxu0 0.0
    %670 = vmatmul.mubr.f32.gmra.mrb[0].mxu0 %v354
    %v671 = vpop.f32.mrb[0].mxu0
    %v672 = vadd.f32 %v260, %v671
    %v673 = vpop.f32.mrb[0].mxu0
    %674 = vmatprep.mubr.f32.mxu0 0.0
    %675 = vmatmul.mubr.f32.gmra.mrb[0].mxu0 %v357
    %v676 = vpop.f32.mrb[0].mxu0
    %v677 = vadd.f32 %v260, %v676
    %v678 = vpop.f32.mrb[0].mxu0
    %679 = vmatprep.mubr.f32.mxu0 0.0
    %680 = vmatmul.mubr.f32.gmra.mrb[0].mxu0 %v360
    %v681 = vpop.f32.mrb[0].mxu0
    %v682 = vadd.f32 %v260, %v681
    %v683 = vpop.f32.mrb[0].mxu0
    %684 = vmatprep.mubr.f32.mxu0 0.0
    %685 = vmatmul.mubr.f32.gmra.mrb[0].mxu0 %v363
    %v686 = vpop.f32.mrb[0].mxu0
    %v687 = vadd.f32 %v260, %v686
    %v688 = vpop.f32.mrb[0].mxu0
    %689 = vmatprep.mubr.f32.mxu0 0.0
    %690 = vmatmul.mubr.f32.gmra.mrb[0].mxu0 %v366
    %v691 = vpop.f32.mrb[0].mxu0
    %v692 = vadd.f32 %v260, %v691
    %v693 = vpop.f32.mrb[0].mxu0
    %694 = vmatprep.mubr.f32.mxu0 0.0
    %695 = vmatmul.mubr.f32.gmra.mrb[0].mxu0 %v369
    %v696 = vpop.f32.mrb[0].mxu0
    %v697 = vadd.f32 %v260, %v696
    %v698 = vpop.f32.mrb[0].mxu0
    %699 = vmatprep.mubr.f32.mxu0 0.0
    %700 = vmatmul.mubr.f32.gmra.mrb[0].mxu0 %v372
    %v701 = vpop.f32.mrb[0].mxu0
    %v702 = vadd.f32 %v260, %v701
    %v703 = vpop.f32.mrb[0].mxu0
    %704 = vmatprep.mubr.f32.mxu0 0.0
    %705 = vmatmul.mubr.f32.gmra.mrb[0].mxu0 %v375
    %v706 = vpop.f32.mrb[0].mxu0
    %v707 = vadd.f32 %v260, %v706
    %v708 = vpop.f32.mrb[0].mxu0
    %709 = vmatprep.mubr.f32.mxu0 0.0
    %710 = vmatmul.mubr.f32.gmra.mrb[0].mxu0 %v378
    %v711 = vpop.f32.mrb[0].mxu0
    %v712 = vadd.f32 %v260, %v711
    %v713 = vpop.f32.mrb[0].mxu0
    %714 = vmatprep.mubr.f32.mxu0 0.0
    %715 = vmatmul.mubr.f32.gmra.mrb[0].mxu0 %v381
    %v716 = vpop.f32.mrb[0].mxu0
    %v717 = vadd.f32 %v260, %v716
    %v718 = vpop.f32.mrb[0].mxu0
    %719 = vmatprep.mubr.f32.mxu0 0.0
    %720 = vmatmul.mubr.f32.gmra.mrb[0].mxu0 %v384
    %v721 = vpop.f32.mrb[0].mxu0
    %v722 = vadd.f32 %v260, %v721
    %v723 = vpop.f32.mrb[0].mxu0
    %724 = vmatprep.mubr.f32.mxu0 0.0
    %725 = vmatmul.mubr.f32.gmra.mrb[0].mxu0 %v387
    %v726 = vpop.f32.mrb[0].mxu0
    %v727 = vadd.f32 %v260, %v726
    %v728 = vpop.f32.mrb[0].mxu0
    %729 = vmatprep.mubr.f32.mxu0 0.0
    %730 = vmatmul.mubr.f32.gmra.mrb[0].mxu0 %v390
    %v731 = vpop.f32.mrb[0].mxu0
    %v732 = vadd.f32 %v260, %v731
    %v733 = vpop.f32.mrb[0].mxu0
    %734 = vmatprep.mubr.f32.mxu0 0.0
    %735 = vmatmul.mubr.f32.gmra.mrb[0].mxu0 %v393
    %v736 = vpop.f32.mrb[0].mxu0
    %v737 = vadd.f32 %v260, %v736
    %v738 = vpop.f32.mrb[0].mxu0
    %739 = vmatprep.mubr.f32.mxu0 0.0
    %740 = vmatmul.mubr.f32.gmra.mrb[0].mxu0 %v396
    %v741 = vpop.f32.mrb[0].mxu0
    %v742 = vadd.f32 %v260, %v741
    %v743 = vpop.f32.mrb[0].mxu0
    %744 = vmatprep.mubr.f32.mxu0 0.0
    %745 = vmatmul.mubr.f32.gmra.mrb[0].mxu0 %v399
    %v746 = vpop.f32.mrb[0].mxu0
    %v747 = vadd.f32 %v260, %v746
    %v748 = vpop.f32.mrb[0].mxu0
    %749 = vmatprep.mubr.f32.mxu0 0.0
    %750 = vmatmul.mubr.f32.gmra.mrb[0].mxu0 %v402
    %v751 = vpop.f32.mrb[0].mxu0
    %v752 = vadd.f32 %v260, %v751
    %v753 = vpop.f32.mrb[0].mxu0
    %754 = vmatprep.mubr.f32.mxu0 0.0
    %755 = vmatmul.mubr.f32.gmra.mrb[0].mxu0 %v405
    %v756 = vpop.f32.mrb[0].mxu0
    %v757 = vadd.f32 %v260, %v756
    %v758 = vpop.f32.mrb[0].mxu0
    %759 = vmatprep.mubr.f32.mxu0 0.0
    %760 = vmatmul.mubr.f32.gmra.mrb[0].mxu0 %v408
    %v761 = vpop.f32.mrb[0].mxu0
    %v762 = vadd.f32 %v260, %v761
    %v763 = vpop.f32.mrb[0].mxu0
    %764 = vmatprep.mubr.f32.mxu0 0.0
    %765 = vmatmul.mubr.f32.gmra.mrb[0].mxu0 %v411
    %v766 = vpop.f32.mrb[0].mxu0
    %v767 = vadd.f32 %v260, %v766
    %v768 = vpop.f32.mrb[0].mxu0
    %769 = vmatprep.mubr.f32.mxu0 0.0
    %770 = vmatmul.mubr.f32.gmra.mrb[0].mxu0 %v414
    %v771 = vpop.f32.mrb[0].mxu0
    %v772 = vadd.f32 %v260, %v771
    %v773 = vpop.f32.mrb[0].mxu0
    %774 = vmatprep.mubr.f32.mxu0 0.0
    %775 = vmatmul.mubr.f32.gmra.mrb[0].mxu0 %v417
    %v776 = vpop.f32.mrb[0].mxu0
    %v777 = vadd.f32 %v260, %v776
    %v778 = vpop.f32.mrb[0].mxu0
    %779 = vmatprep.mubr.f32.mxu0 0.0
    %780 = vmatmul.mubr.f32.gmra.mrb[0].mxu0 %v420
    %v781 = vpop.f32.mrb[0].mxu0
    %v782 = vadd.f32 %v260, %v781
    %v783 = vpop.f32.mrb[0].mxu0
    %784 = vmatprep.mubr.f32.mxu0 0.0
    %785 = vmatmul.mubr.f32.gmra.mrb[0].mxu0 %v423
    %v786 = vpop.f32.mrb[0].mxu0
    %v787 = vadd.f32 %v260, %v786
    %v788 = vpop.f32.mrb[0].mxu0
    %789 = vmatprep.mubr.f32.mxu0 0.0
    %790 = vmatmul.mubr.f32.gmra.mrb[0].mxu0 %v426
    %v791 = vpop.f32.mrb[0].mxu0
    %v792 = vadd.f32 %v260, %v791
    %v793 = vpop.f32.mrb[0].mxu0
    %794 = vmatprep.mubr.f32.mxu0 0.0
    %795 = vmatmul.mubr.f32.gmra.mrb[0].mxu0 %v429
    %v796 = vpop.f32.mrb[0].mxu0
    %v797 = vadd.f32 %v260, %v796
    %v798 = vpop.f32.mrb[0].mxu0
    %799 = vmatprep.mubr.f32.mxu0 0.0
    %800 = vmatmul.mubr.f32.gmra.mrb[0].mxu0 %v432
    %v801 = vpop.f32.mrb[0].mxu0
    %v802 = vadd.f32 %v260, %v801
    %v803 = vpop.f32.mrb[0].mxu0
    %804 = vmatprep.mubr.f32.mxu0 0.0
    %805 = vmatmul.mubr.f32.gmra.mrb[0].mxu0 %v435
    %v806 = vpop.f32.mrb[0].mxu0
    %v807 = vadd.f32 %v260, %v806
    %v808 = vpop.f32.mrb[0].mxu0
    %809 = vmatprep.mubr.f32.mxu0 0.0
    %810 = vmatmul.mubr.f32.gmra.mrb[0].mxu0 %v438
    %v811 = vpop.f32.mrb[0].mxu0
    %v812 = vadd.f32 %v260, %v811
    %v813 = vpop.f32.mrb[0].mxu0
    %814 = vmatprep.mubr.f32.mxu0 0.0
    %815 = vmatmul.mubr.f32.gmra.mrb[0].mxu0 %v441
    %v816 = vpop.f32.mrb[0].mxu0
    %v817 = vadd.f32 %v260, %v816
    %v818 = vpop.f32.mrb[0].mxu0
    %819 = vmatprep.mubr.f32.mxu0 0.0
    %820 = vmatmul.mubr.f32.gmra.mrb[0].mxu0 %v444
    %v821 = vpop.f32.mrb[0].mxu0
    %v822 = vadd.f32 %v260, %v821
    %v823 = vpop.f32.mrb[0].mxu0
    %824 = vmatprep.mubr.f32.mxu0 0.0
    %825 = vmatmul.mubr.f32.gmra.mrb[0].mxu0 %v447
    %v826 = vpop.f32.mrb[0].mxu0
    %v827 = vadd.f32 %v260, %v826
    %v828 = vpop.f32.mrb[0].mxu0
    %829 = vmatprep.mubr.f32.mxu0 0.0
    %830 = vmatmul.mubr.f32.gmra.mrb[0].mxu0 %v450
    %v831 = vpop.f32.mrb[0].mxu0
    %v832 = vadd.f32 %v260, %v831
    %v833 = vpop.f32.mrb[0].mxu0
    %834 = vmatprep.mubr.f32.mxu0 0.0
    %835 = vmatmul.mubr.f32.gmra.mrb[0].mxu0 %v453
    %v836 = vpop.f32.mrb[0].mxu0
    %v837 = vadd.f32 %v260, %v836
    %v838 = vpop.f32.mrb[0].mxu0
    %839 = vdwg.mxu0
    %v840 = vld [vmem:[%s5] sm:$0xff]
    %v841 = vld [vmem:[%s5 + $0x8] sm:$0xff]
    %v842 = vld [vmem:[%s5 + $0x10] sm:$0xff]
    %v843 = vld [vmem:[%s5 + $0x18] sm:$0xff]
    %v844 = vld [vmem:[%s5 + $0x20] sm:$0xff]
    %v845 = vld [vmem:[%s5 + $0x28] sm:$0xff]
    %v846 = vld [vmem:[%s5 + $0x30] sm:$0xff]
    %v847 = vld [vmem:[%s5 + $0x38] sm:$0xff]
    %v848 = vld [vmem:[%s6] sm:$0x1]
    %v850 = vlaneseq
    %v851 = vshrl.u32 %v850, 7
    %v852 = vsub.s32 0, %v851
    %v853 = vrot.slane %v848, %v852
    %855 = vmatprep.subr.mxu0 0.0
    %856 = vmatpush1.msra.mxu0 %v840
    %857 = vmatprep.subr.mxu0 0.0
    %858 = vmatpush1.msra.mxu0 %v841
    %859 = vmatprep.subr.mxu0 0.0
    %860 = vmatpush1.msra.mxu0 %v842
    %861 = vmatprep.subr.mxu0 0.0
    %862 = vmatpush1.msra.mxu0 %v843
    %863 = vmatprep.subr.mxu0 0.0
    %864 = vmatpush1.msra.mxu0 %v844
    %865 = vmatprep.subr.mxu0 0.0
    %866 = vmatpush1.msra.mxu0 %v845
    %867 = vmatprep.subr.mxu0 0.0
    %868 = vmatpush1.msra.mxu0 %v846
    %869 = vmatprep.subr.mxu0 0.0
    %870 = vmatpush1.msra.mxu0 %v847
    %871 = vmatprep.subr.mxu0 0.0
    %872 = vmatpush1.msra.mxu0 0.0
    %873 = vmatprep.subr.mxu0 0.0
    %874 = vmatpush1.msra.mxu0 0.0
    %875 = vmatprep.subr.mxu0 0.0
    %876 = vmatpush1.msra.mxu0 0.0
    %877 = vmatprep.subr.mxu0 0.0
    %878 = vmatpush1.msra.mxu0 0.0
    %879 = vmatprep.subr.mxu0 0.0
    %880 = vmatpush1.msra.mxu0 0.0
    %881 = vmatprep.subr.mxu0 0.0
    %882 = vmatpush1.msra.mxu0 0.0
    %883 = vmatprep.subr.mxu0 0.0
    %884 = vmatpush1.msra.mxu0 0.0
    %885 = vmatprep.subr.mxu0 0.0
    %886 = vmatpush1.msra.mxu0 0.0
    %887 = vmatprep.subr.mxu0 0.0
    %888 = vmatpush1.msra.mxu0 0.0
    %889 = vmatprep.subr.mxu0 0.0
    %890 = vmatpush1.msra.mxu0 0.0
    %891 = vmatprep.subr.mxu0 0.0
    %892 = vmatpush1.msra.mxu0 0.0
    %893 = vmatprep.subr.mxu0 0.0
    %894 = vmatpush1.msra.mxu0 0.0
    %895 = vmatprep.subr.mxu0 0.0
    %896 = vmatpush1.msra.mxu0 0.0
    %897 = vmatprep.subr.mxu0 0.0
    %898 = vmatpush1.msra.mxu0 0.0
    %899 = vmatprep.subr.mxu0 0.0
    %900 = vmatpush1.msra.mxu0 0.0
    %901 = vmatprep.subr.mxu0 0.0
    %902 = vmatpush1.msra.mxu0 0.0
    %903 = vmatprep.subr.mxu0 0.0
    %904 = vmatpush1.msra.mxu0 0.0
    %905 = vmatprep.subr.mxu0 0.0
    %906 = vmatpush1.msra.mxu0 0.0
    %907 = vmatprep.subr.mxu0 0.0
    %908 = vmatpush1.msra.mxu0 0.0
    %909 = vmatprep.subr.mxu0 0.0
    %910 = vmatpush1.msra.mxu0 0.0
    %911 = vmatprep.subr.mxu0 0.0
    %912 = vmatpush1.msra.mxu0 0.0
    %913 = vmatprep.subr.mxu0 0.0
    %914 = vmatpush1.msra.mxu0 0.0
    %915 = vmatprep.subr.mxu0 0.0
    %916 = vmatpush1.msra.mxu0 0.0
    %917 = vmatprep.subr.mxu0 0.0
    %918 = vmatpush1.msra.mxu0 0.0
    %919 = vmatprep.mubr.f32.mxu0 0.0
    %920 = vmatmul.mubr.f32.gmra.mrb[0].mxu0 %v264
    %v921 = vpop.f32.mrb[0].mxu0
    %v922 = vadd.f32 %v853, %v921
    %v923 = vpop.f32.mrb[0].mxu0
    %924 = vmatprep.mubr.f32.mxu0 0.0
    %925 = vmatmul.mubr.f32.gmra.mrb[0].mxu0 %v267
    %v926 = vpop.f32.mrb[0].mxu0
    %v927 = vadd.f32 %v853, %v926
    %v928 = vpop.f32.mrb[0].mxu0
    %929 = vmatprep.mubr.f32.mxu0 0.0
    %930 = vmatmul.mubr.f32.gmra.mrb[0].mxu0 %v270
    %v931 = vpop.f32.mrb[0].mxu0
    %v932 = vadd.f32 %v853, %v931
    %v933 = vpop.f32.mrb[0].mxu0
    %934 = vmatprep.mubr.f32.mxu0 0.0
    %935 = vmatmul.mubr.f32.gmra.mrb[0].mxu0 %v273
    %v936 = vpop.f32.mrb[0].mxu0
    %v937 = vadd.f32 %v853, %v936
    %v938 = vpop.f32.mrb[0].mxu0
    %939 = vmatprep.mubr.f32.mxu0 0.0
    %940 = vmatmul.mubr.f32.gmra.mrb[0].mxu0 %v276
    %v941 = vpop.f32.mrb[0].mxu0
    %v942 = vadd.f32 %v853, %v941
    %v943 = vpop.f32.mrb[0].mxu0
    %944 = vmatprep.mubr.f32.mxu0 0.0
    %945 = vmatmul.mubr.f32.gmra.mrb[0].mxu0 %v279
    %v946 = vpop.f32.mrb[0].mxu0
    %v947 = vadd.f32 %v853, %v946
    %v948 = vpop.f32.mrb[0].mxu0
    %949 = vmatprep.mubr.f32.mxu0 0.0
    %950 = vmatmul.mubr.f32.gmra.mrb[0].mxu0 %v282
    %v951 = vpop.f32.mrb[0].mxu0
    %v952 = vadd.f32 %v853, %v951
    %v953 = vpop.f32.mrb[0].mxu0
    %954 = vmatprep.mubr.f32.mxu0 0.0
    %955 = vmatmul.mubr.f32.gmra.mrb[0].mxu0 %v285
    %v956 = vpop.f32.mrb[0].mxu0
    %v957 = vadd.f32 %v853, %v956
    %v958 = vpop.f32.mrb[0].mxu0
    %959 = vmatprep.mubr.f32.mxu0 0.0
    %960 = vmatmul.mubr.f32.gmra.mrb[0].mxu0 %v288
    %v961 = vpop.f32.mrb[0].mxu0
    %v962 = vadd.f32 %v853, %v961
    %v963 = vpop.f32.mrb[0].mxu0
    %964 = vmatprep.mubr.f32.mxu0 0.0
    %965 = vmatmul.mubr.f32.gmra.mrb[0].mxu0 %v291
    %v966 = vpop.f32.mrb[0].mxu0
    %v967 = vadd.f32 %v853, %v966
    %v968 = vpop.f32.mrb[0].mxu0
    %969 = vmatprep.mubr.f32.mxu0 0.0
    %970 = vmatmul.mubr.f32.gmra.mrb[0].mxu0 %v294
    %v971 = vpop.f32.mrb[0].mxu0
    %v972 = vadd.f32 %v853, %v971
    %v973 = vpop.f32.mrb[0].mxu0
    %974 = vmatprep.mubr.f32.mxu0 0.0
    %975 = vmatmul.mubr.f32.gmra.mrb[0].mxu0 %v297
    %v976 = vpop.f32.mrb[0].mxu0
    %v977 = vadd.f32 %v853, %v976
    %v978 = vpop.f32.mrb[0].mxu0
    %979 = vmatprep.mubr.f32.mxu0 0.0
    %980 = vmatmul.mubr.f32.gmra.mrb[0].mxu0 %v300
    %v981 = vpop.f32.mrb[0].mxu0
    %v982 = vadd.f32 %v853, %v981
    %v983 = vpop.f32.mrb[0].mxu0
    %984 = vmatprep.mubr.f32.mxu0 0.0
    %985 = vmatmul.mubr.f32.gmra.mrb[0].mxu0 %v303
    %v986 = vpop.f32.mrb[0].mxu0
    %v987 = vadd.f32 %v853, %v986
    %v988 = vpop.f32.mrb[0].mxu0
    %989 = vmatprep.mubr.f32.mxu0 0.0
    %990 = vmatmul.mubr.f32.gmra.mrb[0].mxu0 %v306
    %v991 = vpop.f32.mrb[0].mxu0
    %v992 = vadd.f32 %v853, %v991
    %v993 = vpop.f32.mrb[0].mxu0
    %994 = vmatprep.mubr.f32.mxu0 0.0
    %995 = vmatmul.mubr.f32.gmra.mrb[0].mxu0 %v309
    %v996 = vpop.f32.mrb[0].mxu0
    %v997 = vadd.f32 %v853, %v996
    %v998 = vpop.f32.mrb[0].mxu0
    %999 = vmatprep.mubr.f32.mxu0 0.0
    %1000 = vmatmul.mubr.f32.gmra.mrb[0].mxu0 %v312
    %v1001 = vpop.f32.mrb[0].mxu0
    %v1002 = vadd.f32 %v853, %v1001
    %v1003 = vpop.f32.mrb[0].mxu0
    %1004 = vmatprep.mubr.f32.mxu0 0.0
    %1005 = vmatmul.mubr.f32.gmra.mrb[0].mxu0 %v315
    %v1006 = vpop.f32.mrb[0].mxu0
    %v1007 = vadd.f32 %v853, %v1006
    %v1008 = vpop.f32.mrb[0].mxu0
    %1009 = vmatprep.mubr.f32.mxu0 0.0
    %1010 = vmatmul.mubr.f32.gmra.mrb[0].mxu0 %v318
    %v1011 = vpop.f32.mrb[0].mxu0
    %v1012 = vadd.f32 %v853, %v1011
    %v1013 = vpop.f32.mrb[0].mxu0
    %1014 = vmatprep.mubr.f32.mxu0 0.0
    %1015 = vmatmul.mubr.f32.gmra.mrb[0].mxu0 %v321
    %v1016 = vpop.f32.mrb[0].mxu0
    %v1017 = vadd.f32 %v853, %v1016
    %v1018 = vpop.f32.mrb[0].mxu0
    %1019 = vmatprep.mubr.f32.mxu0 0.0
    %1020 = vmatmul.mubr.f32.gmra.mrb[0].mxu0 %v324
    %v1021 = vpop.f32.mrb[0].mxu0
    %v1022 = vadd.f32 %v853, %v1021
    %v1023 = vpop.f32.mrb[0].mxu0
    %1024 = vmatprep.mubr.f32.mxu0 0.0
    %1025 = vmatmul.mubr.f32.gmra.mrb[0].mxu0 %v327
    %v1026 = vpop.f32.mrb[0].mxu0
    %v1027 = vadd.f32 %v853, %v1026
    %v1028 = vpop.f32.mrb[0].mxu0
    %1029 = vmatprep.mubr.f32.mxu0 0.0
    %1030 = vmatmul.mubr.f32.gmra.mrb[0].mxu0 %v330
    %v1031 = vpop.f32.mrb[0].mxu0
    %v1032 = vadd.f32 %v853, %v1031
    %v1033 = vpop.f32.mrb[0].mxu0
    %1034 = vmatprep.mubr.f32.mxu0 0.0
    %1035 = vmatmul.mubr.f32.gmra.mrb[0].mxu0 %v333
    %v1036 = vpop.f32.mrb[0].mxu0
    %v1037 = vadd.f32 %v853, %v1036
    %v1038 = vpop.f32.mrb[0].mxu0
    %1039 = vmatprep.mubr.f32.mxu0 0.0
    %1040 = vmatmul.mubr.f32.gmra.mrb[0].mxu0 %v336
    %v1041 = vpop.f32.mrb[0].mxu0
    %v1042 = vadd.f32 %v853, %v1041
    %v1043 = vpop.f32.mrb[0].mxu0
    %1044 = vmatprep.mubr.f32.mxu0 0.0
    %1045 = vmatmul.mubr.f32.gmra.mrb[0].mxu0 %v339
    %v1046 = vpop.f32.mrb[0].mxu0
    %v1047 = vadd.f32 %v853, %v1046
    %v1048 = vpop.f32.mrb[0].mxu0
    %1049 = vmatprep.mubr.f32.mxu0 0.0
    %1050 = vmatmul.mubr.f32.gmra.mrb[0].mxu0 %v342
    %v1051 = vpop.f32.mrb[0].mxu0
    %v1052 = vadd.f32 %v853, %v1051
    %v1053 = vpop.f32.mrb[0].mxu0
    %1054 = vmatprep.mubr.f32.mxu0 0.0
    %1055 = vmatmul.mubr.f32.gmra.mrb[0].mxu0 %v345
    %v1056 = vpop.f32.mrb[0].mxu0
    %v1057 = vadd.f32 %v853, %v1056
    %v1058 = vpop.f32.mrb[0].mxu0
    %1059 = vmatprep.mubr.f32.mxu0 0.0
    %1060 = vmatmul.mubr.f32.gmra.mrb[0].mxu0 %v348
    %v1061 = vpop.f32.mrb[0].mxu0
    %v1062 = vadd.f32 %v853, %v1061
    %v1063 = vpop.f32.mrb[0].mxu0
    %1064 = vmatprep.mubr.f32.mxu0 0.0
    %1065 = vmatmul.mubr.f32.gmra.mrb[0].mxu0 %v351
    %v1066 = vpop.f32.mrb[0].mxu0
    %v1067 = vadd.f32 %v853, %v1066
    %v1068 = vpop.f32.mrb[0].mxu0
    %1069 = vmatprep.mubr.f32.mxu0 0.0
    %1070 = vmatmul.mubr.f32.gmra.mrb[0].mxu0 %v354
    %v1071 = vpop.f32.mrb[0].mxu0
    %v1072 = vadd.f32 %v853, %v1071
    %v1073 = vpop.f32.mrb[0].mxu0
    %1074 = vmatprep.mubr.f32.mxu0 0.0
    %1075 = vmatmul.mubr.f32.gmra.mrb[0].mxu0 %v357
    %v1076 = vpop.f32.mrb[0].mxu0
    %v1077 = vadd.f32 %v853, %v1076
    %v1078 = vpop.f32.mrb[0].mxu0
    %1079 = vmatprep.mubr.f32.mxu0 0.0
    %1080 = vmatmul.mubr.f32.gmra.mrb[0].mxu0 %v360
    %v1081 = vpop.f32.mrb[0].mxu0
    %v1082 = vadd.f32 %v853, %v1081
    %v1083 = vpop.f32.mrb[0].mxu0
    %1084 = vmatprep.mubr.f32.mxu0 0.0
    %1085 = vmatmul.mubr.f32.gmra.mrb[0].mxu0 %v363
    %v1086 = vpop.f32.mrb[0].mxu0
    %v1087 = vadd.f32 %v853, %v1086
    %v1088 = vpop.f32.mrb[0].mxu0
    %1089 = vmatprep.mubr.f32.mxu0 0.0
    %1090 = vmatmul.mubr.f32.gmra.mrb[0].mxu0 %v366
    %v1091 = vpop.f32.mrb[0].mxu0
    %v1092 = vadd.f32 %v853, %v1091
    %v1093 = vpop.f32.mrb[0].mxu0
    %1094 = vmatprep.mubr.f32.mxu0 0.0
    %1095 = vmatmul.mubr.f32.gmra.mrb[0].mxu0 %v369
    %v1096 = vpop.f32.mrb[0].mxu0
    %v1097 = vadd.f32 %v853, %v1096
    %v1098 = vpop.f32.mrb[0].mxu0
    %1099 = vmatprep.mubr.f32.mxu0 0.0
    %1100 = vmatmul.mubr.f32.gmra.mrb[0].mxu0 %v372
    %v1101 = vpop.f32.mrb[0].mxu0
    %v1102 = vadd.f32 %v853, %v1101
    %v1103 = vpop.f32.mrb[0].mxu0
    %1104 = vmatprep.mubr.f32.mxu0 0.0
    %1105 = vmatmul.mubr.f32.gmra.mrb[0].mxu0 %v375
    %v1106 = vpop.f32.mrb[0].mxu0
    %v1107 = vadd.f32 %v853, %v1106
    %v1108 = vpop.f32.mrb[0].mxu0
    %1109 = vmatprep.mubr.f32.mxu0 0.0
    %1110 = vmatmul.mubr.f32.gmra.mrb[0].mxu0 %v378
    %v1111 = vpop.f32.mrb[0].mxu0
    %v1112 = vadd.f32 %v853, %v1111
    %v1113 = vpop.f32.mrb[0].mxu0
    %1114 = vmatprep.mubr.f32.mxu0 0.0
    %1115 = vmatmul.mubr.f32.gmra.mrb[0].mxu0 %v381
    %v1116 = vpop.f32.mrb[0].mxu0
    %v1117 = vadd.f32 %v853, %v1116
    %v1118 = vpop.f32.mrb[0].mxu0
    %1119 = vmatprep.mubr.f32.mxu0 0.0
    %1120 = vmatmul.mubr.f32.gmra.mrb[0].mxu0 %v384
    %v1121 = vpop.f32.mrb[0].mxu0
    %v1122 = vadd.f32 %v853, %v1121
    %v1123 = vpop.f32.mrb[0].mxu0
    %1124 = vmatprep.mubr.f32.mxu0 0.0
    %1125 = vmatmul.mubr.f32.gmra.mrb[0].mxu0 %v387
    %v1126 = vpop.f32.mrb[0].mxu0
    %v1127 = vadd.f32 %v853, %v1126
    %v1128 = vpop.f32.mrb[0].mxu0
    %1129 = vmatprep.mubr.f32.mxu0 0.0
    %1130 = vmatmul.mubr.f32.gmra.mrb[0].mxu0 %v390
    %v1131 = vpop.f32.mrb[0].mxu0
    %v1132 = vadd.f32 %v853, %v1131
    %v1133 = vpop.f32.mrb[0].mxu0
    %1134 = vmatprep.mubr.f32.mxu0 0.0
    %1135 = vmatmul.mubr.f32.gmra.mrb[0].mxu0 %v393
    %v1136 = vpop.f32.mrb[0].mxu0
    %v1137 = vadd.f32 %v853, %v1136
    %v1138 = vpop.f32.mrb[0].mxu0
    %1139 = vmatprep.mubr.f32.mxu0 0.0
    %1140 = vmatmul.mubr.f32.gmra.mrb[0].mxu0 %v396
    %v1141 = vpop.f32.mrb[0].mxu0
    %v1142 = vadd.f32 %v853, %v1141
    %v1143 = vpop.f32.mrb[0].mxu0
    %1144 = vmatprep.mubr.f32.mxu0 0.0
    %1145 = vmatmul.mubr.f32.gmra.mrb[0].mxu0 %v399
    %v1146 = vpop.f32.mrb[0].mxu0
    %v1147 = vadd.f32 %v853, %v1146
    %v1148 = vpop.f32.mrb[0].mxu0
    %1149 = vmatprep.mubr.f32.mxu0 0.0
    %1150 = vmatmul.mubr.f32.gmra.mrb[0].mxu0 %v402
    %v1151 = vpop.f32.mrb[0].mxu0
    %v1152 = vadd.f32 %v853, %v1151
    %v1153 = vpop.f32.mrb[0].mxu0
    %1154 = vmatprep.mubr.f32.mxu0 0.0
    %1155 = vmatmul.mubr.f32.gmra.mrb[0].mxu0 %v405
    %v1156 = vpop.f32.mrb[0].mxu0
    %v1157 = vadd.f32 %v853, %v1156
    %v1158 = vpop.f32.mrb[0].mxu0
    %1159 = vmatprep.mubr.f32.mxu0 0.0
    %1160 = vmatmul.mubr.f32.gmra.mrb[0].mxu0 %v408
    %v1161 = vpop.f32.mrb[0].mxu0
    %v1162 = vadd.f32 %v853, %v1161
    %v1163 = vpop.f32.mrb[0].mxu0
    %1164 = vmatprep.mubr.f32.mxu0 0.0
    %1165 = vmatmul.mubr.f32.gmra.mrb[0].mxu0 %v411
    %v1166 = vpop.f32.mrb[0].mxu0
    %v1167 = vadd.f32 %v853, %v1166
    %v1168 = vpop.f32.mrb[0].mxu0
    %1169 = vmatprep.mubr.f32.mxu0 0.0
    %1170 = vmatmul.mubr.f32.gmra.mrb[0].mxu0 %v414
    %v1171 = vpop.f32.mrb[0].mxu0
    %v1172 = vadd.f32 %v853, %v1171
    %v1173 = vpop.f32.mrb[0].mxu0
    %1174 = vmatprep.mubr.f32.mxu0 0.0
    %1175 = vmatmul.mubr.f32.gmra.mrb[0].mxu0 %v417
    %v1176 = vpop.f32.mrb[0].mxu0
    %v1177 = vadd.f32 %v853, %v1176
    %v1178 = vpop.f32.mrb[0].mxu0
    %1179 = vmatprep.mubr.f32.mxu0 0.0
    %1180 = vmatmul.mubr.f32.gmra.mrb[0].mxu0 %v420
    %v1181 = vpop.f32.mrb[0].mxu0
    %v1182 = vadd.f32 %v853, %v1181
    %v1183 = vpop.f32.mrb[0].mxu0
    %1184 = vmatprep.mubr.f32.mxu0 0.0
    %1185 = vmatmul.mubr.f32.gmra.mrb[0].mxu0 %v423
    %v1186 = vpop.f32.mrb[0].mxu0
    %v1187 = vadd.f32 %v853, %v1186
    %v1188 = vpop.f32.mrb[0].mxu0
    %1189 = vmatprep.mubr.f32.mxu0 0.0
    %1190 = vmatmul.mubr.f32.gmra.mrb[0].mxu0 %v426
    %v1191 = vpop.f32.mrb[0].mxu0
    %v1192 = vadd.f32 %v853, %v1191
    %v1193 = vpop.f32.mrb[0].mxu0
    %1194 = vmatprep.mubr.f32.mxu0 0.0
    %1195 = vmatmul.mubr.f32.gmra.mrb[0].mxu0 %v429
    %v1196 = vpop.f32.mrb[0].mxu0
    %v1197 = vadd.f32 %v853, %v1196
    %v1198 = vpop.f32.mrb[0].mxu0
    %1199 = vmatprep.mubr.f32.mxu0 0.0
    %1200 = vmatmul.mubr.f32.gmra.mrb[0].mxu0 %v432
    %v1201 = vpop.f32.mrb[0].mxu0
    %v1202 = vadd.f32 %v853, %v1201
    %v1203 = vpop.f32.mrb[0].mxu0
    %1204 = vmatprep.mubr.f32.mxu0 0.0
    %1205 = vmatmul.mubr.f32.gmra.mrb[0].mxu0 %v435
    %v1206 = vpop.f32.mrb[0].mxu0
    %v1207 = vadd.f32 %v853, %v1206
    %v1208 = vpop.f32.mrb[0].mxu0
    %1209 = vmatprep.mubr.f32.mxu0 0.0
    %1210 = vmatmul.mubr.f32.gmra.mrb[0].mxu0 %v438
    %v1211 = vpop.f32.mrb[0].mxu0
    %v1212 = vadd.f32 %v853, %v1211
    %v1213 = vpop.f32.mrb[0].mxu0
    %1214 = vmatprep.mubr.f32.mxu0 0.0
    %1215 = vmatmul.mubr.f32.gmra.mrb[0].mxu0 %v441
    %v1216 = vpop.f32.mrb[0].mxu0
    %v1217 = vadd.f32 %v853, %v1216
    %v1218 = vpop.f32.mrb[0].mxu0
    %1219 = vmatprep.mubr.f32.mxu0 0.0
    %1220 = vmatmul.mubr.f32.gmra.mrb[0].mxu0 %v444
    %v1221 = vpop.f32.mrb[0].mxu0
    %v1222 = vadd.f32 %v853, %v1221
    %v1223 = vpop.f32.mrb[0].mxu0
    %1224 = vmatprep.mubr.f32.mxu0 0.0
    %1225 = vmatmul.mubr.f32.gmra.mrb[0].mxu0 %v447
    %v1226 = vpop.f32.mrb[0].mxu0
    %v1227 = vadd.f32 %v853, %v1226
    %v1228 = vpop.f32.mrb[0].mxu0
    %1229 = vmatprep.mubr.f32.mxu0 0.0
    %1230 = vmatmul.mubr.f32.gmra.mrb[0].mxu0 %v450
    %v1231 = vpop.f32.mrb[0].mxu0
    %v1232 = vadd.f32 %v853, %v1231
    %v1233 = vpop.f32.mrb[0].mxu0
    %1234 = vmatprep.mubr.f32.mxu0 0.0
    %1235 = vmatmul.mubr.f32.gmra.mrb[0].mxu0 %v453
    %v1236 = vpop.f32.mrb[0].mxu0
    %v1237 = vadd.f32 %v853, %v1236
    %v1238 = vpop.f32.mrb[0].mxu0
    %1239 = vdwg.mxu0
    %v1240 = vmul.f32 %v922, 0.5
    %v1241 = vmul.f32 %v927, 0.5
    %v1242 = vmul.f32 %v932, 0.5
    %v1243 = vmul.f32 %v937, 0.5
    %v1244 = vmul.f32 %v942, 0.5
    %v1245 = vmul.f32 %v947, 0.5
    %v1246 = vmul.f32 %v952, 0.5
    %v1247 = vmul.f32 %v957, 0.5
    %v1248 = vmul.f32 %v962, 0.5
    %v1249 = vmul.f32 %v967, 0.5
    %v1250 = vmul.f32 %v972, 0.5
    %v1251 = vmul.f32 %v977, 0.5
    %v1252 = vmul.f32 %v982, 0.5
    %v1253 = vmul.f32 %v987, 0.5
    %v1254 = vmul.f32 %v992, 0.5
    %v1255 = vmul.f32 %v997, 0.5
    %v1256 = vmul.f32 %v1002, 0.5
    %v1257 = vmul.f32 %v1007, 0.5
    %v1258 = vmul.f32 %v1012, 0.5
    %v1259 = vmul.f32 %v1017, 0.5
    %v1260 = vmul.f32 %v1022, 0.5
    %v1261 = vmul.f32 %v1027, 0.5
    %v1262 = vmul.f32 %v1032, 0.5
    %v1263 = vmul.f32 %v1037, 0.5
    %v1264 = vmul.f32 %v1042, 0.5
    %v1265 = vmul.f32 %v1047, 0.5
    %v1266 = vmul.f32 %v1052, 0.5
    %v1267 = vmul.f32 %v1057, 0.5
    %v1268 = vmul.f32 %v1062, 0.5
    %v1269 = vmul.f32 %v1067, 0.5
    %v1270 = vmul.f32 %v1072, 0.5
    %v1271 = vmul.f32 %v1077, 0.5
    %v1272 = vmul.f32 %v1082, 0.5
    %v1273 = vmul.f32 %v1087, 0.5
    %v1274 = vmul.f32 %v1092, 0.5
    %v1275 = vmul.f32 %v1097, 0.5
    %v1276 = vmul.f32 %v1102, 0.5
    %v1277 = vmul.f32 %v1107, 0.5
    %v1278 = vmul.f32 %v1112, 0.5
    %v1279 = vmul.f32 %v1117, 0.5
    %v1280 = vmul.f32 %v1122, 0.5
    %v1281 = vmul.f32 %v1127, 0.5
    %v1282 = vmul.f32 %v1132, 0.5
    %v1283 = vmul.f32 %v1137, 0.5
    %v1284 = vmul.f32 %v1142, 0.5
    %v1285 = vmul.f32 %v1147, 0.5
    %v1286 = vmul.f32 %v1152, 0.5
    %v1287 = vmul.f32 %v1157, 0.5
    %v1288 = vmul.f32 %v1162, 0.5
    %v1289 = vmul.f32 %v1167, 0.5
    %v1290 = vmul.f32 %v1172, 0.5
    %v1291 = vmul.f32 %v1177, 0.5
    %v1292 = vmul.f32 %v1182, 0.5
    %v1293 = vmul.f32 %v1187, 0.5
    %v1294 = vmul.f32 %v1192, 0.5
    %v1295 = vmul.f32 %v1197, 0.5
    %v1296 = vmul.f32 %v1202, 0.5
    %v1297 = vmul.f32 %v1207, 0.5
    %v1298 = vmul.f32 %v1212, 0.5
    %v1299 = vmul.f32 %v1217, 0.5
    %v1300 = vmul.f32 %v1222, 0.5
    %v1301 = vmul.f32 %v1227, 0.5
    %v1302 = vmul.f32 %v1232, 0.5
    %v1303 = vmul.f32 %v1237, 0.5
    %v1304 = vmul.f32 %v1240, 1.442695
    %v1305 = vpow.pop %v1304
    %v1306 = vmul.f32 %v1241, 1.442695
    %v1307 = vpow.pop %v1306
    %v1308 = vmul.f32 %v1242, 1.442695
    %v1309 = vpow.pop %v1308
    %v1310 = vmul.f32 %v1243, 1.442695
    %v1311 = vpow.pop %v1310
    %v1312 = vmul.f32 %v1244, 1.442695
    %v1313 = vpow.pop %v1312
    %v1314 = vmul.f32 %v1245, 1.442695
    %v1315 = vpow.pop %v1314
    %v1316 = vmul.f32 %v1246, 1.442695
    %v1317 = vpow.pop %v1316
    %v1318 = vmul.f32 %v1247, 1.442695
    %v1319 = vpow.pop %v1318
    %v1320 = vmul.f32 %v1248, 1.442695
    %v1321 = vpow.pop %v1320
    %v1322 = vmul.f32 %v1249, 1.442695
    %v1323 = vpow.pop %v1322
    %v1324 = vmul.f32 %v1250, 1.442695
    %v1325 = vpow.pop %v1324
    %v1326 = vmul.f32 %v1251, 1.442695
    %v1327 = vpow.pop %v1326
    %v1328 = vmul.f32 %v1252, 1.442695
    %v1329 = vpow.pop %v1328
    %v1330 = vmul.f32 %v1253, 1.442695
    %v1331 = vpow.pop %v1330
    %v1332 = vmul.f32 %v1254, 1.442695
    %v1333 = vpow.pop %v1332
    %v1334 = vmul.f32 %v1255, 1.442695
    %v1335 = vpow.pop %v1334
    %v1336 = vmul.f32 %v1256, 1.442695
    %v1337 = vpow.pop %v1336
    %v1338 = vmul.f32 %v1257, 1.442695
    %v1339 = vpow.pop %v1338
    %v1340 = vmul.f32 %v1258, 1.442695
    %v1341 = vpow.pop %v1340
    %v1342 = vmul.f32 %v1259, 1.442695
    %v1343 = vpow.pop %v1342
    %v1344 = vmul.f32 %v1260, 1.442695
    %v1345 = vpow.pop %v1344
    %v1346 = vmul.f32 %v1261, 1.442695
    %v1347 = vpow.pop %v1346
    %v1348 = vmul.f32 %v1262, 1.442695
    %v1349 = vpow.pop %v1348
    %v1350 = vmul.f32 %v1263, 1.442695
    %v1351 = vpow.pop %v1350
    %v1352 = vmul.f32 %v1264, 1.442695
    %v1353 = vpow.pop %v1352
    %v1354 = vmul.f32 %v1265, 1.442695
    %v1355 = vpow.pop %v1354
    %v1356 = vmul.f32 %v1266, 1.442695
    %v1357 = vpow.pop %v1356
    %v1358 = vmul.f32 %v1267, 1.442695
    %v1359 = vpow.pop %v1358
    %v1360 = vmul.f32 %v1268, 1.442695
    %v1361 = vpow.pop %v1360
    %v1362 = vmul.f32 %v1269, 1.442695
    %v1363 = vpow.pop %v1362
    %v1364 = vmul.f32 %v1270, 1.442695
    %v1365 = vpow.pop %v1364
    %v1366 = vmul.f32 %v1271, 1.442695
    %v1367 = vpow.pop %v1366
    %v1368 = vmul.f32 %v1272, 1.442695
    %v1369 = vpow.pop %v1368
    %v1370 = vmul.f32 %v1273, 1.442695
    %v1371 = vpow.pop %v1370
    %v1372 = vmul.f32 %v1274, 1.442695
    %v1373 = vpow.pop %v1372
    %v1374 = vmul.f32 %v1275, 1.442695
    %v1375 = vpow.pop %v1374
    %v1376 = vmul.f32 %v1276, 1.442695
    %v1377 = vpow.pop %v1376
    %v1378 = vmul.f32 %v1277, 1.442695
    %v1379 = vpow.pop %v1378
    %v1380 = vmul.f32 %v1278, 1.442695
    %v1381 = vpow.pop %v1380
    %v1382 = vmul.f32 %v1279, 1.442695
    %v1383 = vpow.pop %v1382
    %v1384 = vmul.f32 %v1280, 1.442695
    %v1385 = vpow.pop %v1384
    %v1386 = vmul.f32 %v1281, 1.442695
    %v1387 = vpow.pop %v1386
    %v1388 = vmul.f32 %v1282, 1.442695
    %v1389 = vpow.pop %v1388
    %v1390 = vmul.f32 %v1283, 1.442695
    %v1391 = vpow.pop %v1390
    %v1392 = vmul.f32 %v1284, 1.442695
    %v1393 = vpow.pop %v1392
    %v1394 = vmul.f32 %v1285, 1.442695
    %v1395 = vpow.pop %v1394
    %v1396 = vmul.f32 %v1286, 1.442695
    %v1397 = vpow.pop %v1396
    %v1398 = vmul.f32 %v1287, 1.442695
    %v1399 = vpow.pop %v1398
    %v1400 = vmul.f32 %v1288, 1.442695
    %v1401 = vpow.pop %v1400
    %v1402 = vmul.f32 %v1289, 1.442695
    %v1403 = vpow.pop %v1402
    %v1404 = vmul.f32 %v1290, 1.442695
    %v1405 = vpow.pop %v1404
    %v1406 = vmul.f32 %v1291, 1.442695
    %v1407 = vpow.pop %v1406
    %v1408 = vmul.f32 %v1292, 1.442695
    %v1409 = vpow.pop %v1408
    %v1410 = vmul.f32 %v1293, 1.442695
    %v1411 = vpow.pop %v1410
    %v1412 = vmul.f32 %v1294, 1.442695
    %v1413 = vpow.pop %v1412
    %v1414 = vmul.f32 %v1295, 1.442695
    %v1415 = vpow.pop %v1414
    %v1416 = vmul.f32 %v1296, 1.442695
    %v1417 = vpow.pop %v1416
    %v1418 = vmul.f32 %v1297, 1.442695
    %v1419 = vpow.pop %v1418
    %v1420 = vmul.f32 %v1298, 1.442695
    %v1421 = vpow.pop %v1420
    %v1422 = vmul.f32 %v1299, 1.442695
    %v1423 = vpow.pop %v1422
    %v1424 = vmul.f32 %v1300, 1.442695
    %v1425 = vpow.pop %v1424
    %v1426 = vmul.f32 %v1301, 1.442695
    %v1427 = vpow.pop %v1426
    %v1428 = vmul.f32 %v1302, 1.442695
    %v1429 = vpow.pop %v1428
    %v1430 = vmul.f32 %v1303, 1.442695
    %v1431 = vpow.pop %v1430
    %v1432 = vld [vmem:[%s9] sm:$0xff]
    %v1433 = vld [vmem:[%s9 + $0x8] sm:$0xff]
    %v1434 = vld [vmem:[%s9 + $0x10] sm:$0xff]
    %v1435 = vld [vmem:[%s9 + $0x18] sm:$0xff]
    %v1436 = vld [vmem:[%s9 + $0x20] sm:$0xff]
    %v1437 = vld [vmem:[%s9 + $0x28] sm:$0xff]
    %v1438 = vld [vmem:[%s9 + $0x30] sm:$0xff]
    %v1439 = vld [vmem:[%s9 + $0x38] sm:$0xff]
    %v1440 = vld [vmem:[%s9 + $0x40] sm:$0xff]
    %v1441 = vld [vmem:[%s9 + $0x48] sm:$0xff]
    %v1442 = vld [vmem:[%s9 + $0x50] sm:$0xff]
    %v1443 = vld [vmem:[%s9 + $0x58] sm:$0xff]
    %v1444 = vld [vmem:[%s9 + $0x60] sm:$0xff]
    %v1445 = vld [vmem:[%s9 + $0x68] sm:$0xff]
    %v1446 = vld [vmem:[%s9 + $0x70] sm:$0xff]
    %v1447 = vld [vmem:[%s9 + $0x78] sm:$0xff]
    %v1448 = vld [vmem:[%s9 + $0x80] sm:$0xff]
    %v1449 = vld [vmem:[%s9 + $0x88] sm:$0xff]
    %v1450 = vld [vmem:[%s9 + $0x90] sm:$0xff]
    %v1451 = vld [vmem:[%s9 + $0x98] sm:$0xff]
    %v1452 = vld [vmem:[%s9 + $0xa0] sm:$0xff]
    %v1453 = vld [vmem:[%s9 + $0xa8] sm:$0xff]
    %v1454 = vld [vmem:[%s9 + $0xb0] sm:$0xff]
    %v1455 = vld [vmem:[%s9 + $0xb8] sm:$0xff]
    %v1456 = vld [vmem:[%s9 + $0xc0] sm:$0xff]
    %v1457 = vld [vmem:[%s9 + $0xc8] sm:$0xff]
    %v1458 = vld [vmem:[%s9 + $0xd0] sm:$0xff]
    %v1459 = vld [vmem:[%s9 + $0xd8] sm:$0xff]
    %v1460 = vld [vmem:[%s9 + $0xe0] sm:$0xff]
    %v1461 = vld [vmem:[%s9 + $0xe8] sm:$0xff]
    %v1462 = vld [vmem:[%s9 + $0xf0] sm:$0xff]
    %v1463 = vld [vmem:[%s9 + $0xf8] sm:$0xff]
    %v1464 = vld [vmem:[%s9 + $0x100] sm:$0xff]
    %v1465 = vld [vmem:[%s9 + $0x108] sm:$0xff]
    %v1466 = vld [vmem:[%s9 + $0x110] sm:$0xff]
    %v1467 = vld [vmem:[%s9 + $0x118] sm:$0xff]
    %v1468 = vld [vmem:[%s9 + $0x120] sm:$0xff]
    %v1469 = vld [vmem:[%s9 + $0x128] sm:$0xff]
    %v1470 = vld [vmem:[%s9 + $0x130] sm:$0xff]
    %v1471 = vld [vmem:[%s9 + $0x138] sm:$0xff]
    %v1472 = vld [vmem:[%s9 + $0x140] sm:$0xff]
    %v1473 = vld [vmem:[%s9 + $0x148] sm:$0xff]
    %v1474 = vld [vmem:[%s9 + $0x150] sm:$0xff]
    %v1475 = vld [vmem:[%s9 + $0x158] sm:$0xff]
    %v1476 = vld [vmem:[%s9 + $0x160] sm:$0xff]
    %v1477 = vld [vmem:[%s9 + $0x168] sm:$0xff]
    %v1478 = vld [vmem:[%s9 + $0x170] sm:$0xff]
    %v1479 = vld [vmem:[%s9 + $0x178] sm:$0xff]
    %v1480 = vld [vmem:[%s9 + $0x180] sm:$0xff]
    %v1481 = vld [vmem:[%s9 + $0x188] sm:$0xff]
    %v1482 = vld [vmem:[%s9 + $0x190] sm:$0xff]
    %v1483 = vld [vmem:[%s9 + $0x198] sm:$0xff]
    %v1484 = vld [vmem:[%s9 + $0x1a0] sm:$0xff]
    %v1485 = vld [vmem:[%s9 + $0x1a8] sm:$0xff]
    %v1486 = vld [vmem:[%s9 + $0x1b0] sm:$0xff]
    %v1487 = vld [vmem:[%s9 + $0x1b8] sm:$0xff]
    %v1488 = vld [vmem:[%s9 + $0x1c0] sm:$0xff]
    %v1489 = vld [vmem:[%s9 + $0x1c8] sm:$0xff]
    %v1490 = vld [vmem:[%s9 + $0x1d0] sm:$0xff]
    %v1491 = vld [vmem:[%s9 + $0x1d8] sm:$0xff]
    %v1492 = vld [vmem:[%s9 + $0x1e0] sm:$0xff]
    %v1493 = vld [vmem:[%s9 + $0x1e8] sm:$0xff]
    %v1494 = vld [vmem:[%s9 + $0x1f0] sm:$0xff]
    %v1495 = vld [vmem:[%s9 + $0x1f8] sm:$0xff]
    %v1496 = vmul.f32 %v1305, %v1432
    %v1497 = vmul.f32 %v1307, %v1433
    %v1498 = vmul.f32 %v1309, %v1434
    %v1499 = vmul.f32 %v1311, %v1435
    %v1500 = vmul.f32 %v1313, %v1436
    %v1501 = vmul.f32 %v1315, %v1437
    %v1502 = vmul.f32 %v1317, %v1438
    %v1503 = vmul.f32 %v1319, %v1439
    %v1504 = vmul.f32 %v1321, %v1440
    %v1505 = vmul.f32 %v1323, %v1441
    %v1506 = vmul.f32 %v1325, %v1442
    %v1507 = vmul.f32 %v1327, %v1443
    %v1508 = vmul.f32 %v1329, %v1444
    %v1509 = vmul.f32 %v1331, %v1445
    %v1510 = vmul.f32 %v1333, %v1446
    %v1511 = vmul.f32 %v1335, %v1447
    %v1512 = vmul.f32 %v1337, %v1448
    %v1513 = vmul.f32 %v1339, %v1449
    %v1514 = vmul.f32 %v1341, %v1450
    %v1515 = vmul.f32 %v1343, %v1451
    %v1516 = vmul.f32 %v1345, %v1452
    %v1517 = vmul.f32 %v1347, %v1453
    %v1518 = vmul.f32 %v1349, %v1454
    %v1519 = vmul.f32 %v1351, %v1455
    %v1520 = vmul.f32 %v1353, %v1456
    %v1521 = vmul.f32 %v1355, %v1457
    %v1522 = vmul.f32 %v1357, %v1458
    %v1523 = vmul.f32 %v1359, %v1459
    %v1524 = vmul.f32 %v1361, %v1460
    %v1525 = vmul.f32 %v1363, %v1461
    %v1526 = vmul.f32 %v1365, %v1462
    %v1527 = vmul.f32 %v1367, %v1463
    %v1528 = vmul.f32 %v1369, %v1464
    %v1529 = vmul.f32 %v1371, %v1465
    %v1530 = vmul.f32 %v1373, %v1466
    %v1531 = vmul.f32 %v1375, %v1467
    %v1532 = vmul.f32 %v1377, %v1468
    %v1533 = vmul.f32 %v1379, %v1469
    %v1534 = vmul.f32 %v1381, %v1470
    %v1535 = vmul.f32 %v1383, %v1471
    %v1536 = vmul.f32 %v1385, %v1472
    %v1537 = vmul.f32 %v1387, %v1473
    %v1538 = vmul.f32 %v1389, %v1474
    %v1539 = vmul.f32 %v1391, %v1475
    %v1540 = vmul.f32 %v1393, %v1476
    %v1541 = vmul.f32 %v1395, %v1477
    %v1542 = vmul.f32 %v1397, %v1478
    %v1543 = vmul.f32 %v1399, %v1479
    %v1544 = vmul.f32 %v1401, %v1480
    %v1545 = vmul.f32 %v1403, %v1481
    %v1546 = vmul.f32 %v1405, %v1482
    %v1547 = vmul.f32 %v1407, %v1483
    %v1548 = vmul.f32 %v1409, %v1484
    %v1549 = vmul.f32 %v1411, %v1485
    %v1550 = vmul.f32 %v1413, %v1486
    %v1551 = vmul.f32 %v1415, %v1487
    %v1552 = vmul.f32 %v1417, %v1488
    %v1553 = vmul.f32 %v1419, %v1489
    %v1554 = vmul.f32 %v1421, %v1490
    %v1555 = vmul.f32 %v1423, %v1491
    %v1556 = vmul.f32 %v1425, %v1492
    %v1557 = vmul.f32 %v1427, %v1493
    %v1558 = vmul.f32 %v1429, %v1494
    %v1559 = vmul.f32 %v1431, %v1495
    %v1560 = vadd.f32 %v522, %v1496
    %v1561 = vadd.f32 %v527, %v1497
    %v1562 = vadd.f32 %v532, %v1498
    %v1563 = vadd.f32 %v537, %v1499
    %v1564 = vadd.f32 %v542, %v1500
    %v1565 = vadd.f32 %v547, %v1501
    %v1566 = vadd.f32 %v552, %v1502
    %v1567 = vadd.f32 %v557, %v1503
    %v1568 = vadd.f32 %v562, %v1504
    %v1569 = vadd.f32 %v567, %v1505
    %v1570 = vadd.f32 %v572, %v1506
    %v1571 = vadd.f32 %v577, %v1507
    %v1572 = vadd.f32 %v582, %v1508
    %v1573 = vadd.f32 %v587, %v1509
    %v1574 = vadd.f32 %v592, %v1510
    %v1575 = vadd.f32 %v597, %v1511
    %v1576 = vadd.f32 %v602, %v1512
    %v1577 = vadd.f32 %v607, %v1513
    %v1578 = vadd.f32 %v612, %v1514
    %v1579 = vadd.f32 %v617, %v1515
    %v1580 = vadd.f32 %v622, %v1516
    %v1581 = vadd.f32 %v627, %v1517
    %v1582 = vadd.f32 %v632, %v1518
    %v1583 = vadd.f32 %v637, %v1519
    %v1584 = vadd.f32 %v642, %v1520
    %v1585 = vadd.f32 %v647, %v1521
    %v1586 = vadd.f32 %v652, %v1522
    %v1587 = vadd.f32 %v657, %v1523
    %v1588 = vadd.f32 %v662, %v1524
    %v1589 = vadd.f32 %v667, %v1525
    %v1590 = vadd.f32 %v672, %v1526
    %v1591 = vadd.f32 %v677, %v1527
    %v1592 = vadd.f32 %v682, %v1528
    %v1593 = vadd.f32 %v687, %v1529
    %v1594 = vadd.f32 %v692, %v1530
    %v1595 = vadd.f32 %v697, %v1531
    %v1596 = vadd.f32 %v702, %v1532
    %v1597 = vadd.f32 %v707, %v1533
    %v1598 = vadd.f32 %v712, %v1534
    %v1599 = vadd.f32 %v717, %v1535
    %v1600 = vadd.f32 %v722, %v1536
    %v1601 = vadd.f32 %v727, %v1537
    %v1602 = vadd.f32 %v732, %v1538
    %v1603 = vadd.f32 %v737, %v1539
    %v1604 = vadd.f32 %v742, %v1540
    %v1605 = vadd.f32 %v747, %v1541
    %v1606 = vadd.f32 %v752, %v1542
    %v1607 = vadd.f32 %v757, %v1543
    %v1608 = vadd.f32 %v762, %v1544
    %v1609 = vadd.f32 %v767, %v1545
    %v1610 = vadd.f32 %v772, %v1546
    %v1611 = vadd.f32 %v777, %v1547
    %v1612 = vadd.f32 %v782, %v1548
    %v1613 = vadd.f32 %v787, %v1549
    %v1614 = vadd.f32 %v792, %v1550
    %v1615 = vadd.f32 %v797, %v1551
    %v1616 = vadd.f32 %v802, %v1552
    %v1617 = vadd.f32 %v807, %v1553
    %v1618 = vadd.f32 %v812, %v1554
    %v1619 = vadd.f32 %v817, %v1555
    %v1620 = vadd.f32 %v822, %v1556
    %v1621 = vadd.f32 %v827, %v1557
    %v1622 = vadd.f32 %v832, %v1558
    %v1623 = vadd.f32 %v837, %v1559
    %1624 = vst.msk [vmem:[#allocation4] sm:$0xff] %vm262, %v522
    %1625 = vst.msk [vmem:[#allocation4 + $0x8] sm:$0xff] %vm262, %v527
    %1626 = vst.msk [vmem:[#allocation4 + $0x10] sm:$0xff] %vm262, %v532
    %1627 = vst.msk [vmem:[#allocation4 + $0x18] sm:$0xff] %vm262, %v537
    %1628 = vst.msk [vmem:[#allocation4 + $0x20] sm:$0xff] %vm262, %v542
    %1629 = vst.msk [vmem:[#allocation4 + $0x28] sm:$0xff] %vm262, %v547
    %1630 = vst.msk [vmem:[#allocation4 + $0x30] sm:$0xff] %vm262, %v552
    %1631 = vst.msk [vmem:[#allocation4 + $0x38] sm:$0xff] %vm262, %v557
    %1632 = vst.msk [vmem:[#allocation4 + $0x40] sm:$0xff] %vm262, %v562
    %1633 = vst.msk [vmem:[#allocation4 + $0x48] sm:$0xff] %vm262, %v567
    %1634 = vst.msk [vmem:[#allocation4 + $0x50] sm:$0xff] %vm262, %v572
    %1635 = vst.msk [vmem:[#allocation4 + $0x58] sm:$0xff] %vm262, %v577
    %1636 = vst.msk [vmem:[#allocation4 + $0x60] sm:$0xff] %vm262, %v582
    %1637 = vst.msk [vmem:[#allocation4 + $0x68] sm:$0xff] %vm262, %v587
    %1638 = vst.msk [vmem:[#allocation4 + $0x70] sm:$0xff] %vm262, %v592
    %1639 = vst.msk [vmem:[#allocation4 + $0x78] sm:$0xff] %vm262, %v597
    %1640 = vst.msk [vmem:[#allocation4 + $0x80] sm:$0xff] %vm262, %v602
    %1641 = vst.msk [vmem:[#allocation4 + $0x88] sm:$0xff] %vm262, %v607
    %1642 = vst.msk [vmem:[#allocation4 + $0x90] sm:$0xff] %vm262, %v612
    %1643 = vst.msk [vmem:[#allocation4 + $0x98] sm:$0xff] %vm262, %v617
    %1644 = vst.msk [vmem:[#allocation4 + $0xa0] sm:$0xff] %vm262, %v622
    %1645 = vst.msk [vmem:[#allocation4 + $0xa8] sm:$0xff] %vm262, %v627
    %1646 = vst.msk [vmem:[#allocation4 + $0xb0] sm:$0xff] %vm262, %v632
    %1647 = vst.msk [vmem:[#allocation4 + $0xb8] sm:$0xff] %vm262, %v637
    %1648 = vst.msk [vmem:[#allocation4 + $0xc0] sm:$0xff] %vm262, %v642
    %1649 = vst.msk [vmem:[#allocation4 + $0xc8] sm:$0xff] %vm262, %v647
    %1650 = vst.msk [vmem:[#allocation4 + $0xd0] sm:$0xff] %vm262, %v652
    %1651 = vst.msk [vmem:[#allocation4 + $0xd8] sm:$0xff] %vm262, %v657
    %1652 = vst.msk [vmem:[#allocation4 + $0xe0] sm:$0xff] %vm262, %v662
    %1653 = vst.msk [vmem:[#allocation4 + $0xe8] sm:$0xff] %vm262, %v667
    %1654 = vst.msk [vmem:[#allocation4 + $0xf0] sm:$0xff] %vm262, %v672
    %1655 = vst.msk [vmem:[#allocation4 + $0xf8] sm:$0xff] %vm262, %v677
    %1656 = vst.msk [vmem:[#allocation4 + $0x100] sm:$0xff] %vm262, %v682
    %1657 = vst.msk [vmem:[#allocation4 + $0x108] sm:$0xff] %vm262, %v687
    %1658 = vst.msk [vmem:[#allocation4 + $0x110] sm:$0xff] %vm262, %v692
    %1659 = vst.msk [vmem:[#allocation4 + $0x118] sm:$0xff] %vm262, %v697
    %1660 = vst.msk [vmem:[#allocation4 + $0x120] sm:$0xff] %vm262, %v702
    %1661 = vst.msk [vmem:[#allocation4 + $0x128] sm:$0xff] %vm262, %v707
    %1662 = vst.msk [vmem:[#allocation4 + $0x130] sm:$0xff] %vm262, %v712
    %1663 = vst.msk [vmem:[#allocation4 + $0x138] sm:$0xff] %vm262, %v717
    %1664 = vst.msk [vmem:[#allocation4 + $0x140] sm:$0xff] %vm262, %v722
    %1665 = vst.msk [vmem:[#allocation4 + $0x148] sm:$0xff] %vm262, %v727
    %1666 = vst.msk [vmem:[#allocation4 + $0x150] sm:$0xff] %vm262, %v732
    %1667 = vst.msk [vmem:[#allocation4 + $0x158] sm:$0xff] %vm262, %v737
    %1668 = vst.msk [vmem:[#allocation4 + $0x160] sm:$0xff] %vm262, %v742
    %1669 = vst.msk [vmem:[#allocation4 + $0x168] sm:$0xff] %vm262, %v747
    %1670 = vst.msk [vmem:[#allocation4 + $0x170] sm:$0xff] %vm262, %v752
    %1671 = vst.msk [vmem:[#allocation4 + $0x178] sm:$0xff] %vm262, %v757
    %1672 = vst.msk [vmem:[#allocation4 + $0x180] sm:$0xff] %vm262, %v762
    %1673 = vst.msk [vmem:[#allocation4 + $0x188] sm:$0xff] %vm262, %v767
    %1674 = vst.msk [vmem:[#allocation4 + $0x190] sm:$0xff] %vm262, %v772
    %1675 = vst.msk [vmem:[#allocation4 + $0x198] sm:$0xff] %vm262, %v777
    %1676 = vst.msk [vmem:[#allocation4 + $0x1a0] sm:$0xff] %vm262, %v782
    %1677 = vst.msk [vmem:[#allocation4 + $0x1a8] sm:$0xff] %vm262, %v787
    %1678 = vst.msk [vmem:[#allocation4 + $0x1b0] sm:$0xff] %vm262, %v792
    %1679 = vst.msk [vmem:[#allocation4 + $0x1b8] sm:$0xff] %vm262, %v797
    %1680 = vst.msk [vmem:[#allocation4 + $0x1c0] sm:$0xff] %vm262, %v802
    %1681 = vst.msk [vmem:[#allocation4 + $0x1c8] sm:$0xff] %vm262, %v807
    %1682 = vst.msk [vmem:[#allocation4 + $0x1d0] sm:$0xff] %vm262, %v812
    %1683 = vst.msk [vmem:[#allocation4 + $0x1d8] sm:$0xff] %vm262, %v817
    %1684 = vst.msk [vmem:[#allocation4 + $0x1e0] sm:$0xff] %vm262, %v822
    %1685 = vst.msk [vmem:[#allocation4 + $0x1e8] sm:$0xff] %vm262, %v827
    %1686 = vst.msk [vmem:[#allocation4 + $0x1f0] sm:$0xff] %vm262, %v832
    %1687 = vst.msk [vmem:[#allocation4 + $0x1f8] sm:$0xff] %vm262, %v837
    %1688 = vst.msk [vmem:[#allocation6] sm:$0xff] %vm262, %v1305
    %1689 = vst.msk [vmem:[#allocation6 + $0x8] sm:$0xff] %vm262, %v1307
    %1690 = vst.msk [vmem:[#allocation6 + $0x10] sm:$0xff] %vm262, %v1309
    %1691 = vst.msk [vmem:[#allocation6 + $0x18] sm:$0xff] %vm262, %v1311
    %1692 = vst.msk [vmem:[#allocation6 + $0x20] sm:$0xff] %vm262, %v1313
    %1693 = vst.msk [vmem:[#allocation6 + $0x28] sm:$0xff] %vm262, %v1315
    %1694 = vst.msk [vmem:[#allocation6 + $0x30] sm:$0xff] %vm262, %v1317
    %1695 = vst.msk [vmem:[#allocation6 + $0x38] sm:$0xff] %vm262, %v1319
    %1696 = vst.msk [vmem:[#allocation6 + $0x40] sm:$0xff] %vm262, %v1321
    %1697 = vst.msk [vmem:[#allocation6 + $0x48] sm:$0xff] %vm262, %v1323
    %1698 = vst.msk [vmem:[#allocation6 + $0x50] sm:$0xff] %vm262, %v1325
    %1699 = vst.msk [vmem:[#allocation6 + $0x58] sm:$0xff] %vm262, %v1327
    %1700 = vst.msk [vmem:[#allocation6 + $0x60] sm:$0xff] %vm262, %v1329
    %1701 = vst.msk [vmem:[#allocation6 + $0x68] sm:$0xff] %vm262, %v1331
    %1702 = vst.msk [vmem:[#allocation6 + $0x70] sm:$0xff] %vm262, %v1333
    %1703 = vst.msk [vmem:[#allocation6 + $0x78] sm:$0xff] %vm262, %v1335
    %1704 = vst.msk [vmem:[#allocation6 + $0x80] sm:$0xff] %vm262, %v1337
    %1705 = vst.msk [vmem:[#allocation6 + $0x88] sm:$0xff] %vm262, %v1339
    %1706 = vst.msk [vmem:[#allocation6 + $0x90] sm:$0xff] %vm262, %v1341
    %1707 = vst.msk [vmem:[#allocation6 + $0x98] sm:$0xff] %vm262, %v1343
    %1708 = vst.msk [vmem:[#allocation6 + $0xa0] sm:$0xff] %vm262, %v1345
    %1709 = vst.msk [vmem:[#allocation6 + $0xa8] sm:$0xff] %vm262, %v1347
    %1710 = vst.msk [vmem:[#allocation6 + $0xb0] sm:$0xff] %vm262, %v1349
    %1711 = vst.msk [vmem:[#allocation6 + $0xb8] sm:$0xff] %vm262, %v1351
    %1712 = vst.msk [vmem:[#allocation6 + $0xc0] sm:$0xff] %vm262, %v1353
    %1713 = vst.msk [vmem:[#allocation6 + $0xc8] sm:$0xff] %vm262, %v1355
    %1714 = vst.msk [vmem:[#allocation6 + $0xd0] sm:$0xff] %vm262, %v1357
    %1715 = vst.msk [vmem:[#allocation6 + $0xd8] sm:$0xff] %vm262, %v1359
    %1716 = vst.msk [vmem:[#allocation6 + $0xe0] sm:$0xff] %vm262, %v1361
    %1717 = vst.msk [vmem:[#allocation6 + $0xe8] sm:$0xff] %vm262, %v1363
    %1718 = vst.msk [vmem:[#allocation6 + $0xf0] sm:$0xff] %vm262, %v1365
    %1719 = vst.msk [vmem:[#allocation6 + $0xf8] sm:$0xff] %vm262, %v1367
    %1720 = vst.msk [vmem:[#allocation6 + $0x100] sm:$0xff] %vm262, %v1369
    %1721 = vst.msk [vmem:[#allocation6 + $0x108] sm:$0xff] %vm262, %v1371
    %1722 = vst.msk [vmem:[#allocation6 + $0x110] sm:$0xff] %vm262, %v1373
    %1723 = vst.msk [vmem:[#allocation6 + $0x118] sm:$0xff] %vm262, %v1375
    %1724 = vst.msk [vmem:[#allocation6 + $0x120] sm:$0xff] %vm262, %v1377
    %1725 = vst.msk [vmem:[#allocation6 + $0x128] sm:$0xff] %vm262, %v1379
    %1726 = vst.msk [vmem:[#allocation6 + $0x130] sm:$0xff] %vm262, %v1381
    %1727 = vst.msk [vmem:[#allocation6 + $0x138] sm:$0xff] %vm262, %v1383
    %1728 = vst.msk [vmem:[#allocation6 + $0x140] sm:$0xff] %vm262, %v1385
    %1729 = vst.msk [vmem:[#allocation6 + $0x148] sm:$0xff] %vm262, %v1387
    %1730 = vst.msk [vmem:[#allocation6 + $0x150] sm:$0xff] %vm262, %v1389
    %1731 = vst.msk [vmem:[#allocation6 + $0x158] sm:$0xff] %vm262, %v1391
    %1732 = vst.msk [vmem:[#allocation6 + $0x160] sm:$0xff] %vm262, %v1393
    %1733 = vst.msk [vmem:[#allocation6 + $0x168] sm:$0xff] %vm262, %v1395
    %1734 = vst.msk [vmem:[#allocation6 + $0x170] sm:$0xff] %vm262, %v1397
    %1735 = vst.msk [vmem:[#allocation6 + $0x178] sm:$0xff] %vm262, %v1399
    %1736 = vst.msk [vmem:[#allocation6 + $0x180] sm:$0xff] %vm262, %v1401
    %1737 = vst.msk [vmem:[#allocation6 + $0x188] sm:$0xff] %vm262, %v1403
    %1738 = vst.msk [vmem:[#allocation6 + $0x190] sm:$0xff] %vm262, %v1405
    %1739 = vst.msk [vmem:[#allocation6 + $0x198] sm:$0xff] %vm262, %v1407
    %1740 = vst.msk [vmem:[#allocation6 + $0x1a0] sm:$0xff] %vm262, %v1409
    %1741 = vst.msk [vmem:[#allocation6 + $0x1a8] sm:$0xff] %vm262, %v1411
    %1742 = vst.msk [vmem:[#allocation6 + $0x1b0] sm:$0xff] %vm262, %v1413
    %1743 = vst.msk [vmem:[#allocation6 + $0x1b8] sm:$0xff] %vm262, %v1415
    %1744 = vst.msk [vmem:[#allocation6 + $0x1c0] sm:$0xff] %vm262, %v1417
    %1745 = vst.msk [vmem:[#allocation6 + $0x1c8] sm:$0xff] %vm262, %v1419
    %1746 = vst.msk [vmem:[#allocation6 + $0x1d0] sm:$0xff] %vm262, %v1421
    %1747 = vst.msk [vmem:[#allocation6 + $0x1d8] sm:$0xff] %vm262, %v1423
    %1748 = vst.msk [vmem:[#allocation6 + $0x1e0] sm:$0xff] %vm262, %v1425
    %1749 = vst.msk [vmem:[#allocation6 + $0x1e8] sm:$0xff] %vm262, %v1427
    %1750 = vst.msk [vmem:[#allocation6 + $0x1f0] sm:$0xff] %vm262, %v1429
    %1751 = vst.msk [vmem:[#allocation6 + $0x1f8] sm:$0xff] %vm262, %v1431
    %1752 = vst.msk [vmem:[#allocation2] sm:$0xff] %vm262, %v1560
    %1753 = vst.msk [vmem:[#allocation2 + $0x8] sm:$0xff] %vm262, %v1561
    %1754 = vst.msk [vmem:[#allocation2 + $0x10] sm:$0xff] %vm262, %v1562
    %1755 = vst.msk [vmem:[#allocation2 + $0x18] sm:$0xff] %vm262, %v1563
    %1756 = vst.msk [vmem:[#allocation2 + $0x20] sm:$0xff] %vm262, %v1564
    %1757 = vst.msk [vmem:[#allocation2 + $0x28] sm:$0xff] %vm262, %v1565
    %1758 = vst.msk [vmem:[#allocation2 + $0x30] sm:$0xff] %vm262, %v1566
    %1759 = vst.msk [vmem:[#allocation2 + $0x38] sm:$0xff] %vm262, %v1567
    %1760 = vst.msk [vmem:[#allocation2 + $0x40] sm:$0xff] %vm262, %v1568
    %1761 = vst.msk [vmem:[#allocation2 + $0x48] sm:$0xff] %vm262, %v1569
    %1762 = vst.msk [vmem:[#allocation2 + $0x50] sm:$0xff] %vm262, %v1570
    %1763 = vst.msk [vmem:[#allocation2 + $0x58] sm:$0xff] %vm262, %v1571
    %1764 = vst.msk [vmem:[#allocation2 + $0x60] sm:$0xff] %vm262, %v1572
    %1765 = vst.msk [vmem:[#allocation2 + $0x68] sm:$0xff] %vm262, %v1573
    %1766 = vst.msk [vmem:[#allocation2 + $0x70] sm:$0xff] %vm262, %v1574
    %1767 = vst.msk [vmem:[#allocation2 + $0x78] sm:$0xff] %vm262, %v1575
    %1768 = vst.msk [vmem:[#allocation2 + $0x80] sm:$0xff] %vm262, %v1576
    %1769 = vst.msk [vmem:[#allocation2 + $0x88] sm:$0xff] %vm262, %v1577
    %1770 = vst.msk [vmem:[#allocation2 + $0x90] sm:$0xff] %vm262, %v1578
    %1771 = vst.msk [vmem:[#allocation2 + $0x98] sm:$0xff] %vm262, %v1579
    %1772 = vst.msk [vmem:[#allocation2 + $0xa0] sm:$0xff] %vm262, %v1580
    %1773 = vst.msk [vmem:[#allocation2 + $0xa8] sm:$0xff] %vm262, %v1581
    %1774 = vst.msk [vmem:[#allocation2 + $0xb0] sm:$0xff] %vm262, %v1582
    %1775 = vst.msk [vmem:[#allocation2 + $0xb8] sm:$0xff] %vm262, %v1583
    %1776 = vst.msk [vmem:[#allocation2 + $0xc0] sm:$0xff] %vm262, %v1584
    %1777 = vst.msk [vmem:[#allocation2 + $0xc8] sm:$0xff] %vm262, %v1585
    %1778 = vst.msk [vmem:[#allocation2 + $0xd0] sm:$0xff] %vm262, %v1586
    %1779 = vst.msk [vmem:[#allocation2 + $0xd8] sm:$0xff] %vm262, %v1587
    %1780 = vst.msk [vmem:[#allocation2 + $0xe0] sm:$0xff] %vm262, %v1588
    %1781 = vst.msk [vmem:[#allocation2 + $0xe8] sm:$0xff] %vm262, %v1589
    %1782 = vst.msk [vmem:[#allocation2 + $0xf0] sm:$0xff] %vm262, %v1590
    %1783 = vst.msk [vmem:[#allocation2 + $0xf8] sm:$0xff] %vm262, %v1591
    %1784 = vst.msk [vmem:[#allocation2 + $0x100] sm:$0xff] %vm262, %v1592
    %1785 = vst.msk [vmem:[#allocation2 + $0x108] sm:$0xff] %vm262, %v1593
    %1786 = vst.msk [vmem:[#allocation2 + $0x110] sm:$0xff] %vm262, %v1594
    %1787 = vst.msk [vmem:[#allocation2 + $0x118] sm:$0xff] %vm262, %v1595
    %1788 = vst.msk [vmem:[#allocation2 + $0x120] sm:$0xff] %vm262, %v1596
    %1789 = vst.msk [vmem:[#allocation2 + $0x128] sm:$0xff] %vm262, %v1597
    %1790 = vst.msk [vmem:[#allocation2 + $0x130] sm:$0xff] %vm262, %v1598
    %1791 = vst.msk [vmem:[#allocation2 + $0x138] sm:$0xff] %vm262, %v1599
    %1792 = vst.msk [vmem:[#allocation2 + $0x140] sm:$0xff] %vm262, %v1600
    %1793 = vst.msk [vmem:[#allocation2 + $0x148] sm:$0xff] %vm262, %v1601
    %1794 = vst.msk [vmem:[#allocation2 + $0x150] sm:$0xff] %vm262, %v1602
    %1795 = vst.msk [vmem:[#allocation2 + $0x158] sm:$0xff] %vm262, %v1603
    %1796 = vst.msk [vmem:[#allocation2 + $0x160] sm:$0xff] %vm262, %v1604
    %1797 = vst.msk [vmem:[#allocation2 + $0x168] sm:$0xff] %vm262, %v1605
    %1798 = vst.msk [vmem:[#allocation2 + $0x170] sm:$0xff] %vm262, %v1606
    %1799 = vst.msk [vmem:[#allocation2 + $0x178] sm:$0xff] %vm262, %v1607
    %1800 = vst.msk [vmem:[#allocation2 + $0x180] sm:$0xff] %vm262, %v1608
    %1801 = vst.msk [vmem:[#allocation2 + $0x188] sm:$0xff] %vm262, %v1609
    %1802 = vst.msk [vmem:[#allocation2 + $0x190] sm:$0xff] %vm262, %v1610
    %1803 = vst.msk [vmem:[#allocation2 + $0x198] sm:$0xff] %vm262, %v1611
    %1804 = vst.msk [vmem:[#allocation2 + $0x1a0] sm:$0xff] %vm262, %v1612
    %1805 = vst.msk [vmem:[#allocation2 + $0x1a8] sm:$0xff] %vm262, %v1613
    %1806 = vst.msk [vmem:[#allocation2 + $0x1b0] sm:$0xff] %vm262, %v1614
    %1807 = vst.msk [vmem:[#allocation2 + $0x1b8] sm:$0xff] %vm262, %v1615
    %1808 = vst.msk [vmem:[#allocation2 + $0x1c0] sm:$0xff] %vm262, %v1616
    %1809 = vst.msk [vmem:[#allocation2 + $0x1c8] sm:$0xff] %vm262, %v1617
    %1810 = vst.msk [vmem:[#allocation2 + $0x1d0] sm:$0xff] %vm262, %v1618
    %1811 = vst.msk [vmem:[#allocation2 + $0x1d8] sm:$0xff] %vm262, %v1619
    %1812 = vst.msk [vmem:[#allocation2 + $0x1e0] sm:$0xff] %vm262, %v1620
    %1813 = vst.msk [vmem:[#allocation2 + $0x1e8] sm:$0xff] %vm262, %v1621
    %1814 = vst.msk [vmem:[#allocation2 + $0x1f0] sm:$0xff] %vm262, %v1622
    %1815 = vst.msk [vmem:[#allocation2 + $0x1f8] sm:$0xff] %vm262, %v1623
    %v1816 = vld [vmem:[%s7] sm:$0xff]
    %v1817 = vld [vmem:[%s7 + $0x8] sm:$0xff]
    %v1818 = vld [vmem:[%s7 + $0x10] sm:$0xff]
    %v1819 = vld [vmem:[%s7 + $0x18] sm:$0xff]
    %v1820 = vld [vmem:[%s7 + $0x20] sm:$0xff]
    %v1821 = vld [vmem:[%s7 + $0x28] sm:$0xff]
    %v1822 = vld [vmem:[%s7 + $0x30] sm:$0xff]
    %v1823 = vld [vmem:[%s7 + $0x38] sm:$0xff]
    %v1824 = vld [vmem:[%s8] sm:$0x1]
    %v1826 = vlaneseq
    %v1827 = vshrl.u32 %v1826, 7
    %v1828 = vsub.s32 0, %v1827
    %v1829 = vrot.slane %v1824, %v1828
    %v1832 = vsel %vm262, %v1560, 0
    %v1835 = vsel %vm262, %v1561, 0
    %v1838 = vsel %vm262, %v1562, 0
    %v1841 = vsel %vm262, %v1563, 0
    %v1844 = vsel %vm262, %v1564, 0
    %v1847 = vsel %vm262, %v1565, 0
    %v1850 = vsel %vm262, %v1566, 0
    %v1853 = vsel %vm262, %v1567, 0
    %v1856 = vsel %vm262, %v1568, 0
    %v1859 = vsel %vm262, %v1569, 0
    %v1862 = vsel %vm262, %v1570, 0
    %v1865 = vsel %vm262, %v1571, 0
    %v1868 = vsel %vm262, %v1572, 0
    %v1871 = vsel %vm262, %v1573, 0
    %v1874 = vsel %vm262, %v1574, 0
    %v1877 = vsel %vm262, %v1575, 0
    %v1880 = vsel %vm262, %v1576, 0
    %v1883 = vsel %vm262, %v1577, 0
    %v1886 = vsel %vm262, %v1578, 0
    %v1889 = vsel %vm262, %v1579, 0
    %v1892 = vsel %vm262, %v1580, 0
    %v1895 = vsel %vm262, %v1581, 0
    %v1898 = vsel %vm262, %v1582, 0
    %v1901 = vsel %vm262, %v1583, 0
    %v1904 = vsel %vm262, %v1584, 0
    %v1907 = vsel %vm262, %v1585, 0
    %v1910 = vsel %vm262, %v1586, 0
    %v1913 = vsel %vm262, %v1587, 0
    %v1916 = vsel %vm262, %v1588, 0
    %v1919 = vsel %vm262, %v1589, 0
    %v1922 = vsel %vm262, %v1590, 0
    %v1925 = vsel %vm262, %v1591, 0
    %v1928 = vsel %vm262, %v1592, 0
    %v1931 = vsel %vm262, %v1593, 0
    %v1934 = vsel %vm262, %v1594, 0
    %v1937 = vsel %vm262, %v1595, 0
    %v1940 = vsel %vm262, %v1596, 0
    %v1943 = vsel %vm262, %v1597, 0
    %v1946 = vsel %vm262, %v1598, 0
    %v1949 = vsel %vm262, %v1599, 0
    %v1952 = vsel %vm262, %v1600, 0
    %v1955 = vsel %vm262, %v1601, 0
    %v1958 = vsel %vm262, %v1602, 0
    %v1961 = vsel %vm262, %v1603, 0
    %v1964 = vsel %vm262, %v1604, 0
    %v1967 = vsel %vm262, %v1605, 0
    %v1970 = vsel %vm262, %v1606, 0
    %v1973 = vsel %vm262, %v1607, 0
    %v1976 = vsel %vm262, %v1608, 0
    %v1979 = vsel %vm262, %v1609, 0
    %v1982 = vsel %vm262, %v1610, 0
    %v1985 = vsel %vm262, %v1611, 0
    %v1988 = vsel %vm262, %v1612, 0
    %v1991 = vsel %vm262, %v1613, 0
    %v1994 = vsel %vm262, %v1614, 0
    %v1997 = vsel %vm262, %v1615, 0
    %v2000 = vsel %vm262, %v1616, 0
    %v2003 = vsel %vm262, %v1617, 0
    %v2006 = vsel %vm262, %v1618, 0
    %v2009 = vsel %vm262, %v1619, 0
    %v2012 = vsel %vm262, %v1620, 0
    %v2015 = vsel %vm262, %v1621, 0
    %v2018 = vsel %vm262, %v1622, 0
    %v2021 = vsel %vm262, %v1623, 0
    %2023 = vmatprep.subr.mxu0 0.0
    %2024 = vmatpush1.msra.mxu0 %v1816
    %2025 = vmatprep.subr.mxu0 0.0
    %2026 = vmatpush1.msra.mxu0 %v1817
    %2027 = vmatprep.subr.mxu0 0.0
    %2028 = vmatpush1.msra.mxu0 %v1818
    %2029 = vmatprep.subr.mxu0 0.0
    %2030 = vmatpush1.msra.mxu0 %v1819
    %2031 = vmatprep.subr.mxu0 0.0
    %2032 = vmatpush1.msra.mxu0 %v1820
    %2033 = vmatprep.subr.mxu0 0.0
    %2034 = vmatpush1.msra.mxu0 %v1821
    %2035 = vmatprep.subr.mxu0 0.0
    %2036 = vmatpush1.msra.mxu0 %v1822
    %2037 = vmatprep.subr.mxu0 0.0
    %2038 = vmatpush1.msra.mxu0 %v1823
    %2039 = vmatprep.subr.mxu0 0.0
    %2040 = vmatpush1.msra.mxu0 0.0
    %2041 = vmatprep.subr.mxu0 0.0
    %2042 = vmatpush1.msra.mxu0 0.0
    %2043 = vmatprep.subr.mxu0 0.0
    %2044 = vmatpush1.msra.mxu0 0.0
    %2045 = vmatprep.subr.mxu0 0.0
    %2046 = vmatpush1.msra.mxu0 0.0
    %2047 = vmatprep.subr.mxu0 0.0
    %2048 = vmatpush1.msra.mxu0 0.0
    %2049 = vmatprep.subr.mxu0 0.0
    %2050 = vmatpush1.msra.mxu0 0.0
    %2051 = vmatprep.subr.mxu0 0.0
    %2052 = vmatpush1.msra.mxu0 0.0
    %2053 = vmatprep.subr.mxu0 0.0
    %2054 = vmatpush1.msra.mxu0 0.0
    %2055 = vmatprep.subr.mxu0 0.0
    %2056 = vmatpush1.msra.mxu0 0.0
    %2057 = vmatprep.subr.mxu0 0.0
    %2058 = vmatpush1.msra.mxu0 0.0
    %2059 = vmatprep.subr.mxu0 0.0
    %2060 = vmatpush1.msra.mxu0 0.0
    %2061 = vmatprep.subr.mxu0 0.0
    %2062 = vmatpush1.msra.mxu0 0.0
    %2063 = vmatprep.subr.mxu0 0.0
    %2064 = vmatpush1.msra.mxu0 0.0
    %2065 = vmatprep.subr.mxu0 0.0
    %2066 = vmatpush1.msra.mxu0 0.0
    %2067 = vmatprep.subr.mxu0 0.0
    %2068 = vmatpush1.msra.mxu0 0.0
    %2069 = vmatprep.subr.mxu0 0.0
    %2070 = vmatpush1.msra.mxu0 0.0
    %2071 = vmatprep.subr.mxu0 0.0
    %2072 = vmatpush1.msra.mxu0 0.0
    %2073 = vmatprep.subr.mxu0 0.0
    %2074 = vmatpush1.msra.mxu0 0.0
    %2075 = vmatprep.subr.mxu0 0.0
    %2076 = vmatpush1.msra.mxu0 0.0
    %2077 = vmatprep.subr.mxu0 0.0
    %2078 = vmatpush1.msra.mxu0 0.0
    %2079 = vmatprep.subr.mxu0 0.0
    %2080 = vmatpush1.msra.mxu0 0.0
    %2081 = vmatprep.subr.mxu0 0.0
    %2082 = vmatpush1.msra.mxu0 0.0
    %2083 = vmatprep.subr.mxu0 0.0
    %2084 = vmatpush1.msra.mxu0 0.0
    %2085 = vmatprep.subr.mxu0 0.0
    %2086 = vmatpush1.msra.mxu0 0.0
    %2087 = vmatprep.mubr.f32.mxu0 0.0
    %2088 = vmatmul.mubr.f32.gmra.mrb[0].mxu0 %v1832
    %v2089 = vpop.f32.mrb[0].mxu0
    %v2090 = vadd.f32 %v1829, %v2089
    %v2091 = vpop.f32.mrb[0].mxu0
    %2092 = vmatprep.mubr.f32.mxu0 0.0
    %2093 = vmatmul.mubr.f32.gmra.mrb[0].mxu0 %v1835
    %v2094 = vpop.f32.mrb[0].mxu0
    %v2095 = vadd.f32 %v1829, %v2094
    %v2096 = vpop.f32.mrb[0].mxu0
    %2097 = vmatprep.mubr.f32.mxu0 0.0
    %2098 = vmatmul.mubr.f32.gmra.mrb[0].mxu0 %v1838
    %v2099 = vpop.f32.mrb[0].mxu0
    %v2100 = vadd.f32 %v1829, %v2099
    %v2101 = vpop.f32.mrb[0].mxu0
    %2102 = vmatprep.mubr.f32.mxu0 0.0
    %2103 = vmatmul.mubr.f32.gmra.mrb[0].mxu0 %v1841
    %v2104 = vpop.f32.mrb[0].mxu0
    %v2105 = vadd.f32 %v1829, %v2104
    %v2106 = vpop.f32.mrb[0].mxu0
    %2107 = vmatprep.mubr.f32.mxu0 0.0
    %2108 = vmatmul.mubr.f32.gmra.mrb[0].mxu0 %v1844
    %v2109 = vpop.f32.mrb[0].mxu0
    %v2110 = vadd.f32 %v1829, %v2109
    %v2111 = vpop.f32.mrb[0].mxu0
    %2112 = vmatprep.mubr.f32.mxu0 0.0
    %2113 = vmatmul.mubr.f32.gmra.mrb[0].mxu0 %v1847
    %v2114 = vpop.f32.mrb[0].mxu0
    %v2115 = vadd.f32 %v1829, %v2114
    %v2116 = vpop.f32.mrb[0].mxu0
    %2117 = vmatprep.mubr.f32.mxu0 0.0
    %2118 = vmatmul.mubr.f32.gmra.mrb[0].mxu0 %v1850
    %v2119 = vpop.f32.mrb[0].mxu0
    %v2120 = vadd.f32 %v1829, %v2119
    %v2121 = vpop.f32.mrb[0].mxu0
    %2122 = vmatprep.mubr.f32.mxu0 0.0
    %2123 = vmatmul.mubr.f32.gmra.mrb[0].mxu0 %v1853
    %v2124 = vpop.f32.mrb[0].mxu0
    %v2125 = vadd.f32 %v1829, %v2124
    %v2126 = vpop.f32.mrb[0].mxu0
    %2127 = vmatprep.mubr.f32.mxu0 0.0
    %2128 = vmatmul.mubr.f32.gmra.mrb[0].mxu0 %v1856
    %v2129 = vpop.f32.mrb[0].mxu0
    %v2130 = vadd.f32 %v1829, %v2129
    %v2131 = vpop.f32.mrb[0].mxu0
    %2132 = vmatprep.mubr.f32.mxu0 0.0
    %2133 = vmatmul.mubr.f32.gmra.mrb[0].mxu0 %v1859
    %v2134 = vpop.f32.mrb[0].mxu0
    %v2135 = vadd.f32 %v1829, %v2134
    %v2136 = vpop.f32.mrb[0].mxu0
    %2137 = vmatprep.mubr.f32.mxu0 0.0
    %2138 = vmatmul.mubr.f32.gmra.mrb[0].mxu0 %v1862
    %v2139 = vpop.f32.mrb[0].mxu0
    %v2140 = vadd.f32 %v1829, %v2139
    %v2141 = vpop.f32.mrb[0].mxu0
    %2142 = vmatprep.mubr.f32.mxu0 0.0
    %2143 = vmatmul.mubr.f32.gmra.mrb[0].mxu0 %v1865
    %v2144 = vpop.f32.mrb[0].mxu0
    %v2145 = vadd.f32 %v1829, %v2144
    %v2146 = vpop.f32.mrb[0].mxu0
    %2147 = vmatprep.mubr.f32.mxu0 0.0
    %2148 = vmatmul.mubr.f32.gmra.mrb[0].mxu0 %v1868
    %v2149 = vpop.f32.mrb[0].mxu0
    %v2150 = vadd.f32 %v1829, %v2149
    %v2151 = vpop.f32.mrb[0].mxu0
    %2152 = vmatprep.mubr.f32.mxu0 0.0
    %2153 = vmatmul.mubr.f32.gmra.mrb[0].mxu0 %v1871
    %v2154 = vpop.f32.mrb[0].mxu0
    %v2155 = vadd.f32 %v1829, %v2154
    %v2156 = vpop.f32.mrb[0].mxu0
    %2157 = vmatprep.mubr.f32.mxu0 0.0
    %2158 = vmatmul.mubr.f32.gmra.mrb[0].mxu0 %v1874
    %v2159 = vpop.f32.mrb[0].mxu0
    %v2160 = vadd.f32 %v1829, %v2159
    %v2161 = vpop.f32.mrb[0].mxu0
    %2162 = vmatprep.mubr.f32.mxu0 0.0
    %2163 = vmatmul.mubr.f32.gmra.mrb[0].mxu0 %v1877
    %v2164 = vpop.f32.mrb[0].mxu0
    %v2165 = vadd.f32 %v1829, %v2164
    %v2166 = vpop.f32.mrb[0].mxu0
    %2167 = vmatprep.mubr.f32.mxu0 0.0
    %2168 = vmatmul.mubr.f32.gmra.mrb[0].mxu0 %v1880
    %v2169 = vpop.f32.mrb[0].mxu0
    %v2170 = vadd.f32 %v1829, %v2169
    %v2171 = vpop.f32.mrb[0].mxu0
    %2172 = vmatprep.mubr.f32.mxu0 0.0
    %2173 = vmatmul.mubr.f32.gmra.mrb[0].mxu0 %v1883
    %v2174 = vpop.f32.mrb[0].mxu0
    %v2175 = vadd.f32 %v1829, %v2174
    %v2176 = vpop.f32.mrb[0].mxu0
    %2177 = vmatprep.mubr.f32.mxu0 0.0
    %2178 = vmatmul.mubr.f32.gmra.mrb[0].mxu0 %v1886
    %v2179 = vpop.f32.mrb[0].mxu0
    %v2180 = vadd.f32 %v1829, %v2179
    %v2181 = vpop.f32.mrb[0].mxu0
    %2182 = vmatprep.mubr.f32.mxu0 0.0
    %2183 = vmatmul.mubr.f32.gmra.mrb[0].mxu0 %v1889
    %v2184 = vpop.f32.mrb[0].mxu0
    %v2185 = vadd.f32 %v1829, %v2184
    %v2186 = vpop.f32.mrb[0].mxu0
    %2187 = vmatprep.mubr.f32.mxu0 0.0
    %2188 = vmatmul.mubr.f32.gmra.mrb[0].mxu0 %v1892
    %v2189 = vpop.f32.mrb[0].mxu0
    %v2190 = vadd.f32 %v1829, %v2189
    %v2191 = vpop.f32.mrb[0].mxu0
    %2192 = vmatprep.mubr.f32.mxu0 0.0
    %2193 = vmatmul.mubr.f32.gmra.mrb[0].mxu0 %v1895
    %v2194 = vpop.f32.mrb[0].mxu0
    %v2195 = vadd.f32 %v1829, %v2194
    %v2196 = vpop.f32.mrb[0].mxu0
    %2197 = vmatprep.mubr.f32.mxu0 0.0
    %2198 = vmatmul.mubr.f32.gmra.mrb[0].mxu0 %v1898
    %v2199 = vpop.f32.mrb[0].mxu0
    %v2200 = vadd.f32 %v1829, %v2199
    %v2201 = vpop.f32.mrb[0].mxu0
    %2202 = vmatprep.mubr.f32.mxu0 0.0
    %2203 = vmatmul.mubr.f32.gmra.mrb[0].mxu0 %v1901
    %v2204 = vpop.f32.mrb[0].mxu0
    %v2205 = vadd.f32 %v1829, %v2204
    %v2206 = vpop.f32.mrb[0].mxu0
    %2207 = vmatprep.mubr.f32.mxu0 0.0
    %2208 = vmatmul.mubr.f32.gmra.mrb[0].mxu0 %v1904
    %v2209 = vpop.f32.mrb[0].mxu0
    %v2210 = vadd.f32 %v1829, %v2209
    %v2211 = vpop.f32.mrb[0].mxu0
    %2212 = vmatprep.mubr.f32.mxu0 0.0
    %2213 = vmatmul.mubr.f32.gmra.mrb[0].mxu0 %v1907
    %v2214 = vpop.f32.mrb[0].mxu0
    %v2215 = vadd.f32 %v1829, %v2214
    %v2216 = vpop.f32.mrb[0].mxu0
    %2217 = vmatprep.mubr.f32.mxu0 0.0
    %2218 = vmatmul.mubr.f32.gmra.mrb[0].mxu0 %v1910
    %v2219 = vpop.f32.mrb[0].mxu0
    %v2220 = vadd.f32 %v1829, %v2219
    %v2221 = vpop.f32.mrb[0].mxu0
    %2222 = vmatprep.mubr.f32.mxu0 0.0
    %2223 = vmatmul.mubr.f32.gmra.mrb[0].mxu0 %v1913
    %v2224 = vpop.f32.mrb[0].mxu0
    %v2225 = vadd.f32 %v1829, %v2224
    %v2226 = vpop.f32.mrb[0].mxu0
    %2227 = vmatprep.mubr.f32.mxu0 0.0
    %2228 = vmatmul.mubr.f32.gmra.mrb[0].mxu0 %v1916
    %v2229 = vpop.f32.mrb[0].mxu0
    %v2230 = vadd.f32 %v1829, %v2229
    %v2231 = vpop.f32.mrb[0].mxu0
    %2232 = vmatprep.mubr.f32.mxu0 0.0
    %2233 = vmatmul.mubr.f32.gmra.mrb[0].mxu0 %v1919
    %v2234 = vpop.f32.mrb[0].mxu0
    %v2235 = vadd.f32 %v1829, %v2234
    %v2236 = vpop.f32.mrb[0].mxu0
    %2237 = vmatprep.mubr.f32.mxu0 0.0
    %2238 = vmatmul.mubr.f32.gmra.mrb[0].mxu0 %v1922
    %v2239 = vpop.f32.mrb[0].mxu0
    %v2240 = vadd.f32 %v1829, %v2239
    %v2241 = vpop.f32.mrb[0].mxu0
    %2242 = vmatprep.mubr.f32.mxu0 0.0
    %2243 = vmatmul.mubr.f32.gmra.mrb[0].mxu0 %v1925
    %v2244 = vpop.f32.mrb[0].mxu0
    %v2245 = vadd.f32 %v1829, %v2244
    %v2246 = vpop.f32.mrb[0].mxu0
    %2247 = vmatprep.mubr.f32.mxu0 0.0
    %2248 = vmatmul.mubr.f32.gmra.mrb[0].mxu0 %v1928
    %v2249 = vpop.f32.mrb[0].mxu0
    %v2250 = vadd.f32 %v1829, %v2249
    %v2251 = vpop.f32.mrb[0].mxu0
    %2252 = vmatprep.mubr.f32.mxu0 0.0
    %2253 = vmatmul.mubr.f32.gmra.mrb[0].mxu0 %v1931
    %v2254 = vpop.f32.mrb[0].mxu0
    %v2255 = vadd.f32 %v1829, %v2254
    %v2256 = vpop.f32.mrb[0].mxu0
    %2257 = vmatprep.mubr.f32.mxu0 0.0
    %2258 = vmatmul.mubr.f32.gmra.mrb[0].mxu0 %v1934
    %v2259 = vpop.f32.mrb[0].mxu0
    %v2260 = vadd.f32 %v1829, %v2259
    %v2261 = vpop.f32.mrb[0].mxu0
    %2262 = vmatprep.mubr.f32.mxu0 0.0
    %2263 = vmatmul.mubr.f32.gmra.mrb[0].mxu0 %v1937
    %v2264 = vpop.f32.mrb[0].mxu0
    %v2265 = vadd.f32 %v1829, %v2264
    %v2266 = vpop.f32.mrb[0].mxu0
    %2267 = vmatprep.mubr.f32.mxu0 0.0
    %2268 = vmatmul.mubr.f32.gmra.mrb[0].mxu0 %v1940
    %v2269 = vpop.f32.mrb[0].mxu0
    %v2270 = vadd.f32 %v1829, %v2269
    %v2271 = vpop.f32.mrb[0].mxu0
    %2272 = vmatprep.mubr.f32.mxu0 0.0
    %2273 = vmatmul.mubr.f32.gmra.mrb[0].mxu0 %v1943
    %v2274 = vpop.f32.mrb[0].mxu0
    %v2275 = vadd.f32 %v1829, %v2274
    %v2276 = vpop.f32.mrb[0].mxu0
    %2277 = vmatprep.mubr.f32.mxu0 0.0
    %2278 = vmatmul.mubr.f32.gmra.mrb[0].mxu0 %v1946
    %v2279 = vpop.f32.mrb[0].mxu0
    %v2280 = vadd.f32 %v1829, %v2279
    %v2281 = vpop.f32.mrb[0].mxu0
    %2282 = vmatprep.mubr.f32.mxu0 0.0
    %2283 = vmatmul.mubr.f32.gmra.mrb[0].mxu0 %v1949
    %v2284 = vpop.f32.mrb[0].mxu0
    %v2285 = vadd.f32 %v1829, %v2284
    %v2286 = vpop.f32.mrb[0].mxu0
    %2287 = vmatprep.mubr.f32.mxu0 0.0
    %2288 = vmatmul.mubr.f32.gmra.mrb[0].mxu0 %v1952
    %v2289 = vpop.f32.mrb[0].mxu0
    %v2290 = vadd.f32 %v1829, %v2289
    %v2291 = vpop.f32.mrb[0].mxu0
    %2292 = vmatprep.mubr.f32.mxu0 0.0
    %2293 = vmatmul.mubr.f32.gmra.mrb[0].mxu0 %v1955
    %v2294 = vpop.f32.mrb[0].mxu0
    %v2295 = vadd.f32 %v1829, %v2294
    %v2296 = vpop.f32.mrb[0].mxu0
    %2297 = vmatprep.mubr.f32.mxu0 0.0
    %2298 = vmatmul.mubr.f32.gmra.mrb[0].mxu0 %v1958
    %v2299 = vpop.f32.mrb[0].mxu0
    %v2300 = vadd.f32 %v1829, %v2299
    %v2301 = vpop.f32.mrb[0].mxu0
    %2302 = vmatprep.mubr.f32.mxu0 0.0
    %2303 = vmatmul.mubr.f32.gmra.mrb[0].mxu0 %v1961
    %v2304 = vpop.f32.mrb[0].mxu0
    %v2305 = vadd.f32 %v1829, %v2304
    %v2306 = vpop.f32.mrb[0].mxu0
    %2307 = vmatprep.mubr.f32.mxu0 0.0
    %2308 = vmatmul.mubr.f32.gmra.mrb[0].mxu0 %v1964
    %v2309 = vpop.f32.mrb[0].mxu0
    %v2310 = vadd.f32 %v1829, %v2309
    %v2311 = vpop.f32.mrb[0].mxu0
    %2312 = vmatprep.mubr.f32.mxu0 0.0
    %2313 = vmatmul.mubr.f32.gmra.mrb[0].mxu0 %v1967
    %v2314 = vpop.f32.mrb[0].mxu0
    %v2315 = vadd.f32 %v1829, %v2314
    %v2316 = vpop.f32.mrb[0].mxu0
    %2317 = vmatprep.mubr.f32.mxu0 0.0
    %2318 = vmatmul.mubr.f32.gmra.mrb[0].mxu0 %v1970
    %v2319 = vpop.f32.mrb[0].mxu0
    %v2320 = vadd.f32 %v1829, %v2319
    %v2321 = vpop.f32.mrb[0].mxu0
    %2322 = vmatprep.mubr.f32.mxu0 0.0
    %2323 = vmatmul.mubr.f32.gmra.mrb[0].mxu0 %v1973
    %v2324 = vpop.f32.mrb[0].mxu0
    %v2325 = vadd.f32 %v1829, %v2324
    %v2326 = vpop.f32.mrb[0].mxu0
    %2327 = vmatprep.mubr.f32.mxu0 0.0
    %2328 = vmatmul.mubr.f32.gmra.mrb[0].mxu0 %v1976
    %v2329 = vpop.f32.mrb[0].mxu0
    %v2330 = vadd.f32 %v1829, %v2329
    %v2331 = vpop.f32.mrb[0].mxu0
    %2332 = vmatprep.mubr.f32.mxu0 0.0
    %2333 = vmatmul.mubr.f32.gmra.mrb[0].mxu0 %v1979
    %v2334 = vpop.f32.mrb[0].mxu0
    %v2335 = vadd.f32 %v1829, %v2334
    %v2336 = vpop.f32.mrb[0].mxu0
    %2337 = vmatprep.mubr.f32.mxu0 0.0
    %2338 = vmatmul.mubr.f32.gmra.mrb[0].mxu0 %v1982
    %v2339 = vpop.f32.mrb[0].mxu0
    %v2340 = vadd.f32 %v1829, %v2339
    %v2341 = vpop.f32.mrb[0].mxu0
    %2342 = vmatprep.mubr.f32.mxu0 0.0
    %2343 = vmatmul.mubr.f32.gmra.mrb[0].mxu0 %v1985
    %v2344 = vpop.f32.mrb[0].mxu0
    %v2345 = vadd.f32 %v1829, %v2344
    %v2346 = vpop.f32.mrb[0].mxu0
    %2347 = vmatprep.mubr.f32.mxu0 0.0
    %2348 = vmatmul.mubr.f32.gmra.mrb[0].mxu0 %v1988
    %v2349 = vpop.f32.mrb[0].mxu0
    %v2350 = vadd.f32 %v1829, %v2349
    %v2351 = vpop.f32.mrb[0].mxu0
    %2352 = vmatprep.mubr.f32.mxu0 0.0
    %2353 = vmatmul.mubr.f32.gmra.mrb[0].mxu0 %v1991
    %v2354 = vpop.f32.mrb[0].mxu0
    %v2355 = vadd.f32 %v1829, %v2354
    %v2356 = vpop.f32.mrb[0].mxu0
    %2357 = vmatprep.mubr.f32.mxu0 0.0
    %2358 = vmatmul.mubr.f32.gmra.mrb[0].mxu0 %v1994
    %v2359 = vpop.f32.mrb[0].mxu0
    %v2360 = vadd.f32 %v1829, %v2359
    %v2361 = vpop.f32.mrb[0].mxu0
    %2362 = vmatprep.mubr.f32.mxu0 0.0
    %2363 = vmatmul.mubr.f32.gmra.mrb[0].mxu0 %v1997
    %v2364 = vpop.f32.mrb[0].mxu0
    %v2365 = vadd.f32 %v1829, %v2364
    %v2366 = vpop.f32.mrb[0].mxu0
    %2367 = vmatprep.mubr.f32.mxu0 0.0
    %2368 = vmatmul.mubr.f32.gmra.mrb[0].mxu0 %v2000
    %v2369 = vpop.f32.mrb[0].mxu0
    %v2370 = vadd.f32 %v1829, %v2369
    %v2371 = vpop.f32.mrb[0].mxu0
    %2372 = vmatprep.mubr.f32.mxu0 0.0
    %2373 = vmatmul.mubr.f32.gmra.mrb[0].mxu0 %v2003
    %v2374 = vpop.f32.mrb[0].mxu0
    %v2375 = vadd.f32 %v1829, %v2374
    %v2376 = vpop.f32.mrb[0].mxu0
    %2377 = vmatprep.mubr.f32.mxu0 0.0
    %2378 = vmatmul.mubr.f32.gmra.mrb[0].mxu0 %v2006
    %v2379 = vpop.f32.mrb[0].mxu0
    %v2380 = vadd.f32 %v1829, %v2379
    %v2381 = vpop.f32.mrb[0].mxu0
    %2382 = vmatprep.mubr.f32.mxu0 0.0
    %2383 = vmatmul.mubr.f32.gmra.mrb[0].mxu0 %v2009
    %v2384 = vpop.f32.mrb[0].mxu0
    %v2385 = vadd.f32 %v1829, %v2384
    %v2386 = vpop.f32.mrb[0].mxu0
    %2387 = vmatprep.mubr.f32.mxu0 0.0
    %2388 = vmatmul.mubr.f32.gmra.mrb[0].mxu0 %v2012
    %v2389 = vpop.f32.mrb[0].mxu0
    %v2390 = vadd.f32 %v1829, %v2389
    %v2391 = vpop.f32.mrb[0].mxu0
    %2392 = vmatprep.mubr.f32.mxu0 0.0
    %2393 = vmatmul.mubr.f32.gmra.mrb[0].mxu0 %v2015
    %v2394 = vpop.f32.mrb[0].mxu0
    %v2395 = vadd.f32 %v1829, %v2394
    %v2396 = vpop.f32.mrb[0].mxu0
    %2397 = vmatprep.mubr.f32.mxu0 0.0
    %2398 = vmatmul.mubr.f32.gmra.mrb[0].mxu0 %v2018
    %v2399 = vpop.f32.mrb[0].mxu0
    %v2400 = vadd.f32 %v1829, %v2399
    %v2401 = vpop.f32.mrb[0].mxu0
    %2402 = vmatprep.mubr.f32.mxu0 0.0
    %2403 = vmatmul.mubr.f32.gmra.mrb[0].mxu0 %v2021
    %v2404 = vpop.f32.mrb[0].mxu0
    %v2405 = vadd.f32 %v1829, %v2404
    %v2406 = vpop.f32.mrb[0].mxu0
    %2407 = vdwg.mxu0
    %vm2408 = vcmask 105472
    %2409 = vst.msk [vmem:[%s13] sm:$0xff] %vm2408, %v2090
    %2410 = vst.msk [vmem:[%s13 + $0x8] sm:$0xff] %vm2408, %v2095
    %2411 = vst.msk [vmem:[%s13 + $0x10] sm:$0xff] %vm2408, %v2100
    %2412 = vst.msk [vmem:[%s13 + $0x18] sm:$0xff] %vm2408, %v2105
    %2413 = vst.msk [vmem:[%s13 + $0x20] sm:$0xff] %vm2408, %v2110
    %2414 = vst.msk [vmem:[%s13 + $0x28] sm:$0xff] %vm2408, %v2115
    %2415 = vst.msk [vmem:[%s13 + $0x30] sm:$0xff] %vm2408, %v2120
    %2416 = vst.msk [vmem:[%s13 + $0x38] sm:$0xff] %vm2408, %v2125
    %2417 = vst.msk [vmem:[%s13 + $0x40] sm:$0xff] %vm2408, %v2130
    %2418 = vst.msk [vmem:[%s13 + $0x48] sm:$0xff] %vm2408, %v2135
    %2419 = vst.msk [vmem:[%s13 + $0x50] sm:$0xff] %vm2408, %v2140
    %2420 = vst.msk [vmem:[%s13 + $0x58] sm:$0xff] %vm2408, %v2145
    %2421 = vst.msk [vmem:[%s13 + $0x60] sm:$0xff] %vm2408, %v2150
    %2422 = vst.msk [vmem:[%s13 + $0x68] sm:$0xff] %vm2408, %v2155
    %2423 = vst.msk [vmem:[%s13 + $0x70] sm:$0xff] %vm2408, %v2160
    %2424 = vst.msk [vmem:[%s13 + $0x78] sm:$0xff] %vm2408, %v2165
    %2425 = vst.msk [vmem:[%s13 + $0x80] sm:$0xff] %vm2408, %v2170
    %2426 = vst.msk [vmem:[%s13 + $0x88] sm:$0xff] %vm2408, %v2175
    %2427 = vst.msk [vmem:[%s13 + $0x90] sm:$0xff] %vm2408, %v2180
    %2428 = vst.msk [vmem:[%s13 + $0x98] sm:$0xff] %vm2408, %v2185
    %2429 = vst.msk [vmem:[%s13 + $0xa0] sm:$0xff] %vm2408, %v2190
    %2430 = vst.msk [vmem:[%s13 + $0xa8] sm:$0xff] %vm2408, %v2195
    %2431 = vst.msk [vmem:[%s13 + $0xb0] sm:$0xff] %vm2408, %v2200
    %2432 = vst.msk [vmem:[%s13 + $0xb8] sm:$0xff] %vm2408, %v2205
    %2433 = vst.msk [vmem:[%s13 + $0xc0] sm:$0xff] %vm2408, %v2210
    %2434 = vst.msk [vmem:[%s13 + $0xc8] sm:$0xff] %vm2408, %v2215
    %2435 = vst.msk [vmem:[%s13 + $0xd0] sm:$0xff] %vm2408, %v2220
    %2436 = vst.msk [vmem:[%s13 + $0xd8] sm:$0xff] %vm2408, %v2225
    %2437 = vst.msk [vmem:[%s13 + $0xe0] sm:$0xff] %vm2408, %v2230
    %2438 = vst.msk [vmem:[%s13 + $0xe8] sm:$0xff] %vm2408, %v2235
    %2439 = vst.msk [vmem:[%s13 + $0xf0] sm:$0xff] %vm2408, %v2240
    %2440 = vst.msk [vmem:[%s13 + $0xf8] sm:$0xff] %vm2408, %v2245
    %2441 = vst.msk [vmem:[%s13 + $0x100] sm:$0xff] %vm2408, %v2250
    %2442 = vst.msk [vmem:[%s13 + $0x108] sm:$0xff] %vm2408, %v2255
    %2443 = vst.msk [vmem:[%s13 + $0x110] sm:$0xff] %vm2408, %v2260
    %2444 = vst.msk [vmem:[%s13 + $0x118] sm:$0xff] %vm2408, %v2265
    %2445 = vst.msk [vmem:[%s13 + $0x120] sm:$0xff] %vm2408, %v2270
    %2446 = vst.msk [vmem:[%s13 + $0x128] sm:$0xff] %vm2408, %v2275
    %2447 = vst.msk [vmem:[%s13 + $0x130] sm:$0xff] %vm2408, %v2280
    %2448 = vst.msk [vmem:[%s13 + $0x138] sm:$0xff] %vm2408, %v2285
    %2449 = vst.msk [vmem:[%s13 + $0x140] sm:$0xff] %vm2408, %v2290
    %2450 = vst.msk [vmem:[%s13 + $0x148] sm:$0xff] %vm2408, %v2295
    %2451 = vst.msk [vmem:[%s13 + $0x150] sm:$0xff] %vm2408, %v2300
    %2452 = vst.msk [vmem:[%s13 + $0x158] sm:$0xff] %vm2408, %v2305
    %2453 = vst.msk [vmem:[%s13 + $0x160] sm:$0xff] %vm2408, %v2310
    %2454 = vst.msk [vmem:[%s13 + $0x168] sm:$0xff] %vm2408, %v2315
    %2455 = vst.msk [vmem:[%s13 + $0x170] sm:$0xff] %vm2408, %v2320
    %2456 = vst.msk [vmem:[%s13 + $0x178] sm:$0xff] %vm2408, %v2325
    %2457 = vst.msk [vmem:[%s13 + $0x180] sm:$0xff] %vm2408, %v2330
    %2458 = vst.msk [vmem:[%s13 + $0x188] sm:$0xff] %vm2408, %v2335
    %2459 = vst.msk [vmem:[%s13 + $0x190] sm:$0xff] %vm2408, %v2340
    %2460 = vst.msk [vmem:[%s13 + $0x198] sm:$0xff] %vm2408, %v2345
    %2461 = vst.msk [vmem:[%s13 + $0x1a0] sm:$0xff] %vm2408, %v2350
    %2462 = vst.msk [vmem:[%s13 + $0x1a8] sm:$0xff] %vm2408, %v2355
    %2463 = vst.msk [vmem:[%s13 + $0x1b0] sm:$0xff] %vm2408, %v2360
    %2464 = vst.msk [vmem:[%s13 + $0x1b8] sm:$0xff] %vm2408, %v2365
    %2465 = vst.msk [vmem:[%s13 + $0x1c0] sm:$0xff] %vm2408, %v2370
    %2466 = vst.msk [vmem:[%s13 + $0x1c8] sm:$0xff] %vm2408, %v2375
    %2467 = vst.msk [vmem:[%s13 + $0x1d0] sm:$0xff] %vm2408, %v2380
    %2468 = vst.msk [vmem:[%s13 + $0x1d8] sm:$0xff] %vm2408, %v2385
    %2469 = vst.msk [vmem:[%s13 + $0x1e0] sm:$0xff] %vm2408, %v2390
    %2470 = vst.msk [vmem:[%s13 + $0x1e8] sm:$0xff] %vm2408, %v2395
    %2471 = vst.msk [vmem:[%s13 + $0x1f0] sm:$0xff] %vm2408, %v2400
    %2472 = vst.msk [vmem:[%s13 + $0x1f8] sm:$0xff] %vm2408, %v2405
    // Predicated region
    $region42: #{metagene_autoencoder_forward.4} parent=1 // pred_check
      _
    $region43: #{metagene_autoencoder_forward.4} parent=1 // pred_check_branch
      %2474 = sbr.rel (0) target = $region45
    $region44: #{metagene_autoencoder_forward.4} parent=1 // pred_region
      %s2476 = ssub.s32 8192, 8192
      %2477 = vsyncadd [#allocation3], %s2476
      %s2478 = sshll.u32 [#allocation2], 4
      %s2479 = int_to_ptr.vmem [resolvable:$true] %s2478
      %2484 = dma.vmem_to_hbm [thread:$0]  %s2479, 8192, %s10, [#allocation3], 128, 128, 8
    $region45: #{metagene_autoencoder_forward.4} parent=1 // pred_fallthru
      _
    // Predicated region
    $region46: #{metagene_autoencoder_forward.4} parent=1 // pred_check
      _
    $region47: #{metagene_autoencoder_forward.4} parent=1 // pred_check_branch
      %2486 = sbr.rel (0) target = $region49
    $region48: #{metagene_autoencoder_forward.4} parent=1 // pred_region
      %s2488 = ssub.s32 8192, 8192
      %2489 = vsyncadd [#allocation5], %s2488
      %s2490 = sshll.u32 [#allocation4], 4
      %s2491 = int_to_ptr.vmem [resolvable:$true] %s2490
      %2496 = dma.vmem_to_hbm [thread:$0]  %s2491, 8192, %s11, [#allocation5], 128, 128, 8
    $region49: #{metagene_autoencoder_forward.4} parent=1 // pred_fallthru
      _
    // Predicated region
    $region50: #{metagene_autoencoder_forward.4} parent=1 // pred_check
      _
    $region51: #{metagene_autoencoder_forward.4} parent=1 // pred_check_branch
      %2498 = sbr.rel (0) target = $region53
    $region52: #{metagene_autoencoder_forward.4} parent=1 // pred_region
      %s2500 = ssub.s32 8192, 8192
      %2501 = vsyncadd [#allocation5], %s2500
      %s2502 = sshll.u32 [#allocation6], 4
      %s2503 = int_to_ptr.vmem [resolvable:$true] %s2502
      %2508 = dma.vmem_to_hbm [thread:$0]  %s2503, 8192, %s12, [#allocation5], 128, 128, 8
    $region53: #{metagene_autoencoder_forward.4} parent=1 // pred_fallthru
      _
    // Predicated region
    $region54: #{metagene_autoencoder_forward.4} parent=1 // pred_check
      _
    $region55: #{metagene_autoencoder_forward.4} parent=1 // pred_check_branch
      %2510 = sbr.rel (0) target = $region57
    $region56: #{metagene_autoencoder_forward.4} parent=1 // pred_region
      _
    $region57: #{metagene_autoencoder_forward.4} parent=1 // pred_fallthru
      _
    // Predicated region
    $region58: #{metagene_autoencoder_forward.4} parent=1 // pred_check
      _
    $region59: #{metagene_autoencoder_forward.4} parent=1 // pred_check_branch
      %2512 = sbr.rel (0) target = $region61
    $region60: #{metagene_autoencoder_forward.4} parent=1 // pred_region
      %2513 = dma.done [#allocation3], 8192
    $region61: #{metagene_autoencoder_forward.4} parent=1 // pred_fallthru
      _
    // Predicated region
    $region62: #{metagene_autoencoder_forward.4} parent=1 // pred_check
      _
    $region63: #{metagene_autoencoder_forward.4} parent=1 // pred_check_branch
      %2515 = sbr.rel (0) target = $region65
    $region64: #{metagene_autoencoder_forward.4} parent=1 // pred_region
      %2516 = dma.done [#allocation5], 8192
    $region65: #{metagene_autoencoder_forward.4} parent=1 // pred_fallthru
      _
    // Predicated region
    $region66: #{metagene_autoencoder_forward.4} parent=1 // pred_check
      _
    $region67: #{metagene_autoencoder_forward.4} parent=1 // pred_check_branch
      %2518 = sbr.rel (0) target = $region69
    $region68: #{metagene_autoencoder_forward.4} parent=1 // pred_region
      %2519 = dma.done [#allocation5], 8192
    $region69: #{metagene_autoencoder_forward.4} parent=1 // pred_fallthru
      _
    // Predicated region
    $region70: #{metagene_autoencoder_forward.4} parent=1 // pred_check
      _
    $region71: #{metagene_autoencoder_forward.4} parent=1 // pred_check_branch
      %2521 = sbr.rel (0) target = $region73
    $region72: #{metagene_autoencoder_forward.4} parent=1 // pred_region
      _
    $region73: #{metagene_autoencoder_forward.4} parent=1 // pred_fallthru
      _
    %2522 = vsyncpa [#allocation3], 1
    %2523 = vsyncpa [#allocation5], 1

</llo_original>
